<compile_context>
chip_gen: v5e
topology: v5e:2x2
jax: 0.10.0
libtpu: 0.0.40
codegen_flags: <defaults>
</compile_context>

<pallas_src>
import functools

import jax
import jax.numpy as jnp
import numpy as np
from jax.experimental import pallas as pl
from jax.experimental.pallas import tpu as pltpu

BN_EPS = 1e-5
_DIRECT_MATMUL_MIN_CIN = 128        # Cin >= this -> 9 accumulated dots, no im2col


def _vmem_capacity_bytes():
    """Physical VMEM per TensorCore (generation-aware), with a safe fallback."""
    try:
        cap = int(pltpu.get_tpu_info().vmem_capacity_bytes)
        if cap > 0:
            return cap
    except Exception:
        pass
    return 128 * 1024 * 1024


def _compiler_params(vmem_limit_bytes):
    return pltpu.CompilerParams(dimension_semantics=("parallel",),
                                vmem_limit_bytes=int(vmem_limit_bytes))


# ----------------------------------------------------------------------------
# In-kernel helpers
# ----------------------------------------------------------------------------
def _conv3x3(x_bf16, w_ref, xp_ref, col_ref):
    """3x3 'SAME' conv of one batch tile on the MXU.

    x_bf16  : (nb, H, W, C)      bfloat16 value (this conv's input activations)
    w_ref   : (9*C, Cout)        bfloat16 VMEM (HWIO flattened, tap-major)
    xp_ref  : (nb, H+2, W+2, C)  bfloat16 VMEM scratch (zero halo)
    col_ref : (nb*H*W, 9*C)      bfloat16 VMEM scratch (im2col), or None for
                                 the direct 9-accumulated-dot path (large Cin)
    returns : (nb*H*W, Cout)     float32
    """
    nb, H, W, C = x_bf16.shape
    cout = w_ref.shape[-1]
    rows = nb * H * W

    # Zero the 1-pixel halo every step (scratch persists across grid steps and
    # the grid axis may be sharded across cores, so never rely on step 0).
    zr = jnp.zeros((nb, 1, W + 2, C), xp_ref.dtype)
    zc = jnp.zeros((nb, H + 2, 1, C), xp_ref.dtype)
    xp_ref[:, 0:1, :, :] = zr
    xp_ref[:, H + 1:H + 2, :, :] = zr
    xp_ref[:, :, 0:1, :] = zc
    xp_ref[:, :, W + 1:W + 2, :] = zc
    xp_ref[:, 1:H + 1, 1:W + 1, :] = x_bf16.astype(xp_ref.dtype)

    if col_ref is None:
        # Direct path (Cin >= 128): 9 accumulated bf16 matmuls, f32 accumulator.
        # No col scratch -> far fewer vst's, much smaller VMEM footprint.
        acc = jnp.zeros((rows, cout), jnp.float32)
        for dy in range(3):
            for dx in range(3):
                k = dy * 3 + dx
                tap = xp_ref[:, dy:dy + H, dx:dx + W, :].reshape(rows, C)
                acc = acc + jnp.dot(tap, w_ref[k * C:(k + 1) * C, :],
                                    preferred_element_type=jnp.float32)
        return acc

    # Small-Cin path: one bf16 im2col materialization, single big-K matmul
    # (K = 9*Cin) so the MXU K-dimension is not starved.
    for dy in range(3):
        for dx in range(3):
            k = dy * 3 + dx
            col_ref[:, k * C:(k + 1) * C] = (
                xp_ref[:, dy:dy + H, dx:dx + W, :].reshape(rows, C))
    return jnp.dot(col_ref[...], w_ref[...], preferred_element_type=jnp.float32)


def _store_partial_stats(stats_ref, acc):
    """Per-tile partial BN statistics (on the f32 acc, before any downcast)."""
    stats_ref[0:1, 0:1, :] = jnp.sum(acc, axis=0,
                                     keepdims=True).reshape(1, 1, -1)
    stats_ref[0:1, 1:2, :] = jnp.sum(acc * acc, axis=0,
                                     keepdims=True).reshape(1, 1, -1)


# ----------------------------------------------------------------------------
# Kernels
# ----------------------------------------------------------------------------
def conv_stats_kernel(x_ref, w_ref, y_ref, stats_ref, xp_ref, col_ref=None):
    """Stage 1: conv1 on one batch tile + partial BN1 statistics."""
    acc = _conv3x3(x_ref[...], w_ref, xp_ref, col_ref)
    y_ref[...] = acc.astype(y_ref.dtype).reshape(y_ref.shape)   # bf16 to HBM
    _store_partial_stats(stats_ref, acc)


def bnrelu_conv_stats_kernel(y_ref, scale_ref, shift_ref, w_ref,
                             out_ref, stats_ref, xp_ref, col_ref=None):
    """Stage 2: BN1 (folded scale/shift) + ReLU fused into conv2 + stats."""
    nb, H, W, C = y_ref.shape
    s = scale_ref[...].reshape(1, 1, 1, C)
    b = shift_ref[...].reshape(1, 1, 1, C)
    xf = jnp.maximum(y_ref[...] * s + b, 0.0).astype(jnp.bfloat16)
    acc = _conv3x3(xf, w_ref, xp_ref, col_ref)
    out_ref[...] = acc.astype(out_ref.dtype).reshape(out_ref.shape)
    _store_partial_stats(stats_ref, acc)


def bnrelu_pool_kernel(y_ref, scale_ref, shift_ref, out_ref, *,
                       ph, pw, cout, pool_type):
    """Stage 3: BN2 scale/shift + ReLU + elementwise pooling (VPU only).

    y_ref : (R, ph, Wo, pw*C) bf16 -- a free host-side reshape of raw conv2
            output, R = nb*Ho, so every pooling tap is a slice on non-minor dims.
    """
    R, _, Wo, WC = y_ref.shape
    s = scale_ref[...].reshape(1, 1, 1, WC)
    b = shift_ref[...].reshape(1, 1, 1, WC)
    y = jnp.maximum(y_ref[...] * s + b, 0.0)            # f32
    taps = []
    for dh in range(ph):
        for dw in range(pw):
            t = y[:, dh:dh + 1, :, dw * cout:(dw + 1) * cout]   # (R,1,Wo,C)
            taps.append(t.reshape(R, Wo, cout))
    n_win = ph * pw
    if pool_type == 'avg':
        out = sum(taps) * (1.0 / n_win)
    elif pool_type == 'max':
        out = functools.reduce(jnp.maximum, taps)
    elif pool_type == 'avg+max':
        out = (sum(taps) * (1.0 / n_win)
               + functools.reduce(jnp.maximum, taps))
    else:
        raise Exception('Incorrect argument!')
    out_ref[...] = out


def bnrelu_kernel(y_ref, scale_ref, shift_ref, out_ref):
    """Stage 3 fallback (H < 2): BN2 scale/shift + ReLU, no pooling."""
    C = y_ref.shape[-1]
    s = scale_ref[...].reshape(1, 1, 1, C)
    b = shift_ref[...].reshape(1, 1, 1, C)
    out_ref[...] = jnp.maximum(y_ref[...] * s + b, 0.0)


# ----------------------------------------------------------------------------
# pallas_call wrappers
# ----------------------------------------------------------------------------
def _conv_stage(x4d, w, scale=None, shift=None, *, block_n, vmem_limit,
                direct_min=_DIRECT_MATMUL_MIN_CIN):
    """conv (+ optional folded-BN/ReLU on its input) over batch tiles.

    Returns the raw conv output as bf16 (N, H, W, Cout) plus per-tile partial
    BN statistics of shape (num_tiles, 2, Cout) in f32.
    """
    N, H, W, Cin = x4d.shape
    Cout = w.shape[-1]
    nb = block_n
    nt = N // nb
    rows = nb * H * W
    use_direct = Cin >= direct_min

    out_shape = (jax.ShapeDtypeStruct((N, H, W, Cout), jnp.bfloat16),
                 jax.ShapeDtypeStruct((nt, 2, Cout), jnp.float32))
    out_specs = (pl.BlockSpec((nb, H, W, Cout), lambda i: (i, 0, 0, 0)),
                 pl.BlockSpec((1, 2, Cout), lambda i: (i, 0, 0)))
    scratch = [pltpu.VMEM((nb, H + 2, W + 2, Cin), jnp.bfloat16)]
    if not use_direct:
        scratch.append(pltpu.VMEM((rows, 9 * Cin), jnp.bfloat16))

    x_spec = pl.BlockSpec((nb, H, W, Cin), lambda i: (i, 0, 0, 0))
    w_spec = pl.BlockSpec((9 * Cin, Cout), lambda i: (0, 0))
    c_spec = pl.BlockSpec((1, Cin), lambda i: (0, 0))

    if scale is None:
        in_specs, args, kern = [x_spec, w_spec], (x4d, w), conv_stats_kernel
    else:
        in_specs = [x_spec, c_spec, c_spec, w_spec]
        args = (x4d, scale, shift, w)
        kern = bnrelu_conv_stats_kernel

    grid_spec = pltpu.PrefetchScalarGridSpec(
        num_scalar_prefetch=0, grid=(nt,),
        in_specs=in_specs, out_specs=out_specs, scratch_shapes=scratch)
    return pl.pallas_call(kern, out_shape=out_shape, grid_spec=grid_spec,
                          compiler_params=_compiler_params(vmem_limit))(*args)


def _finalize_bn(stats, gamma, beta, count):
    """Fold global batch statistics into a per-channel scale/shift (tiny)."""
    s = jnp.sum(stats[:, 0, :], axis=0)
    ss = jnp.sum(stats[:, 1, :], axis=0)
    mean = s / count
    var = jnp.maximum(ss / count - mean * mean, 0.0)
    scale = gamma.reshape(-1) * jax.lax.rsqrt(var + BN_EPS)
    shift = beta.reshape(-1) - mean * scale
    return scale.reshape(1, -1), shift.reshape(1, -1)


def _per_sample_bytes(H, W, Cin, Cout, direct_min):
    """Approx per-sample VMEM working set for one conv stage (bf16 scratches)."""
    rows = H * W
    xpad = (H + 2) * (W + 2) * Cin * 2                     # bf16 halo scratch
    col = 0 if Cin >= direct_min else rows * 9 * Cin * 2   # bf16 im2col
    io = rows * (Cin + Cout) * 2 * 2                       # double-buffered bf16 I/O
    acc = rows * Cout * 4                                  # f32 accumulator value
    return xpad + col + io + acc


def _pick_block_n(N, H, W, Cin, Cout, budget, block_n, direct_min):
    """Largest divisor of N fitting the VMEM budget, preferring grid >= 2."""
    if block_n is not None:
        assert N % block_n == 0, "block_n must divide the batch size"
        return int(block_n)
    per = max(_per_sample_bytes(H, W, Cin, Cout, direct_min),
              _per_sample_bytes(H, W, Cout, Cout, direct_min))
    nb = max(1, min(N, budget // max(per, 1)))
    if N >= 2:
        # Keep at least 2 grid steps so v7x's two TensorCores both get work.
        nb = max(1, min(nb, N // 2))
    while N % nb:
        nb -= 1
    return int(nb)


def conv_block_forward(x, params, pool_size=(2, 2), pool_type='avg',
                       block_n=None, nhwc_input=False, nhwc_output=False,
                       direct_matmul_min_cin=_DIRECT_MATMUL_MIN_CIN):
    """ConvBlock.forward.  Default layout is NCHW (PyTorch); set nhwc_input /
    nhwc_output to keep NHWC end-to-end when chaining ConvBlocks (skips the
    extra HBM round-trip of each layout transpose)."""
    if not nhwc_input:
        x = jnp.transpose(x, (0, 2, 3, 1))                  # NCHW -> NHWC
    x = x.astype(jnp.bfloat16)
    N, H, W, Cin = x.shape
    Cout = params['w1'].shape[-1]

    vmem_cap = _vmem_capacity_bytes()
    vmem_limit = (vmem_cap * 3) // 4           # ~48 MiB on v7x, ~96 MiB on v5e/v6e
    tile_budget = vmem_limit // 3
    nb = _pick_block_n(N, H, W, Cin, Cout, tile_budget, block_n,
                       direct_matmul_min_cin)
    nt = N // nb
    count = N * H * W

    w1 = params['w1'].reshape(9 * Cin, Cout).astype(jnp.bfloat16)
    w2 = params['w2'].reshape(9 * Cout, Cout).astype(jnp.bfloat16)

    # Stage 1: conv1 + partial BN1 stats (grid-parallel over batch tiles).
    y1, st1 = _conv_stage(x, w1, block_n=nb, vmem_limit=vmem_limit,
                          direct_min=direct_matmul_min_cin)
    scale1, shift1 = _finalize_bn(st1, params['gamma1'], params['beta1'], count)

    # Stage 2: BN1+ReLU fused into conv2 + partial BN2 stats.
    y2, st2 = _conv_stage(y1, w2, scale1, shift1, block_n=nb,
                          vmem_limit=vmem_limit,
                          direct_min=direct_matmul_min_cin)
    scale2, shift2 = _finalize_bn(st2, params['gamma2'], params['beta2'], count)

    if H < 2:
        # PyTorch applies both conv/BN/ReLU stages but skips pooling if H < 2.
        out4 = pl.pallas_call(
            bnrelu_kernel,
            out_shape=jax.ShapeDtypeStruct((N, H, W, Cout), jnp.float32),
            grid_spec=pltpu.PrefetchScalarGridSpec(
                num_scalar_prefetch=0, grid=(nt,),
                in_specs=[pl.BlockSpec((nb, H, W, Cout), lambda i: (i, 0, 0, 0)),
                          pl.BlockSpec((1, Cout), lambda i: (0, 0)),
                          pl.BlockSpec((1, Cout), lambda i: (0, 0))],
                out_specs=pl.BlockSpec((nb, H, W, Cout), lambda i: (i, 0, 0, 0))),
            compiler_params=_compiler_params(vmem_limit),
        )(y2, scale2, shift2)
        return out4 if nhwc_output else jnp.transpose(out4, (0, 3, 1, 2))

    ph, pw = pool_size
    Ho, Wo = H // ph, W // pw
    # Crop (floor mode, like F.avg_pool2d / F.max_pool2d) and expose the
    # pooling window on non-minor dims via free XLA reshapes.
    y2c = y2 if (Ho * ph == H and Wo * pw == W) else y2[:, :Ho * ph, :Wo * pw, :]
    y2c = y2c.reshape(N * Ho, ph, Wo, pw * Cout)
    scale2t = jnp.tile(scale2, (1, pw))
    shift2t = jnp.tile(shift2, (1, pw))
    kernel = functools.partial(bnrelu_pool_kernel, ph=ph, pw=pw, cout=Cout,
                               pool_type=pool_type)
    out = pl.pallas_call(
        kernel,
        out_shape=jax.ShapeDtypeStruct((N * Ho, Wo, Cout), jnp.float32),
        grid_spec=pltpu.PrefetchScalarGridSpec(
            num_scalar_prefetch=0, grid=(nt,),
            in_specs=[pl.BlockSpec((nb * Ho, ph, Wo, pw * Cout),
                                   lambda i: (i, 0, 0, 0)),
                      pl.BlockSpec((1, pw * Cout), lambda i: (0, 0)),
                      pl.BlockSpec((1, pw * Cout), lambda i: (0, 0))],
            out_specs=pl.BlockSpec((nb * Ho, Wo, Cout), lambda i: (i, 0, 0))),
        compiler_params=_compiler_params(vmem_limit),
    )(y2c, scale2t, shift2t)
    out4 = out.reshape(N, Ho, Wo, Cout)
    return out4 if nhwc_output else jnp.transpose(out4, (0, 3, 1, 2))


# ----------------------------------------------------------------------------
# Deterministic parameter init (mirrors init_layer / init_bn)
# ----------------------------------------------------------------------------
def init_conv_block_params(key, in_channels, out_channels):
    k1, k2 = jax.random.split(key)

    def xavier_hwio(k, cin, cout):
        # torch xavier_uniform_ on (cout, cin, 3, 3): fan_in=9*cin, fan_out=9*cout
        bound = float(np.sqrt(6.0 / (9 * (cin + cout))))
        return jax.random.uniform(k, (3, 3, cin, cout), jnp.float32, -bound, bound)

    return {
        'w1': xavier_hwio(k1, in_channels, out_channels),
        'w2': xavier_hwio(k2, out_channels, out_channels),
        'gamma1': jnp.ones((1, out_channels), jnp.float32),
        'beta1': jnp.zeros((1, out_channels), jnp.float32),
        'gamma2': jnp.ones((1, out_channels), jnp.float32),
        'beta2': jnp.zeros((1, out_channels), jnp.float32),
    }


# ----------------------------------------------------------------------------
# Pure-JAX reference (same numeric path as the kernels: bf16 conv operands with
# f32 accumulation, BN batch statistics from the f32 conv output, BN/ReLU
# applied to the bf16-stored intermediate activations)
# ----------------------------------------------------------------------------
def reference_forward(x_nchw, params, pool_size=(2, 2), pool_type='avg'):
    x = jnp.transpose(x_nchw, (0, 2, 3, 1)).astype(jnp.bfloat16)

    def cbr(x_bf16, w, g, b):
        y = jax.lax.conv_general_dilated(
            x_bf16, w.astype(jnp.bfloat16), (1, 1), 'SAME',
            dimension_numbers=('NHWC', 'HWIO', 'NHWC'),
            preferred_element_type=jnp.float32)
        m = y.mean(axis=(0, 1, 2))
        v = ((y - m) ** 2).mean(axis=(0, 1, 2))
        scale = g.reshape(-1) * jax.lax.rsqrt(v + BN_EPS)
        shift = b.reshape(-1) - m * scale
        y_store = y.astype(jnp.bfloat16).astype(jnp.float32)   # bf16 intermediates
        return jnp.maximum(y_store * scale + shift, 0.0)

    h1 = cbr(x, params['w1'], params['gamma1'], params['beta1'])
    h2 = cbr(h1.astype(jnp.bfloat16), params['w2'], params['gamma2'],
             params['beta2'])
    N, H, W, C = h2.shape
    if H < 2:
        return jnp.transpose(h2, (0, 3, 1, 2))
    ph, pw = pool_size
    Ho, Wo = H // ph, W // pw
    win = h2[:, :Ho * ph, :Wo * pw, :].reshape(N, Ho, ph, Wo, pw, C)
    avg = win.mean(axis=(2, 4))
    mx = win.max(axis=(2, 4))
    out = {'avg': avg, 'max': mx, 'avg+max': avg + mx}[pool_type]
    return jnp.transpose(out, (0, 3, 1, 2))


# ----------------------------------------------------------------------------
if __name__ == "__main__":
    key = jax.random.PRNGKey(0)
    k_x, k_p = jax.random.split(key)

    N, Cin, Cout, H, W = 2, 4, 8, 16, 16
    x = jax.random.normal(k_x, (N, Cin, H, W), jnp.float32)        # NCHW
    params = init_conv_block_params(k_p, Cin, Cout)

    # block_n=1 -> grid=(2,): exercises the tiled path + cross-tile BN stats.
    out = conv_block_forward(x, params, pool_size=(2, 2), pool_type='avg',
                             block_n=1)
    out = jax.block_until_ready(out)
    assert out.shape == (N, Cout, H // 2, W // 2), out.shape

    TOL = dict(rtol=5e-3, atol=5e-3)
    for pt in ('avg', 'max', 'avg+max'):
        got = jax.block_until_ready(
            conv_block_forward(x, params, (2, 2), pt, block_n=1))
        ref = jax.block_until_ready(reference_forward(x, params, (2, 2), pt))
        np.testing.assert_allclose(np.asarray(got), np.asarray(ref), **TOL)

    ref_avg = np.asarray(reference_forward(x, params, (2, 2), 'avg'))

    # Auto tile heuristic (VMEM-budget aware, grid >= 2 when N >= 2).
    got_auto = np.asarray(jax.block_until_ready(
        conv_block_forward(x, params, (2, 2), 'avg')))
    np.testing.assert_allclose(got_auto, ref_avg, **TOL)

    # Direct 9-accumulated-dot path (no im2col scratch), forced for coverage.
    got_direct = np.asarray(jax.block_until_ready(
        conv_block_forward(x, params, (2, 2), 'avg', block_n=1,
                           direct_matmul_min_cin=1)))
    np.testing.assert_allclose(got_direct, ref_avg, **TOL)

    # NHWC end-to-end path (skips both layout transposes when chaining blocks).
    x_nhwc = jnp.transpose(x, (0, 2, 3, 1))
    got_nhwc = np.asarray(jax.block_until_ready(
        conv_block_forward(x_nhwc, params, (2, 2), 'avg', block_n=1,
                           nhwc_input=True, nhwc_output=True)))
    np.testing.assert_allclose(np.transpose(got_nhwc, (0, 3, 1, 2)),
                               ref_avg, **TOL)

    # H < 2: conv/BN/ReLU stages run, pooling skipped (PyTorch early return).
    x_thin = jax.random.normal(k_x, (N, Cin, 1, 16), jnp.float32)
    got_thin = np.asarray(jax.block_until_ready(
        conv_block_forward(x_thin, params, (2, 2), 'avg', block_n=1)))
    ref_thin = np.asarray(reference_forward(x_thin, params, (2, 2), 'avg'))
    assert got_thin.shape == (N, Cout, 1, 16), got_thin.shape
    np.testing.assert_allclose(got_thin, ref_thin, **TOL)

    print("KERNEL_OK")
</pallas_src>

<mosaic_0001>
module attributes {stable_mosaic.version = 11 : i64} {
  func.func @conv_stats_kernel(%arg0: i32, %arg1: memref<1x16x16x4xbf16, #tpu.memory_space<vmem>>, %arg2: memref<36x8xbf16, #tpu.memory_space<vmem>>, %arg3: memref<1x16x16x8xbf16, #tpu.memory_space<vmem>>, %arg4: memref<1x2x8xf32, #tpu.memory_space<vmem>>, %arg5: memref<1x18x18x4xbf16, #tpu.memory_space<vmem>>, %arg6: memref<256x36xbf16, #tpu.memory_space<vmem>>) attributes {dimension_semantics = [#tpu.dimension_semantics<parallel>], iteration_bounds = array<i64: 2>, scalar_prefetch = 0 : i64, scratch_operands = 2 : i64, tpu.core_type = #tpu.core_type<tc>, window_params = [{transform_indices = @transform_0, window_bounds = array<i64: 1, 16, 16, 4>}, {pipeline_mode = #tpu.pipeline_mode<synchronous>, transform_indices = @transform_1, window_bounds = array<i64: 36, 8>}, {transform_indices = @transform_2, window_bounds = array<i64: 1, 16, 16, 8>}, {transform_indices = @transform_3, window_bounds = array<i64: 1, 2, 8>}]} {
    %c0 = arith.constant 0 : index
    %c0_0 = arith.constant 0 : index
    %c0_1 = arith.constant 0 : index
    %c0_2 = arith.constant 0 : index
    %0 = vector.load %arg1[%c0, %c0_0, %c0_1, %c0_2] : memref<1x16x16x4xbf16, #tpu.memory_space<vmem>>, vector<1x16x16x4xbf16>
    %cst = arith.constant 0.000000e+00 : bf16
    %1 = vector.broadcast %cst : bf16 to vector<1x1x18x4xbf16>
    %cst_3 = arith.constant 0.000000e+00 : bf16
    %2 = vector.broadcast %cst_3 : bf16 to vector<1x18x1x4xbf16>
    %c0_4 = arith.constant 0 : index
    %c0_5 = arith.constant 0 : index
    %c0_6 = arith.constant 0 : index
    %c0_7 = arith.constant 0 : index
    %3 = vector.load %arg5[%c0_4, %c0_5, %c0_6, %c0_7] : memref<1x18x18x4xbf16, #tpu.memory_space<vmem>>, vector<1x1x18x4xbf16>
    tpu.vector_store %arg5[%c0_4, %c0_5, %c0_6, %c0_7], %1 {strides = array<i32>} : memref<1x18x18x4xbf16, #tpu.memory_space<vmem>>, vector<1x1x18x4xbf16>,
    %c0_8 = arith.constant 0 : index
    %c17 = arith.constant 17 : index
    %c0_9 = arith.constant 0 : index
    %c0_10 = arith.constant 0 : index
    %4 = vector.load %arg5[%c0_8, %c17, %c0_9, %c0_10] : memref<1x18x18x4xbf16, #tpu.memory_space<vmem>>, vector<1x1x18x4xbf16>
    tpu.vector_store %arg5[%c0_8, %c17, %c0_9, %c0_10], %1 {strides = array<i32>} : memref<1x18x18x4xbf16, #tpu.memory_space<vmem>>, vector<1x1x18x4xbf16>,
    %c0_11 = arith.constant 0 : index
    %c0_12 = arith.constant 0 : index
    %c0_13 = arith.constant 0 : index
    %c0_14 = arith.constant 0 : index
    %5 = vector.load %arg5[%c0_11, %c0_12, %c0_13, %c0_14] : memref<1x18x18x4xbf16, #tpu.memory_space<vmem>>, vector<1x18x1x4xbf16>
    tpu.vector_store %arg5[%c0_11, %c0_12, %c0_13, %c0_14], %2 {strides = array<i32>} : memref<1x18x18x4xbf16, #tpu.memory_space<vmem>>, vector<1x18x1x4xbf16>,
    %c0_15 = arith.constant 0 : index
    %c0_16 = arith.constant 0 : index
    %c17_17 = arith.constant 17 : index
    %c0_18 = arith.constant 0 : index
    %6 = vector.load %arg5[%c0_15, %c0_16, %c17_17, %c0_18] : memref<1x18x18x4xbf16, #tpu.memory_space<vmem>>, vector<1x18x1x4xbf16>
    tpu.vector_store %arg5[%c0_15, %c0_16, %c17_17, %c0_18], %2 {strides = array<i32>} : memref<1x18x18x4xbf16, #tpu.memory_space<vmem>>, vector<1x18x1x4xbf16>,
    %c0_19 = arith.constant 0 : index
    %c1 = arith.constant 1 : index
    %c1_20 = arith.constant 1 : index
    %c0_21 = arith.constant 0 : index
    %7 = vector.load %arg5[%c0_19, %c1, %c1_20, %c0_21] : memref<1x18x18x4xbf16, #tpu.memory_space<vmem>>, vector<1x16x16x4xbf16>
    tpu.vector_store %arg5[%c0_19, %c1, %c1_20, %c0_21], %0 {strides = array<i32>} : memref<1x18x18x4xbf16, #tpu.memory_space<vmem>>, vector<1x16x16x4xbf16>,
    %c0_22 = arith.constant 0 : index
    %c0_23 = arith.constant 0 : index
    %c0_24 = arith.constant 0 : index
    %c0_25 = arith.constant 0 : index
    %8 = vector.load %arg5[%c0_22, %c0_23, %c0_24, %c0_25] : memref<1x18x18x4xbf16, #tpu.memory_space<vmem>>, vector<1x16x16x4xbf16>
    %9 = vector.shape_cast %8 : vector<1x16x16x4xbf16> to vector<256x4xbf16>
    %c0_26 = arith.constant 0 : index
    %c0_27 = arith.constant 0 : index
    %10 = vector.load %arg6[%c0_26, %c0_27] : memref<256x36xbf16, #tpu.memory_space<vmem>>, vector<256x4xbf16>
    tpu.vector_store %arg6[%c0_26, %c0_27], %9 {strides = array<i32>} : memref<256x36xbf16, #tpu.memory_space<vmem>>, vector<256x4xbf16>,
    %c0_28 = arith.constant 0 : index
    %c0_29 = arith.constant 0 : index
    %c1_30 = arith.constant 1 : index
    %c0_31 = arith.constant 0 : index
    %11 = vector.load %arg5[%c0_28, %c0_29, %c1_30, %c0_31] : memref<1x18x18x4xbf16, #tpu.memory_space<vmem>>, vector<1x16x16x4xbf16>
    %12 = vector.shape_cast %11 : vector<1x16x16x4xbf16> to vector<256x4xbf16>
    %c0_32 = arith.constant 0 : index
    %c4 = arith.constant 4 : index
    %13 = vector.load %arg6[%c0_32, %c4] : memref<256x36xbf16, #tpu.memory_space<vmem>>, vector<256x4xbf16>
    tpu.vector_store %arg6[%c0_32, %c4], %12 {strides = array<i32>} : memref<256x36xbf16, #tpu.memory_space<vmem>>, vector<256x4xbf16>,
    %c0_33 = arith.constant 0 : index
    %c0_34 = arith.constant 0 : index
    %c2 = arith.constant 2 : index
    %c0_35 = arith.constant 0 : index
    %14 = vector.load %arg5[%c0_33, %c0_34, %c2, %c0_35] : memref<1x18x18x4xbf16, #tpu.memory_space<vmem>>, vector<1x16x16x4xbf16>
    %15 = vector.shape_cast %14 : vector<1x16x16x4xbf16> to vector<256x4xbf16>
    %c0_36 = arith.constant 0 : index
    %c8 = arith.constant 8 : index
    %16 = vector.load %arg6[%c0_36, %c8] : memref<256x36xbf16, #tpu.memory_space<vmem>>, vector<256x4xbf16>
    tpu.vector_store %arg6[%c0_36, %c8], %15 {strides = array<i32>} : memref<256x36xbf16, #tpu.memory_space<vmem>>, vector<256x4xbf16>,
    %c0_37 = arith.constant 0 : index
    %c1_38 = arith.constant 1 : index
    %c0_39 = arith.constant 0 : index
    %c0_40 = arith.constant 0 : index
    %17 = vector.load %arg5[%c0_37, %c1_38, %c0_39, %c0_40] : memref<1x18x18x4xbf16, #tpu.memory_space<vmem>>, vector<1x16x16x4xbf16>
    %18 = vector.shape_cast %17 : vector<1x16x16x4xbf16> to vector<256x4xbf16>
    %c0_41 = arith.constant 0 : index
    %c12 = arith.constant 12 : index
    %19 = vector.load %arg6[%c0_41, %c12] : memref<256x36xbf16, #tpu.memory_space<vmem>>, vector<256x4xbf16>
    tpu.vector_store %arg6[%c0_41, %c12], %18 {strides = array<i32>} : memref<256x36xbf16, #tpu.memory_space<vmem>>, vector<256x4xbf16>,
    %c0_42 = arith.constant 0 : index
    %c1_43 = arith.constant 1 : index
    %c1_44 = arith.constant 1 : index
    %c0_45 = arith.constant 0 : index
    %20 = vector.load %arg5[%c0_42, %c1_43, %c1_44, %c0_45] : memref<1x18x18x4xbf16, #tpu.memory_space<vmem>>, vector<1x16x16x4xbf16>
    %21 = vector.shape_cast %20 : vector<1x16x16x4xbf16> to vector<256x4xbf16>
    %c0_46 = arith.constant 0 : index
    %c16 = arith.constant 16 : index
    %22 = vector.load %arg6[%c0_46, %c16] : memref<256x36xbf16, #tpu.memory_space<vmem>>, vector<256x4xbf16>
    tpu.vector_store %arg6[%c0_46, %c16], %21 {strides = array<i32>} : memref<256x36xbf16, #tpu.memory_space<vmem>>, vector<256x4xbf16>,
    %c0_47 = arith.constant 0 : index
    %c1_48 = arith.constant 1 : index
    %c2_49 = arith.constant 2 : index
    %c0_50 = arith.constant 0 : index
    %23 = vector.load %arg5[%c0_47, %c1_48, %c2_49, %c0_50] : memref<1x18x18x4xbf16, #tpu.memory_space<vmem>>, vector<1x16x16x4xbf16>
    %24 = vector.shape_cast %23 : vector<1x16x16x4xbf16> to vector<256x4xbf16>
    %c0_51 = arith.constant 0 : index
    %c20 = arith.constant 20 : index
    %25 = vector.load %arg6[%c0_51, %c20] : memref<256x36xbf16, #tpu.memory_space<vmem>>, vector<256x4xbf16>
    tpu.vector_store %arg6[%c0_51, %c20], %24 {strides = array<i32>} : memref<256x36xbf16, #tpu.memory_space<vmem>>, vector<256x4xbf16>,
    %c0_52 = arith.constant 0 : index
    %c2_53 = arith.constant 2 : index
    %c0_54 = arith.constant 0 : index
    %c0_55 = arith.constant 0 : index
    %26 = vector.load %arg5[%c0_52, %c2_53, %c0_54, %c0_55] : memref<1x18x18x4xbf16, #tpu.memory_space<vmem>>, vector<1x16x16x4xbf16>
    %27 = vector.shape_cast %26 : vector<1x16x16x4xbf16> to vector<256x4xbf16>
    %c0_56 = arith.constant 0 : index
    %c24 = arith.constant 24 : index
    %28 = vector.load %arg6[%c0_56, %c24] : memref<256x36xbf16, #tpu.memory_space<vmem>>, vector<256x4xbf16>
    tpu.vector_store %arg6[%c0_56, %c24], %27 {strides = array<i32>} : memref<256x36xbf16, #tpu.memory_space<vmem>>, vector<256x4xbf16>,
    %c0_57 = arith.constant 0 : index
    %c2_58 = arith.constant 2 : index
    %c1_59 = arith.constant 1 : index
    %c0_60 = arith.constant 0 : index
    %29 = vector.load %arg5[%c0_57, %c2_58, %c1_59, %c0_60] : memref<1x18x18x4xbf16, #tpu.memory_space<vmem>>, vector<1x16x16x4xbf16>
    %30 = vector.shape_cast %29 : vector<1x16x16x4xbf16> to vector<256x4xbf16>
    %c0_61 = arith.constant 0 : index
    %c28 = arith.constant 28 : index
    %31 = vector.load %arg6[%c0_61, %c28] : memref<256x36xbf16, #tpu.memory_space<vmem>>, vector<256x4xbf16>
    tpu.vector_store %arg6[%c0_61, %c28], %30 {strides = array<i32>} : memref<256x36xbf16, #tpu.memory_space<vmem>>, vector<256x4xbf16>,
    %c0_62 = arith.constant 0 : index
    %c2_63 = arith.constant 2 : index
    %c2_64 = arith.constant 2 : index
    %c0_65 = arith.constant 0 : index
    %32 = vector.load %arg5[%c0_62, %c2_63, %c2_64, %c0_65] : memref<1x18x18x4xbf16, #tpu.memory_space<vmem>>, vector<1x16x16x4xbf16>
    %33 = vector.shape_cast %32 : vector<1x16x16x4xbf16> to vector<256x4xbf16>
    %c0_66 = arith.constant 0 : index
    %c32 = arith.constant 32 : index
    %34 = vector.load %arg6[%c0_66, %c32] : memref<256x36xbf16, #tpu.memory_space<vmem>>, vector<256x4xbf16>
    tpu.vector_store %arg6[%c0_66, %c32], %33 {strides = array<i32>} : memref<256x36xbf16, #tpu.memory_space<vmem>>, vector<256x4xbf16>,
    %c0_67 = arith.constant 0 : index
    %c0_68 = arith.constant 0 : index
    %35 = vector.load %arg6[%c0_67, %c0_68] : memref<256x36xbf16, #tpu.memory_space<vmem>>, vector<256x36xbf16>
    %c0_69 = arith.constant 0 : index
    %c0_70 = arith.constant 0 : index
    %36 = vector.load %arg2[%c0_69, %c0_70] : memref<36x8xbf16, #tpu.memory_space<vmem>>, vector<36x8xbf16>
    %cst_71 = arith.constant dense<0.000000e+00> : vector<256x8xf32>
    %37 = tpu.matmul %35, %36, %cst_71 {dimension_numbers = #tpu.dot_dimension_numbers<[1], [0], [0], [1], [0, 0, 1, 1], [], []>} : vector<256x36xbf16>, vector<36x8xbf16>, vector<256x8xf32> -> vector<256x8xf32>
    %38 = arith.truncf %37 : vector<256x8xf32> to vector<256x8xbf16>
    %39 = vector.shape_cast %38 : vector<256x8xbf16> to vector<1x16x16x8xbf16>
    %c0_72 = arith.constant 0 : index
    %c0_73 = arith.constant 0 : index
    %c0_74 = arith.constant 0 : index
    %c0_75 = arith.constant 0 : index
    %40 = vector.load %arg3[%c0_72, %c0_73, %c0_74, %c0_75] : memref<1x16x16x8xbf16, #tpu.memory_space<vmem>>, vector<1x16x16x8xbf16>
    tpu.vector_store %arg3[%c0_72, %c0_73, %c0_74, %c0_75], %39 {strides = array<i32>} : memref<1x16x16x8xbf16, #tpu.memory_space<vmem>>, vector<1x16x16x8xbf16>,
    %cst_76 = arith.constant dense<0.000000e+00> : vector<8xf32>
    %41 = vector.multi_reduction <add>, %37, %cst_76 [0] : vector<256x8xf32> to vector<8xf32>
    %42 = vector.shape_cast %41 : vector<8xf32> to vector<1x8xf32>
    %43 = vector.shape_cast %42 : vector<1x8xf32> to vector<1x1x8xf32>
    %c0_77 = arith.constant 0 : index
    %c0_78 = arith.constant 0 : index
    %c0_79 = arith.constant 0 : index
    %44 = vector.load %arg4[%c0_77, %c0_78, %c0_79] : memref<1x2x8xf32, #tpu.memory_space<vmem>>, vector<1x1x8xf32>
    tpu.vector_store %arg4[%c0_77, %c0_78, %c0_79], %43 {strides = array<i32>} : memref<1x2x8xf32, #tpu.memory_space<vmem>>, vector<1x1x8xf32>,
    %45 = arith.mulf %37, %37 : vector<256x8xf32>
    %cst_80 = arith.constant dense<0.000000e+00> : vector<8xf32>
    %46 = vector.multi_reduction <add>, %45, %cst_80 [0] : vector<256x8xf32> to vector<8xf32>
    %47 = vector.shape_cast %46 : vector<8xf32> to vector<1x8xf32>
    %48 = vector.shape_cast %47 : vector<1x8xf32> to vector<1x1x8xf32>
    %c0_81 = arith.constant 0 : index
    %c1_82 = arith.constant 1 : index
    %c0_83 = arith.constant 0 : index
    %49 = vector.load %arg4[%c0_81, %c1_82, %c0_83] : memref<1x2x8xf32, #tpu.memory_space<vmem>>, vector<1x1x8xf32>
    tpu.vector_store %arg4[%c0_81, %c1_82, %c0_83], %48 {strides = array<i32>} : memref<1x2x8xf32, #tpu.memory_space<vmem>>, vector<1x1x8xf32>,
    return
  }
  func.func @transform_0(%arg0: i32) -> (i32, i32, i32, i32) {
    %c0_i32 = arith.constant 0 : i32
    %c0_i32_0 = arith.constant 0 : i32
    %c0_i32_1 = arith.constant 0 : i32
    %c0_i32_2 = arith.constant 0 : i32
    return %arg0, %c0_i32, %c0_i32_0, %c0_i32_1 : i32, i32, i32, i32
  }
  func.func @transform_1(%arg0: i32) -> (i32, i32) {
    %c0_i32 = arith.constant 0 : i32
    %c0_i32_0 = arith.constant 0 : i32
    %c0_i32_1 = arith.constant 0 : i32
    return %c0_i32, %c0_i32_0 : i32, i32
  }
  func.func @transform_2(%arg0: i32) -> (i32, i32, i32, i32) {
    %c0_i32 = arith.constant 0 : i32
    %c0_i32_0 = arith.constant 0 : i32
    %c0_i32_1 = arith.constant 0 : i32
    %c0_i32_2 = arith.constant 0 : i32
    return %arg0, %c0_i32, %c0_i32_0, %c0_i32_1 : i32, i32, i32, i32
  }
  func.func @transform_3(%arg0: i32) -> (i32, i32, i32) {
    %c0_i32 = arith.constant 0 : i32
    %c0_i32_0 = arith.constant 0 : i32
    %c0_i32_1 = arith.constant 0 : i32
    return %arg0, %c0_i32, %c0_i32_0 : i32, i32, i32
  }
}

</mosaic_0001>

<llo_original>
// kernel: tpu_custom_call.1
$region0: #{tpu_custom_call.1}
  #allocation0 [shape = 'u32[]', space=smem, size = 0x4, offset = 0x4, fixed_abs, tag = 'smem constant byte address 0x4 - core index']
  #allocation1 [shape = 'u32[72,128]{1,0:T(1,128)}', space=vmem, size = 0x9000, scoped, tag = 'internal scratch']
  #allocation2 [shape = 'bf16[1,18,18,4]{3,2,1,0:T(8,128)(2,1)}', space=vmem, size = 0x1b000, scoped, tag = 'scratch operand']
  #allocation3 [shape = 'bf16[256,36]{1,0:T(8,128)(2,1)}', space=vmem, size = 0x10000, scoped, tag = 'scratch operand']
  %s0 = inlined_call_operand.vmem [shape: bf16[2,16,16,4], index: 0, kind: input, shape index: {}]
  %s1 = inlined_call_operand.vmem [shape: bf16[36,8], index: 1, kind: input, shape index: {}]
  %s2 = inlined_call_operand.vmem [shape: bf16[2,16,16,8], index: 2, kind: output, shape index: {0}]
  %s3 = inlined_call_operand.hbm [shape: f32[2,2,8], index: 3, kind: output, shape index: {1}]
  %4 = xla_tuple %s2, %s3
  %s5 = sld [smem:[#allocation0]]
  $region49: #{tpu_custom_call.1} parent=0
    _
  %s7 = ssub.s32 1, %s5
  %s8 = scalar_select 0, %s7, %s5
  $region1: #{tpu_custom_call.1} parent=0
    #allocation4 [shape = 'u8[2048]{0}', space=vmem, size = 0x800, scoped, tag = 'output window, operand 1']
    #allocation5 [shape = 's32[2]{0}', space=sflag, size = 0x8, scoped, tag = 'scoped memory for tpu_custom_call.1']
    %9 = vsyncpa [#allocation5], 0
    %s10 = scalar_lea.sflag [#allocation5], 1
    %11 = vsyncpa %s10, 0
    loop: start=0, step=1, limit=4
    $region2: #{tpu_custom_call.1} parent=1 // loop_pre_header
      _
    $region3: #{tpu_custom_call.1} parent=1 // loop_header
      %s13 = sphi 0, %s17
      %p14 = scmp.ge.s32.totalorder %s13, 4
      %s23 = sphi 0, %s25
      %s26 = sphi 0, %s23
      %s27 = sphi 0, %s26
      %s43 = sphi 0, %s27
      %s47 = sphi 0, %s47
      %s49 = sphi 0, %s47
      %s50 = sphi 0, %s49
      %s64 = sphi 0, %s50
      %s70 = sphi 0, %s72
      %s73 = sphi 0, %s70
      %s74 = sphi 0, %s73
      %s90 = sphi 0, %s74
      %s96 = sphi 0, %s98
      %s99 = sphi 0, %s96
      %s100 = sphi 0, %s99
      %s116 = sphi 0, %s100
    $region4: #{tpu_custom_call.1} parent=1 // loop_header_branch
      %16 = sbr.rel (%p14) target = $region8
    $region5: #{tpu_custom_call.1} parent=1 // loop_body
      %s18 = ssub.s32 %s13, 1
      %s19 = ssub.s32 %s13, 2
      %s20 = sadd.s32 %s13, 1
      %s21 = ssub.s32 %s13, %s20
      %p22 = scmp.eq.s32.totalorder %s21, 0
      %s24 = sadd.s32 %s23, 1
      %s25 = scalar_select %p22, %s23, %s24
      %p28 = pneg %p22
      %p29 = scmp.eq.s32.totalorder %s13, 1
      %p30 = por %p28, %p29
      %p31 = scmp.ne.s32.totalorder %s23, %s26
      %p32 = scmp.eq.s32.totalorder %s13, 0
      %p33 = por %p31, %p32
      %p34 = scmp.ne.s32.totalorder %s23, %s26
      %p35 = scmp.eq.s32.totalorder %s18, 1
      %p36 = por %p34, %p35
      %p37 = scmp.ne.s32.totalorder %s26, %s27
      %p38 = scmp.eq.s32.totalorder %s18, 0
      %p39 = por %p37, %p38
      %p40 = scmp.ne.s32.totalorder %s26, %s27
      %p41 = scmp.eq.s32.totalorder %s19, 1
      %p42 = por %p40, %p41
      %p44 = scmp.ne.s32.totalorder %s27, %s43
      %p45 = scmp.eq.s32.totalorder %s19, 0
      %p46 = por %p44, %p45
      %s48 = sadd.s32 %s47, 1
      %p51 = scmp.eq.s32.totalorder %s13, 1
      %p52 = scmp.ne.s32.totalorder %s47, %s49
      %p53 = scmp.eq.s32.totalorder %s13, 0
      %p54 = por %p52, %p53
      %p55 = scmp.ne.s32.totalorder %s47, %s49
      %p56 = scmp.eq.s32.totalorder %s18, 1
      %p57 = por %p55, %p56
      %p58 = scmp.ne.s32.totalorder %s49, %s50
      %p59 = scmp.eq.s32.totalorder %s18, 0
      %p60 = por %p58, %p59
      %p61 = scmp.ne.s32.totalorder %s49, %s50
      %p62 = scmp.eq.s32.totalorder %s19, 1
      %p63 = por %p61, %p62
      %p65 = scmp.ne.s32.totalorder %s50, %s64
      %p66 = scmp.eq.s32.totalorder %s19, 0
      %p67 = por %p65, %p66
      %s68 = ssub.s32 %s13, %s20
      %p69 = scmp.eq.s32.totalorder %s68, 0
      %s71 = sadd.s32 %s70, 1
      %s72 = scalar_select %p69, %s70, %s71
      %p75 = pneg %p69
      %p76 = scmp.eq.s32.totalorder %s13, 1
      %p77 = por %p75, %p76
      %p78 = scmp.ne.s32.totalorder %s70, %s73
      %p79 = scmp.eq.s32.totalorder %s13, 0
      %p80 = por %p78, %p79
      %p81 = scmp.ne.s32.totalorder %s70, %s73
      %p82 = scmp.eq.s32.totalorder %s18, 1
      %p83 = por %p81, %p82
      %p84 = scmp.ne.s32.totalorder %s73, %s74
      %p85 = scmp.eq.s32.totalorder %s18, 0
      %p86 = por %p84, %p85
      %p87 = scmp.ne.s32.totalorder %s73, %s74
      %p88 = scmp.eq.s32.totalorder %s19, 1
      %p89 = por %p87, %p88
      %p91 = scmp.ne.s32.totalorder %s74, %s90
      %p92 = scmp.eq.s32.totalorder %s19, 0
      %p93 = por %p91, %p92
      %s94 = ssub.s32 %s13, %s20
      %p95 = scmp.eq.s32.totalorder %s94, 0
      %s97 = sadd.s32 %s96, 1
      %s98 = scalar_select %p95, %s96, %s97
      %p101 = pneg %p95
      %p102 = scmp.eq.s32.totalorder %s13, 1
      %p103 = por %p101, %p102
      %p104 = scmp.ne.s32.totalorder %s96, %s99
      %p105 = scmp.eq.s32.totalorder %s13, 0
      %p106 = por %p104, %p105
      %p107 = scmp.ne.s32.totalorder %s96, %s99
      %p108 = scmp.eq.s32.totalorder %s18, 1
      %p109 = por %p107, %p108
      %p110 = scmp.ne.s32.totalorder %s99, %s100
      %p111 = scmp.eq.s32.totalorder %s18, 0
      %p112 = por %p110, %p111
      %p113 = scmp.ne.s32.totalorder %s99, %s100
      %p114 = scmp.eq.s32.totalorder %s19, 1
      %p115 = por %p113, %p114
      %p117 = scmp.ne.s32.totalorder %s100, %s116
      %p118 = scmp.eq.s32.totalorder %s19, 0
      %p119 = por %p117, %p118
      %p120 = scmp.le.s32.totalorder 1, %s13
      %p121 = scmp.lt.s32.totalorder %s13, 3
      %p122 = pnand %p120, %p121
      %p123 = pneg %p122
      // Predicated region
      $region9: #{tpu_custom_call.1} parent=5 // pred_check
        _
      $region10: #{tpu_custom_call.1} parent=5 // pred_check_branch
        %125 = sbr.rel (%p122) target = $region12
      $region11: #{tpu_custom_call.1} parent=5 // pred_region
        %s126 = ssub.s32 %s13, 1
        // Predicated region
        $region13: #{tpu_custom_call.1} parent=11 // pred_check
          %p127 = pneg %p60
        $region14: #{tpu_custom_call.1} parent=11 // pred_check_branch
          %129 = sbr.rel (%p127) target = $region16
        $region15: #{tpu_custom_call.1} parent=11 // pred_region
          _
        $region16: #{tpu_custom_call.1} parent=11 // pred_fallthru
          _
      $region12: #{tpu_custom_call.1} parent=5 // pred_fallthru
        _
      %p130 = scmp.lt.s32.totalorder %s13, 2
      // Predicated region
      $region17: #{tpu_custom_call.1} parent=5 // pred_check
        %p131 = pneg %p130
      $region18: #{tpu_custom_call.1} parent=5 // pred_check_branch
        %133 = sbr.rel (%p131) target = $region20
      $region19: #{tpu_custom_call.1} parent=5 // pred_region
        // Predicated region
        $region21: #{tpu_custom_call.1} parent=19 // pred_check
          %p134 = pneg %p33
        $region22: #{tpu_custom_call.1} parent=19 // pred_check_branch
          %136 = sbr.rel (%p134) target = $region24
        $region23: #{tpu_custom_call.1} parent=19 // pred_region
          %p137 = scmp.lt.s32.totalorder %s13, 1
          %s138 = scalar_select %p137, %s13, 1
          %s139 = smul.addr %s138, 32
          %s140 = smul.addr %s139, 4
          %s141 = scalar_lea.vmem %s0, %s140
        $region24: #{tpu_custom_call.1} parent=19 // pred_fallthru
          _
      $region20: #{tpu_custom_call.1} parent=5 // pred_fallthru
        _
      %p142 = scmp.le.s32.totalorder 1, %s13
      %p143 = scmp.lt.s32.totalorder %s13, 3
      %p144 = pnand %p142, %p143
      %p145 = pneg %p144
      // Predicated region
      $region25: #{tpu_custom_call.1} parent=5 // pred_check
        _
      $region26: #{tpu_custom_call.1} parent=5 // pred_check_branch
        %147 = sbr.rel (%p144) target = $region28
      $region27: #{tpu_custom_call.1} parent=5 // pred_region
        %s148 = ssub.s32 %s13, 1
        %p149 = scmp.lt.s32.totalorder %s18, 1
        %s150 = scalar_select %p149, %s18, 1
        %s151 = smul.addr %s150, 32
        %s152 = smul.addr %s151, 4
        %s153 = scalar_lea.vmem %s0, %s152
        %p154 = pneg %p39
        %p155 = pneg %p36
        %p156 = pneg %p60
        %p157 = pneg %p57
        %p158 = pneg %p86
        %p159 = pneg %p83
        %p160 = scmp.lt.s32.totalorder %s18, 1
        %s161 = scalar_select %p160, %s18, 1
        %s162 = smul.addr %s161, 32
        %s163 = smul.addr %s162, 4
        %s164 = scalar_lea.vmem %s2, %s163
        %p165 = pneg %p112
        %p166 = pneg %p109
        %s167 = sand.u32 %s99, 1
        %s168 = scalar_lea.sflag [#allocation5], %s167
        %s169 = sand.u32 %s99, 1
        %s170 = smul.addr %s169, 2
        %s171 = scalar_lea.vmem [#allocation4], %s170
        %p172 = scmp.lt.s32.totalorder %s18, 1
        %s173 = scalar_select %p172, %s18, 1
        %s174 = smul.addr %s173, 32
        %s175 = smul.addr %s174, 4
        %s176 = scalar_lea.vmem %s0, %s175
        %p177 = scmp.lt.s32.totalorder %s18, 1
        %s178 = scalar_select %p177, %s18, 1
        %s179 = smul.addr %s178, 32
        %s180 = smul.addr %s179, 4
        %s181 = scalar_lea.vmem %s2, %s180
        %v183 = vld [vmem:[%s176] sm:$0xf]
        %v184 = vld [vmem:[%s176 + $0x4] sm:$0xf]
        %v185 = vld [vmem:[%s176 + $0x8] sm:$0xf]
        %v186 = vld [vmem:[%s176 + $0xc] sm:$0xf]
        %v187 = vld [vmem:[%s176 + $0x10] sm:$0xf]
        %v188 = vld [vmem:[%s176 + $0x14] sm:$0xf]
        %v189 = vld [vmem:[%s176 + $0x18] sm:$0xf]
        %v190 = vld [vmem:[%s176 + $0x1c] sm:$0xf]
        %v191 = vld [vmem:[%s176 + $0x20] sm:$0xf]
        %v192 = vld [vmem:[%s176 + $0x24] sm:$0xf]
        %v193 = vld [vmem:[%s176 + $0x28] sm:$0xf]
        %v194 = vld [vmem:[%s176 + $0x2c] sm:$0xf]
        %v195 = vld [vmem:[%s176 + $0x30] sm:$0xf]
        %v196 = vld [vmem:[%s176 + $0x34] sm:$0xf]
        %v197 = vld [vmem:[%s176 + $0x38] sm:$0xf]
        %v198 = vld [vmem:[%s176 + $0x3c] sm:$0xf]
        %v199 = vld [vmem:[%s176 + $0x40] sm:$0xf]
        %v200 = vld [vmem:[%s176 + $0x44] sm:$0xf]
        %v201 = vld [vmem:[%s176 + $0x48] sm:$0xf]
        %v202 = vld [vmem:[%s176 + $0x4c] sm:$0xf]
        %v203 = vld [vmem:[%s176 + $0x50] sm:$0xf]
        %v204 = vld [vmem:[%s176 + $0x54] sm:$0xf]
        %v205 = vld [vmem:[%s176 + $0x58] sm:$0xf]
        %v206 = vld [vmem:[%s176 + $0x5c] sm:$0xf]
        %v207 = vld [vmem:[%s176 + $0x60] sm:$0xf]
        %v208 = vld [vmem:[%s176 + $0x64] sm:$0xf]
        %v209 = vld [vmem:[%s176 + $0x68] sm:$0xf]
        %v210 = vld [vmem:[%s176 + $0x6c] sm:$0xf]
        %v211 = vld [vmem:[%s176 + $0x70] sm:$0xf]
        %v212 = vld [vmem:[%s176 + $0x74] sm:$0xf]
        %v213 = vld [vmem:[%s176 + $0x78] sm:$0xf]
        %v214 = vld [vmem:[%s176 + $0x7c] sm:$0xf]
        %vm215 = vcmask 27648
        %216 = vst.msk [vmem:[#allocation2] sm:$0xf] %vm215, 0
        %217 = vst.msk [vmem:[#allocation2 + $0x4] sm:$0xf] %vm215, 0
        %vm218 = vcmask 24576
        %219 = vst.msk [vmem:[#allocation2 + $0x8] sm:$0x1] %vm218, 0
        %s220 = scalar_lea.vmem [#allocation2], 204
        %221 = vst.msk [vmem:[%s220] sm:$0xf] %vm215, 0
        %222 = vst.msk [vmem:[%s220 + $0x4] sm:$0xf] %vm215, 0
        %223 = vst.msk [vmem:[%s220 + $0x8] sm:$0x1] %vm218, 0
        %vm224 = vcmask 24576
        %vm225 = vsmask.f32 256
        %vm226 = vmand %vm224, %vm225
        %v227 = vld [vmem:[#allocation2] sm:$0x1]
        %v228 = vsel %vm226, 0, %v227
        %229 = vst [vmem:[#allocation2] sm:$0x1] %v228
        %v230 = vld [vmem:[#allocation2 + $0xc] sm:$0x1]
        %v231 = vsel %vm226, 0, %v230
        %232 = vst [vmem:[#allocation2 + $0xc] sm:$0x1] %v231
        %v233 = vld [vmem:[#allocation2 + $0x18] sm:$0x1]
        %v234 = vsel %vm226, 0, %v233
        %235 = vst [vmem:[#allocation2 + $0x18] sm:$0x1] %v234
        %v236 = vld [vmem:[#allocation2 + $0x24] sm:$0x1]
        %v237 = vsel %vm226, 0, %v236
        %238 = vst [vmem:[#allocation2 + $0x24] sm:$0x1] %v237
        %v239 = vld [vmem:[#allocation2 + $0x30] sm:$0x1]
        %v240 = vsel %vm226, 0, %v239
        %241 = vst [vmem:[#allocation2 + $0x30] sm:$0x1] %v240
        %v242 = vld [vmem:[#allocation2 + $0x3c] sm:$0x1]
        %v243 = vsel %vm226, 0, %v242
        %244 = vst [vmem:[#allocation2 + $0x3c] sm:$0x1] %v243
        %v245 = vld [vmem:[#allocation2 + $0x48] sm:$0x1]
        %v246 = vsel %vm226, 0, %v245
        %247 = vst [vmem:[#allocation2 + $0x48] sm:$0x1] %v246
        %v248 = vld [vmem:[#allocation2 + $0x54] sm:$0x1]
        %v249 = vsel %vm226, 0, %v248
        %250 = vst [vmem:[#allocation2 + $0x54] sm:$0x1] %v249
        %v251 = vld [vmem:[#allocation2 + $0x60] sm:$0x1]
        %v252 = vsel %vm226, 0, %v251
        %253 = vst [vmem:[#allocation2 + $0x60] sm:$0x1] %v252
        %v254 = vld [vmem:[#allocation2 + $0x6c] sm:$0x1]
        %v255 = vsel %vm226, 0, %v254
        %256 = vst [vmem:[#allocation2 + $0x6c] sm:$0x1] %v255
        %v257 = vld [vmem:[#allocation2 + $0x78] sm:$0x1]
        %v258 = vsel %vm226, 0, %v257
        %259 = vst [vmem:[#allocation2 + $0x78] sm:$0x1] %v258
        %v260 = vld [vmem:[#allocation2 + $0x84] sm:$0x1]
        %v261 = vsel %vm226, 0, %v260
        %262 = vst [vmem:[#allocation2 + $0x84] sm:$0x1] %v261
        %v263 = vld [vmem:[#allocation2 + $0x90] sm:$0x1]
        %v264 = vsel %vm226, 0, %v263
        %265 = vst [vmem:[#allocation2 + $0x90] sm:$0x1] %v264
        %v266 = vld [vmem:[#allocation2 + $0x9c] sm:$0x1]
        %v267 = vsel %vm226, 0, %v266
        %268 = vst [vmem:[#allocation2 + $0x9c] sm:$0x1] %v267
        %v269 = vld [vmem:[#allocation2 + $0xa8] sm:$0x1]
        %v270 = vsel %vm226, 0, %v269
        %271 = vst [vmem:[#allocation2 + $0xa8] sm:$0x1] %v270
        %v272 = vld [vmem:[#allocation2 + $0xb4] sm:$0x1]
        %v273 = vsel %vm226, 0, %v272
        %274 = vst [vmem:[#allocation2 + $0xb4] sm:$0x1] %v273
        %v275 = vld [vmem:[#allocation2 + $0xc0] sm:$0x1]
        %v276 = vsel %vm226, 0, %v275
        %277 = vst [vmem:[#allocation2 + $0xc0] sm:$0x1] %v276
        %v278 = vld [vmem:[#allocation2 + $0xcc] sm:$0x1]
        %v279 = vsel %vm226, 0, %v278
        %280 = vst [vmem:[#allocation2 + $0xcc] sm:$0x1] %v279
        %vm281 = vsmask.f32 7938
        %vm282 = vmand %vm224, %vm281
        %v283 = vld [vmem:[#allocation2 + $0x8] sm:$0x1]
        %v284 = vsel %vm282, 0, %v283
        %285 = vst [vmem:[#allocation2 + $0x8] sm:$0x1] %v284
        %v286 = vld [vmem:[#allocation2 + $0x14] sm:$0x1]
        %v287 = vsel %vm282, 0, %v286
        %288 = vst [vmem:[#allocation2 + $0x14] sm:$0x1] %v287
        %v289 = vld [vmem:[#allocation2 + $0x20] sm:$0x1]
        %v290 = vsel %vm282, 0, %v289
        %291 = vst [vmem:[#allocation2 + $0x20] sm:$0x1] %v290
        %v292 = vld [vmem:[#allocation2 + $0x2c] sm:$0x1]
        %v293 = vsel %vm282, 0, %v292
        %294 = vst [vmem:[#allocation2 + $0x2c] sm:$0x1] %v293
        %v295 = vld [vmem:[#allocation2 + $0x38] sm:$0x1]
        %v296 = vsel %vm282, 0, %v295
        %297 = vst [vmem:[#allocation2 + $0x38] sm:$0x1] %v296
        %v298 = vld [vmem:[#allocation2 + $0x44] sm:$0x1]
        %v299 = vsel %vm282, 0, %v298
        %300 = vst [vmem:[#allocation2 + $0x44] sm:$0x1] %v299
        %v301 = vld [vmem:[#allocation2 + $0x50] sm:$0x1]
        %v302 = vsel %vm282, 0, %v301
        %303 = vst [vmem:[#allocation2 + $0x50] sm:$0x1] %v302
        %v304 = vld [vmem:[#allocation2 + $0x5c] sm:$0x1]
        %v305 = vsel %vm282, 0, %v304
        %306 = vst [vmem:[#allocation2 + $0x5c] sm:$0x1] %v305
        %v307 = vld [vmem:[#allocation2 + $0x68] sm:$0x1]
        %v308 = vsel %vm282, 0, %v307
        %309 = vst [vmem:[#allocation2 + $0x68] sm:$0x1] %v308
        %v310 = vld [vmem:[#allocation2 + $0x74] sm:$0x1]
        %v311 = vsel %vm282, 0, %v310
        %312 = vst [vmem:[#allocation2 + $0x74] sm:$0x1] %v311
        %v313 = vld [vmem:[#allocation2 + $0x80] sm:$0x1]
        %v314 = vsel %vm282, 0, %v313
        %315 = vst [vmem:[#allocation2 + $0x80] sm:$0x1] %v314
        %v316 = vld [vmem:[#allocation2 + $0x8c] sm:$0x1]
        %v317 = vsel %vm282, 0, %v316
        %318 = vst [vmem:[#allocation2 + $0x8c] sm:$0x1] %v317
        %v319 = vld [vmem:[#allocation2 + $0x98] sm:$0x1]
        %v320 = vsel %vm282, 0, %v319
        %321 = vst [vmem:[#allocation2 + $0x98] sm:$0x1] %v320
        %v322 = vld [vmem:[#allocation2 + $0xa4] sm:$0x1]
        %v323 = vsel %vm282, 0, %v322
        %324 = vst [vmem:[#allocation2 + $0xa4] sm:$0x1] %v323
        %v325 = vld [vmem:[#allocation2 + $0xb0] sm:$0x1]
        %v326 = vsel %vm282, 0, %v325
        %327 = vst [vmem:[#allocation2 + $0xb0] sm:$0x1] %v326
        %v328 = vld [vmem:[#allocation2 + $0xbc] sm:$0x1]
        %v329 = vsel %vm282, 0, %v328
        %330 = vst [vmem:[#allocation2 + $0xbc] sm:$0x1] %v329
        %v331 = vld [vmem:[#allocation2 + $0xc8] sm:$0x1]
        %v332 = vsel %vm282, 0, %v331
        %333 = vst [vmem:[#allocation2 + $0xc8] sm:$0x1] %v332
        %v334 = vld [vmem:[#allocation2 + $0xd4] sm:$0x1]
        %v335 = vsel %vm282, 0, %v334
        %336 = vst [vmem:[#allocation2 + $0xd4] sm:$0x1] %v335
        %vm337 = vsmask.f32 4368
        %vm338 = vmor %vm225, %vm337
        %v340 = vshrl.u32 %v183, 16
        %v342 = vrot.slane %v340, 7
        %v343 = vshll.u32 %v183, 16
        %v345 = vor.u32 %v342, %v343
        %v346 = vrot.slane %v342, 4
        %v348 = vshrl.u32 %v184, 16
        %v350 = vrot.slane %v348, 7
        %v351 = vshll.u32 %v184, 16
        %v353 = vor.u32 %v350, %v351
        %v354 = vsel %vm338, %v346, %v353
        %v355 = vrot.slane %v350, 4
        %v357 = vshrl.u32 %v185, 16
        %v359 = vrot.slane %v357, 7
        %v360 = vshll.u32 %v185, 16
        %v362 = vor.u32 %v359, %v360
        %v363 = vrot.slane %v359, 4
        %v365 = vshrl.u32 %v186, 16
        %v367 = vrot.slane %v365, 7
        %v368 = vshll.u32 %v186, 16
        %v370 = vor.u32 %v367, %v368
        %v371 = vsel %vm338, %v363, %v370
        %v372 = vrot.slane %v367, 4
        %v374 = vshrl.u32 %v187, 16
        %v376 = vrot.slane %v374, 7
        %v377 = vshll.u32 %v187, 16
        %v379 = vor.u32 %v376, %v377
        %v380 = vrot.slane %v376, 4
        %v382 = vshrl.u32 %v188, 16
        %v384 = vrot.slane %v382, 7
        %v385 = vshll.u32 %v188, 16
        %v387 = vor.u32 %v384, %v385
        %v388 = vsel %vm338, %v380, %v387
        %v389 = vrot.slane %v384, 4
        %v391 = vshrl.u32 %v189, 16
        %v393 = vrot.slane %v391, 7
        %v394 = vshll.u32 %v189, 16
        %v396 = vor.u32 %v393, %v394
        %v397 = vrot.slane %v393, 4
        %v399 = vshrl.u32 %v190, 16
        %v401 = vrot.slane %v399, 7
        %v402 = vshll.u32 %v190, 16
        %v404 = vor.u32 %v401, %v402
        %v405 = vsel %vm338, %v397, %v404
        %v406 = vrot.slane %v401, 4
        %v408 = vshrl.u32 %v191, 16
        %v410 = vrot.slane %v408, 7
        %v411 = vshll.u32 %v191, 16
        %v413 = vor.u32 %v410, %v411
        %v414 = vrot.slane %v410, 4
        %v416 = vshrl.u32 %v192, 16
        %v418 = vrot.slane %v416, 7
        %v419 = vshll.u32 %v192, 16
        %v421 = vor.u32 %v418, %v419
        %v422 = vsel %vm338, %v414, %v421
        %v423 = vrot.slane %v418, 4
        %v425 = vshrl.u32 %v193, 16
        %v427 = vrot.slane %v425, 7
        %v428 = vshll.u32 %v193, 16
        %v430 = vor.u32 %v427, %v428
        %v431 = vrot.slane %v427, 4
        %v433 = vshrl.u32 %v194, 16
        %v435 = vrot.slane %v433, 7
        %v436 = vshll.u32 %v194, 16
        %v438 = vor.u32 %v435, %v436
        %v439 = vsel %vm338, %v431, %v438
        %v440 = vrot.slane %v435, 4
        %v442 = vshrl.u32 %v195, 16
        %v444 = vrot.slane %v442, 7
        %v445 = vshll.u32 %v195, 16
        %v447 = vor.u32 %v444, %v445
        %v448 = vrot.slane %v444, 4
        %v450 = vshrl.u32 %v196, 16
        %v452 = vrot.slane %v450, 7
        %v453 = vshll.u32 %v196, 16
        %v455 = vor.u32 %v452, %v453
        %v456 = vsel %vm338, %v448, %v455
        %v457 = vrot.slane %v452, 4
        %v459 = vshrl.u32 %v197, 16
        %v461 = vrot.slane %v459, 7
        %v462 = vshll.u32 %v197, 16
        %v464 = vor.u32 %v461, %v462
        %v465 = vrot.slane %v461, 4
        %v467 = vshrl.u32 %v198, 16
        %v469 = vrot.slane %v467, 7
        %v470 = vshll.u32 %v198, 16
        %v472 = vor.u32 %v469, %v470
        %v473 = vsel %vm338, %v465, %v472
        %v474 = vrot.slane %v469, 4
        %v476 = vshrl.u32 %v199, 16
        %v478 = vrot.slane %v476, 7
        %v479 = vshll.u32 %v199, 16
        %v481 = vor.u32 %v478, %v479
        %v482 = vrot.slane %v478, 4
        %v484 = vshrl.u32 %v200, 16
        %v486 = vrot.slane %v484, 7
        %v487 = vshll.u32 %v200, 16
        %v489 = vor.u32 %v486, %v487
        %v490 = vsel %vm338, %v482, %v489
        %v491 = vrot.slane %v486, 4
        %v493 = vshrl.u32 %v201, 16
        %v495 = vrot.slane %v493, 7
        %v496 = vshll.u32 %v201, 16
        %v498 = vor.u32 %v495, %v496
        %v499 = vrot.slane %v495, 4
        %v501 = vshrl.u32 %v202, 16
        %v503 = vrot.slane %v501, 7
        %v504 = vshll.u32 %v202, 16
        %v506 = vor.u32 %v503, %v504
        %v507 = vsel %vm338, %v499, %v506
        %v508 = vrot.slane %v503, 4
        %v510 = vshrl.u32 %v203, 16
        %v512 = vrot.slane %v510, 7
        %v513 = vshll.u32 %v203, 16
        %v515 = vor.u32 %v512, %v513
        %v516 = vrot.slane %v512, 4
        %v518 = vshrl.u32 %v204, 16
        %v520 = vrot.slane %v518, 7
        %v521 = vshll.u32 %v204, 16
        %v523 = vor.u32 %v520, %v521
        %v524 = vsel %vm338, %v516, %v523
        %v525 = vrot.slane %v520, 4
        %v527 = vshrl.u32 %v205, 16
        %v529 = vrot.slane %v527, 7
        %v530 = vshll.u32 %v205, 16
        %v532 = vor.u32 %v529, %v530
        %v533 = vrot.slane %v529, 4
        %v535 = vshrl.u32 %v206, 16
        %v537 = vrot.slane %v535, 7
        %v538 = vshll.u32 %v206, 16
        %v540 = vor.u32 %v537, %v538
        %v541 = vsel %vm338, %v533, %v540
        %v542 = vrot.slane %v537, 4
        %v544 = vshrl.u32 %v207, 16
        %v546 = vrot.slane %v544, 7
        %v547 = vshll.u32 %v207, 16
        %v549 = vor.u32 %v546, %v547
        %v550 = vrot.slane %v546, 4
        %v552 = vshrl.u32 %v208, 16
        %v554 = vrot.slane %v552, 7
        %v555 = vshll.u32 %v208, 16
        %v557 = vor.u32 %v554, %v555
        %v558 = vsel %vm338, %v550, %v557
        %v559 = vrot.slane %v554, 4
        %v561 = vshrl.u32 %v209, 16
        %v563 = vrot.slane %v561, 7
        %v564 = vshll.u32 %v209, 16
        %v566 = vor.u32 %v563, %v564
        %v567 = vrot.slane %v563, 4
        %v569 = vshrl.u32 %v210, 16
        %v571 = vrot.slane %v569, 7
        %v572 = vshll.u32 %v210, 16
        %v574 = vor.u32 %v571, %v572
        %v575 = vsel %vm338, %v567, %v574
        %v576 = vrot.slane %v571, 4
        %v578 = vshrl.u32 %v211, 16
        %v580 = vrot.slane %v578, 7
        %v581 = vshll.u32 %v211, 16
        %v583 = vor.u32 %v580, %v581
        %v584 = vrot.slane %v580, 4
        %v586 = vshrl.u32 %v212, 16
        %v588 = vrot.slane %v586, 7
        %v589 = vshll.u32 %v212, 16
        %v591 = vor.u32 %v588, %v589
        %v592 = vsel %vm338, %v584, %v591
        %v593 = vrot.slane %v588, 4
        %v595 = vshrl.u32 %v213, 16
        %v597 = vrot.slane %v595, 7
        %v598 = vshll.u32 %v213, 16
        %v600 = vor.u32 %v597, %v598
        %v601 = vrot.slane %v597, 4
        %v603 = vshrl.u32 %v214, 16
        %v605 = vrot.slane %v603, 7
        %v606 = vshll.u32 %v214, 16
        %v608 = vor.u32 %v605, %v606
        %v609 = vsel %vm338, %v601, %v608
        %v610 = vrot.slane %v605, 4
        %s659 = scalar_lea.vmem [#allocation2], 12
        %vm660 = vcmask 27648
        %vm661 = vmand %vm660, %vm281
        %v662 = vld [vmem:[%s659] sm:$0xf]
        %v663 = vsel %vm661, %v345, %v662
        %664 = vst [vmem:[%s659] sm:$0xf] %v663
        %665 = vst.msk [vmem:[%s659 + $0x4] sm:$0xf] %vm215, %v354
        %v666 = vld [vmem:[%s659 + $0x8] sm:$0x1]
        %v667 = vsel %vm226, %v355, %v666
        %668 = vst [vmem:[%s659 + $0x8] sm:$0x1] %v667
        %v669 = vld [vmem:[%s659 + $0xc] sm:$0xf]
        %v670 = vsel %vm661, %v362, %v669
        %671 = vst [vmem:[%s659 + $0xc] sm:$0xf] %v670
        %672 = vst.msk [vmem:[%s659 + $0x10] sm:$0xf] %vm215, %v371
        %v673 = vld [vmem:[%s659 + $0x14] sm:$0x1]
        %v674 = vsel %vm226, %v372, %v673
        %675 = vst [vmem:[%s659 + $0x14] sm:$0x1] %v674
        %v676 = vld [vmem:[%s659 + $0x18] sm:$0xf]
        %v677 = vsel %vm661, %v379, %v676
        %678 = vst [vmem:[%s659 + $0x18] sm:$0xf] %v677
        %679 = vst.msk [vmem:[%s659 + $0x1c] sm:$0xf] %vm215, %v388
        %v680 = vld [vmem:[%s659 + $0x20] sm:$0x1]
        %v681 = vsel %vm226, %v389, %v680
        %682 = vst [vmem:[%s659 + $0x20] sm:$0x1] %v681
        %v683 = vld [vmem:[%s659 + $0x24] sm:$0xf]
        %v684 = vsel %vm661, %v396, %v683
        %685 = vst [vmem:[%s659 + $0x24] sm:$0xf] %v684
        %686 = vst.msk [vmem:[%s659 + $0x28] sm:$0xf] %vm215, %v405
        %v687 = vld [vmem:[%s659 + $0x2c] sm:$0x1]
        %v688 = vsel %vm226, %v406, %v687
        %689 = vst [vmem:[%s659 + $0x2c] sm:$0x1] %v688
        %v690 = vld [vmem:[%s659 + $0x30] sm:$0xf]
        %v691 = vsel %vm661, %v413, %v690
        %692 = vst [vmem:[%s659 + $0x30] sm:$0xf] %v691
        %693 = vst.msk [vmem:[%s659 + $0x34] sm:$0xf] %vm215, %v422
        %v694 = vld [vmem:[%s659 + $0x38] sm:$0x1]
        %v695 = vsel %vm226, %v423, %v694
        %696 = vst [vmem:[%s659 + $0x38] sm:$0x1] %v695
        %v697 = vld [vmem:[%s659 + $0x3c] sm:$0xf]
        %v698 = vsel %vm661, %v430, %v697
        %699 = vst [vmem:[%s659 + $0x3c] sm:$0xf] %v698
        %700 = vst.msk [vmem:[%s659 + $0x40] sm:$0xf] %vm215, %v439
        %v701 = vld [vmem:[%s659 + $0x44] sm:$0x1]
        %v702 = vsel %vm226, %v440, %v701
        %703 = vst [vmem:[%s659 + $0x44] sm:$0x1] %v702
        %v704 = vld [vmem:[%s659 + $0x48] sm:$0xf]
        %v705 = vsel %vm661, %v447, %v704
        %706 = vst [vmem:[%s659 + $0x48] sm:$0xf] %v705
        %707 = vst.msk [vmem:[%s659 + $0x4c] sm:$0xf] %vm215, %v456
        %v708 = vld [vmem:[%s659 + $0x50] sm:$0x1]
        %v709 = vsel %vm226, %v457, %v708
        %710 = vst [vmem:[%s659 + $0x50] sm:$0x1] %v709
        %v711 = vld [vmem:[%s659 + $0x54] sm:$0xf]
        %v712 = vsel %vm661, %v464, %v711
        %713 = vst [vmem:[%s659 + $0x54] sm:$0xf] %v712
        %714 = vst.msk [vmem:[%s659 + $0x58] sm:$0xf] %vm215, %v473
        %v715 = vld [vmem:[%s659 + $0x5c] sm:$0x1]
        %v716 = vsel %vm226, %v474, %v715
        %717 = vst [vmem:[%s659 + $0x5c] sm:$0x1] %v716
        %v718 = vld [vmem:[%s659 + $0x60] sm:$0xf]
        %v719 = vsel %vm661, %v481, %v718
        %720 = vst [vmem:[%s659 + $0x60] sm:$0xf] %v719
        %721 = vst.msk [vmem:[%s659 + $0x64] sm:$0xf] %vm215, %v490
        %v722 = vld [vmem:[%s659 + $0x68] sm:$0x1]
        %v723 = vsel %vm226, %v491, %v722
        %724 = vst [vmem:[%s659 + $0x68] sm:$0x1] %v723
        %v725 = vld [vmem:[%s659 + $0x6c] sm:$0xf]
        %v726 = vsel %vm661, %v498, %v725
        %727 = vst [vmem:[%s659 + $0x6c] sm:$0xf] %v726
        %728 = vst.msk [vmem:[%s659 + $0x70] sm:$0xf] %vm215, %v507
        %v729 = vld [vmem:[%s659 + $0x74] sm:$0x1]
        %v730 = vsel %vm226, %v508, %v729
        %731 = vst [vmem:[%s659 + $0x74] sm:$0x1] %v730
        %v732 = vld [vmem:[%s659 + $0x78] sm:$0xf]
        %v733 = vsel %vm661, %v515, %v732
        %734 = vst [vmem:[%s659 + $0x78] sm:$0xf] %v733
        %735 = vst.msk [vmem:[%s659 + $0x7c] sm:$0xf] %vm215, %v524
        %v736 = vld [vmem:[%s659 + $0x80] sm:$0x1]
        %v737 = vsel %vm226, %v525, %v736
        %738 = vst [vmem:[%s659 + $0x80] sm:$0x1] %v737
        %v739 = vld [vmem:[%s659 + $0x84] sm:$0xf]
        %v740 = vsel %vm661, %v532, %v739
        %741 = vst [vmem:[%s659 + $0x84] sm:$0xf] %v740
        %742 = vst.msk [vmem:[%s659 + $0x88] sm:$0xf] %vm215, %v541
        %v743 = vld [vmem:[%s659 + $0x8c] sm:$0x1]
        %v744 = vsel %vm226, %v542, %v743
        %745 = vst [vmem:[%s659 + $0x8c] sm:$0x1] %v744
        %v746 = vld [vmem:[%s659 + $0x90] sm:$0xf]
        %v747 = vsel %vm661, %v549, %v746
        %748 = vst [vmem:[%s659 + $0x90] sm:$0xf] %v747
        %749 = vst.msk [vmem:[%s659 + $0x94] sm:$0xf] %vm215, %v558
        %v750 = vld [vmem:[%s659 + $0x98] sm:$0x1]
        %v751 = vsel %vm226, %v559, %v750
        %752 = vst [vmem:[%s659 + $0x98] sm:$0x1] %v751
        %v753 = vld [vmem:[%s659 + $0x9c] sm:$0xf]
        %v754 = vsel %vm661, %v566, %v753
        %755 = vst [vmem:[%s659 + $0x9c] sm:$0xf] %v754
        %756 = vst.msk [vmem:[%s659 + $0xa0] sm:$0xf] %vm215, %v575
        %v757 = vld [vmem:[%s659 + $0xa4] sm:$0x1]
        %v758 = vsel %vm226, %v576, %v757
        %759 = vst [vmem:[%s659 + $0xa4] sm:$0x1] %v758
        %v760 = vld [vmem:[%s659 + $0xa8] sm:$0xf]
        %v761 = vsel %vm661, %v583, %v760
        %762 = vst [vmem:[%s659 + $0xa8] sm:$0xf] %v761
        %763 = vst.msk [vmem:[%s659 + $0xac] sm:$0xf] %vm215, %v592
        %v764 = vld [vmem:[%s659 + $0xb0] sm:$0x1]
        %v765 = vsel %vm226, %v593, %v764
        %766 = vst [vmem:[%s659 + $0xb0] sm:$0x1] %v765
        %v767 = vld [vmem:[%s659 + $0xb4] sm:$0xf]
        %v768 = vsel %vm661, %v600, %v767
        %769 = vst [vmem:[%s659 + $0xb4] sm:$0xf] %v768
        %770 = vst.msk [vmem:[%s659 + $0xb8] sm:$0xf] %vm215, %v609
        %v771 = vld [vmem:[%s659 + $0xbc] sm:$0x1]
        %v772 = vsel %vm226, %v610, %v771
        %773 = vst [vmem:[%s659 + $0xbc] sm:$0x1] %v772
        %v774 = vld [vmem:[#allocation2] sm:$0xf]
        %v775 = vld [vmem:[#allocation2 + $0x4] sm:$0xf]
        %v776 = vld [vmem:[#allocation2 + $0xc] sm:$0xf]
        %v777 = vld [vmem:[#allocation2 + $0x10] sm:$0xf]
        %v778 = vld [vmem:[#allocation2 + $0x18] sm:$0xf]
        %v779 = vld [vmem:[#allocation2 + $0x1c] sm:$0xf]
        %v780 = vld [vmem:[#allocation2 + $0x24] sm:$0xf]
        %v781 = vld [vmem:[#allocation2 + $0x28] sm:$0xf]
        %v782 = vld [vmem:[#allocation2 + $0x30] sm:$0xf]
        %v783 = vld [vmem:[#allocation2 + $0x34] sm:$0xf]
        %v784 = vld [vmem:[#allocation2 + $0x3c] sm:$0xf]
        %v785 = vld [vmem:[#allocation2 + $0x40] sm:$0xf]
        %v786 = vld [vmem:[#allocation2 + $0x48] sm:$0xf]
        %v787 = vld [vmem:[#allocation2 + $0x4c] sm:$0xf]
        %v788 = vld [vmem:[#allocation2 + $0x54] sm:$0xf]
        %v789 = vld [vmem:[#allocation2 + $0x58] sm:$0xf]
        %v790 = vld [vmem:[#allocation2 + $0x60] sm:$0xf]
        %v791 = vld [vmem:[#allocation2 + $0x64] sm:$0xf]
        %v792 = vld [vmem:[#allocation2 + $0x6c] sm:$0xf]
        %v793 = vld [vmem:[#allocation2 + $0x70] sm:$0xf]
        %v794 = vld [vmem:[#allocation2 + $0x78] sm:$0xf]
        %v795 = vld [vmem:[#allocation2 + $0x7c] sm:$0xf]
        %v796 = vld [vmem:[#allocation2 + $0x84] sm:$0xf]
        %v797 = vld [vmem:[#allocation2 + $0x88] sm:$0xf]
        %v798 = vld [vmem:[#allocation2 + $0x90] sm:$0xf]
        %v799 = vld [vmem:[#allocation2 + $0x94] sm:$0xf]
        %v800 = vld [vmem:[#allocation2 + $0x9c] sm:$0xf]
        %v801 = vld [vmem:[#allocation2 + $0xa0] sm:$0xf]
        %v802 = vld [vmem:[#allocation2 + $0xa8] sm:$0xf]
        %v803 = vld [vmem:[#allocation2 + $0xac] sm:$0xf]
        %v804 = vld [vmem:[#allocation2 + $0xb4] sm:$0xf]
        %v805 = vld [vmem:[#allocation2 + $0xb8] sm:$0xf]
        %806 = vst.msk [vmem:[#allocation3] sm:$0xf] %vm215, %v774
        %807 = vst.msk [vmem:[#allocation3 + $0x4] sm:$0xf] %vm215, %v775
        %808 = vst.msk [vmem:[#allocation3 + $0x8] sm:$0xf] %vm215, %v776
        %809 = vst.msk [vmem:[#allocation3 + $0xc] sm:$0xf] %vm215, %v777
        %810 = vst.msk [vmem:[#allocation3 + $0x10] sm:$0xf] %vm215, %v778
        %811 = vst.msk [vmem:[#allocation3 + $0x14] sm:$0xf] %vm215, %v779
        %812 = vst.msk [vmem:[#allocation3 + $0x18] sm:$0xf] %vm215, %v780
        %813 = vst.msk [vmem:[#allocation3 + $0x1c] sm:$0xf] %vm215, %v781
        %814 = vst.msk [vmem:[#allocation3 + $0x20] sm:$0xf] %vm215, %v782
        %815 = vst.msk [vmem:[#allocation3 + $0x24] sm:$0xf] %vm215, %v783
        %816 = vst.msk [vmem:[#allocation3 + $0x28] sm:$0xf] %vm215, %v784
        %817 = vst.msk [vmem:[#allocation3 + $0x2c] sm:$0xf] %vm215, %v785
        %818 = vst.msk [vmem:[#allocation3 + $0x30] sm:$0xf] %vm215, %v786
        %819 = vst.msk [vmem:[#allocation3 + $0x34] sm:$0xf] %vm215, %v787
        %820 = vst.msk [vmem:[#allocation3 + $0x38] sm:$0xf] %vm215, %v788
        %821 = vst.msk [vmem:[#allocation3 + $0x3c] sm:$0xf] %vm215, %v789
        %822 = vst.msk [vmem:[#allocation3 + $0x40] sm:$0xf] %vm215, %v790
        %823 = vst.msk [vmem:[#allocation3 + $0x44] sm:$0xf] %vm215, %v791
        %824 = vst.msk [vmem:[#allocation3 + $0x48] sm:$0xf] %vm215, %v792
        %825 = vst.msk [vmem:[#allocation3 + $0x4c] sm:$0xf] %vm215, %v793
        %826 = vst.msk [vmem:[#allocation3 + $0x50] sm:$0xf] %vm215, %v794
        %827 = vst.msk [vmem:[#allocation3 + $0x54] sm:$0xf] %vm215, %v795
        %828 = vst.msk [vmem:[#allocation3 + $0x58] sm:$0xf] %vm215, %v796
        %829 = vst.msk [vmem:[#allocation3 + $0x5c] sm:$0xf] %vm215, %v797
        %830 = vst.msk [vmem:[#allocation3 + $0x60] sm:$0xf] %vm215, %v798
        %831 = vst.msk [vmem:[#allocation3 + $0x64] sm:$0xf] %vm215, %v799
        %832 = vst.msk [vmem:[#allocation3 + $0x68] sm:$0xf] %vm215, %v800
        %833 = vst.msk [vmem:[#allocation3 + $0x6c] sm:$0xf] %vm215, %v801
        %834 = vst.msk [vmem:[#allocation3 + $0x70] sm:$0xf] %vm215, %v802
        %835 = vst.msk [vmem:[#allocation3 + $0x74] sm:$0xf] %vm215, %v803
        %836 = vst.msk [vmem:[#allocation3 + $0x78] sm:$0xf] %vm215, %v804
        %837 = vst.msk [vmem:[#allocation3 + $0x7c] sm:$0xf] %vm215, %v805
        %v838 = vld [vmem:[#allocation2] sm:$0xf]
        %v839 = vld [vmem:[#allocation2 + $0x4] sm:$0xf]
        %v840 = vld [vmem:[#allocation2 + $0x8] sm:$0x1]
        %v841 = vld [vmem:[#allocation2 + $0xc] sm:$0xf]
        %v842 = vld [vmem:[#allocation2 + $0x10] sm:$0xf]
        %v843 = vld [vmem:[#allocation2 + $0x14] sm:$0x1]
        %v844 = vld [vmem:[#allocation2 + $0x18] sm:$0xf]
        %v845 = vld [vmem:[#allocation2 + $0x1c] sm:$0xf]
        %v846 = vld [vmem:[#allocation2 + $0x20] sm:$0x1]
        %v847 = vld [vmem:[#allocation2 + $0x24] sm:$0xf]
        %v848 = vld [vmem:[#allocation2 + $0x28] sm:$0xf]
        %v849 = vld [vmem:[#allocation2 + $0x2c] sm:$0x1]
        %v850 = vld [vmem:[#allocation2 + $0x30] sm:$0xf]
        %v851 = vld [vmem:[#allocation2 + $0x34] sm:$0xf]
        %v852 = vld [vmem:[#allocation2 + $0x38] sm:$0x1]
        %v853 = vld [vmem:[#allocation2 + $0x3c] sm:$0xf]
        %v854 = vld [vmem:[#allocation2 + $0x40] sm:$0xf]
        %v855 = vld [vmem:[#allocation2 + $0x44] sm:$0x1]
        %v856 = vld [vmem:[#allocation2 + $0x48] sm:$0xf]
        %v857 = vld [vmem:[#allocation2 + $0x4c] sm:$0xf]
        %v858 = vld [vmem:[#allocation2 + $0x50] sm:$0x1]
        %v859 = vld [vmem:[#allocation2 + $0x54] sm:$0xf]
        %v860 = vld [vmem:[#allocation2 + $0x58] sm:$0xf]
        %v861 = vld [vmem:[#allocation2 + $0x5c] sm:$0x1]
        %v862 = vld [vmem:[#allocation2 + $0x60] sm:$0xf]
        %v863 = vld [vmem:[#allocation2 + $0x64] sm:$0xf]
        %v864 = vld [vmem:[#allocation2 + $0x68] sm:$0x1]
        %v865 = vld [vmem:[#allocation2 + $0x6c] sm:$0xf]
        %v866 = vld [vmem:[#allocation2 + $0x70] sm:$0xf]
        %v867 = vld [vmem:[#allocation2 + $0x74] sm:$0x1]
        %v868 = vld [vmem:[#allocation2 + $0x78] sm:$0xf]
        %v869 = vld [vmem:[#allocation2 + $0x7c] sm:$0xf]
        %v870 = vld [vmem:[#allocation2 + $0x80] sm:$0x1]
        %v871 = vld [vmem:[#allocation2 + $0x84] sm:$0xf]
        %v872 = vld [vmem:[#allocation2 + $0x88] sm:$0xf]
        %v873 = vld [vmem:[#allocation2 + $0x8c] sm:$0x1]
        %v874 = vld [vmem:[#allocation2 + $0x90] sm:$0xf]
        %v875 = vld [vmem:[#allocation2 + $0x94] sm:$0xf]
        %v876 = vld [vmem:[#allocation2 + $0x98] sm:$0x1]
        %v877 = vld [vmem:[#allocation2 + $0x9c] sm:$0xf]
        %v878 = vld [vmem:[#allocation2 + $0xa0] sm:$0xf]
        %v879 = vld [vmem:[#allocation2 + $0xa4] sm:$0x1]
        %v880 = vld [vmem:[#allocation2 + $0xa8] sm:$0xf]
        %v881 = vld [vmem:[#allocation2 + $0xac] sm:$0xf]
        %v882 = vld [vmem:[#allocation2 + $0xb0] sm:$0x1]
        %v883 = vld [vmem:[#allocation2 + $0xb4] sm:$0xf]
        %v884 = vld [vmem:[#allocation2 + $0xb8] sm:$0xf]
        %v885 = vld [vmem:[#allocation2 + $0xbc] sm:$0x1]
        %vm886 = vsmask.f32 3328
        %vm887 = vsmask.f32 7440
        %vm888 = vmor %vm886, %vm887
        %v890 = vshrl.u32 %v838, 16
        %v892 = vrot.slane %v890, 4
        %v893 = vshll.u32 %v838, 16
        %v895 = vrot.slane %v893, 5
        %v896 = vor.u32 %v892, %v895
        %v897 = vrot.slane %v896, 4
        %v899 = vshll.u32 %v839, 16
        %v901 = vrot.slane %v899, 5
        %v902 = vsel %vm888, %v897, %v901
        %v903 = vshrl.u32 %v839, 16
        %v905 = vrot.slane %v903, 4
        %v906 = vor.u32 %v905, %v901
        %v907 = vrot.slane %v906, 4
        %v909 = vshll.u32 %v840, 16
        %v911 = vrot.slane %v909, 5
        %v912 = vsel %vm888, %v907, %v911
        %v914 = vshrl.u32 %v841, 16
        %v916 = vrot.slane %v914, 4
        %v917 = vshll.u32 %v841, 16
        %v919 = vrot.slane %v917, 5
        %v920 = vor.u32 %v916, %v919
        %v921 = vrot.slane %v920, 4
        %v923 = vshll.u32 %v842, 16
        %v925 = vrot.slane %v923, 5
        %v926 = vsel %vm888, %v921, %v925
        %v927 = vshrl.u32 %v842, 16
        %v929 = vrot.slane %v927, 4
        %v930 = vor.u32 %v929, %v925
        %v931 = vrot.slane %v930, 4
        %v933 = vshll.u32 %v843, 16
        %v935 = vrot.slane %v933, 5
        %v936 = vsel %vm888, %v931, %v935
        %v938 = vshrl.u32 %v844, 16
        %v940 = vrot.slane %v938, 4
        %v941 = vshll.u32 %v844, 16
        %v943 = vrot.slane %v941, 5
        %v944 = vor.u32 %v940, %v943
        %v945 = vrot.slane %v944, 4
        %v947 = vshll.u32 %v845, 16
        %v949 = vrot.slane %v947, 5
        %v950 = vsel %vm888, %v945, %v949
        %v951 = vshrl.u32 %v845, 16
        %v953 = vrot.slane %v951, 4
        %v954 = vor.u32 %v953, %v949
        %v955 = vrot.slane %v954, 4
        %v957 = vshll.u32 %v846, 16
        %v959 = vrot.slane %v957, 5
        %v960 = vsel %vm888, %v955, %v959
        %v962 = vshrl.u32 %v847, 16
        %v964 = vrot.slane %v962, 4
        %v965 = vshll.u32 %v847, 16
        %v967 = vrot.slane %v965, 5
        %v968 = vor.u32 %v964, %v967
        %v969 = vrot.slane %v968, 4
        %v971 = vshll.u32 %v848, 16
        %v973 = vrot.slane %v971, 5
        %v974 = vsel %vm888, %v969, %v973
        %v975 = vshrl.u32 %v848, 16
        %v977 = vrot.slane %v975, 4
        %v978 = vor.u32 %v977, %v973
        %v979 = vrot.slane %v978, 4
        %v981 = vshll.u32 %v849, 16
        %v983 = vrot.slane %v981, 5
        %v984 = vsel %vm888, %v979, %v983
        %v986 = vshrl.u32 %v850, 16
        %v988 = vrot.slane %v986, 4
        %v989 = vshll.u32 %v850, 16
        %v991 = vrot.slane %v989, 5
        %v992 = vor.u32 %v988, %v991
        %v993 = vrot.slane %v992, 4
        %v995 = vshll.u32 %v851, 16
        %v997 = vrot.slane %v995, 5
        %v998 = vsel %vm888, %v993, %v997
        %v999 = vshrl.u32 %v851, 16
        %v1001 = vrot.slane %v999, 4
        %v1002 = vor.u32 %v1001, %v997
        %v1003 = vrot.slane %v1002, 4
        %v1005 = vshll.u32 %v852, 16
        %v1007 = vrot.slane %v1005, 5
        %v1008 = vsel %vm888, %v1003, %v1007
        %v1010 = vshrl.u32 %v853, 16
        %v1012 = vrot.slane %v1010, 4
        %v1013 = vshll.u32 %v853, 16
        %v1015 = vrot.slane %v1013, 5
        %v1016 = vor.u32 %v1012, %v1015
        %v1017 = vrot.slane %v1016, 4
        %v1019 = vshll.u32 %v854, 16
        %v1021 = vrot.slane %v1019, 5
        %v1022 = vsel %vm888, %v1017, %v1021
        %v1023 = vshrl.u32 %v854, 16
        %v1025 = vrot.slane %v1023, 4
        %v1026 = vor.u32 %v1025, %v1021
        %v1027 = vrot.slane %v1026, 4
        %v1029 = vshll.u32 %v855, 16
        %v1031 = vrot.slane %v1029, 5
        %v1032 = vsel %vm888, %v1027, %v1031
        %v1034 = vshrl.u32 %v856, 16
        %v1036 = vrot.slane %v1034, 4
        %v1037 = vshll.u32 %v856, 16
        %v1039 = vrot.slane %v1037, 5
        %v1040 = vor.u32 %v1036, %v1039
        %v1041 = vrot.slane %v1040, 4
        %v1043 = vshll.u32 %v857, 16
        %v1045 = vrot.slane %v1043, 5
        %v1046 = vsel %vm888, %v1041, %v1045
        %v1047 = vshrl.u32 %v857, 16
        %v1049 = vrot.slane %v1047, 4
        %v1050 = vor.u32 %v1049, %v1045
        %v1051 = vrot.slane %v1050, 4
        %v1053 = vshll.u32 %v858, 16
        %v1055 = vrot.slane %v1053, 5
        %v1056 = vsel %vm888, %v1051, %v1055
        %v1058 = vshrl.u32 %v859, 16
        %v1060 = vrot.slane %v1058, 4
        %v1061 = vshll.u32 %v859, 16
        %v1063 = vrot.slane %v1061, 5
        %v1064 = vor.u32 %v1060, %v1063
        %v1065 = vrot.slane %v1064, 4
        %v1067 = vshll.u32 %v860, 16
        %v1069 = vrot.slane %v1067, 5
        %v1070 = vsel %vm888, %v1065, %v1069
        %v1071 = vshrl.u32 %v860, 16
        %v1073 = vrot.slane %v1071, 4
        %v1074 = vor.u32 %v1073, %v1069
        %v1075 = vrot.slane %v1074, 4
        %v1077 = vshll.u32 %v861, 16
        %v1079 = vrot.slane %v1077, 5
        %v1080 = vsel %vm888, %v1075, %v1079
        %v1082 = vshrl.u32 %v862, 16
        %v1084 = vrot.slane %v1082, 4
        %v1085 = vshll.u32 %v862, 16
        %v1087 = vrot.slane %v1085, 5
        %v1088 = vor.u32 %v1084, %v1087
        %v1089 = vrot.slane %v1088, 4
        %v1091 = vshll.u32 %v863, 16
        %v1093 = vrot.slane %v1091, 5
        %v1094 = vsel %vm888, %v1089, %v1093
        %v1095 = vshrl.u32 %v863, 16
        %v1097 = vrot.slane %v1095, 4
        %v1098 = vor.u32 %v1097, %v1093
        %v1099 = vrot.slane %v1098, 4
        %v1101 = vshll.u32 %v864, 16
        %v1103 = vrot.slane %v1101, 5
        %v1104 = vsel %vm888, %v1099, %v1103
        %v1106 = vshrl.u32 %v865, 16
        %v1108 = vrot.slane %v1106, 4
        %v1109 = vshll.u32 %v865, 16
        %v1111 = vrot.slane %v1109, 5
        %v1112 = vor.u32 %v1108, %v1111
        %v1113 = vrot.slane %v1112, 4
        %v1115 = vshll.u32 %v866, 16
        %v1117 = vrot.slane %v1115, 5
        %v1118 = vsel %vm888, %v1113, %v1117
        %v1119 = vshrl.u32 %v866, 16
        %v1121 = vrot.slane %v1119, 4
        %v1122 = vor.u32 %v1121, %v1117
        %v1123 = vrot.slane %v1122, 4
        %v1125 = vshll.u32 %v867, 16
        %v1127 = vrot.slane %v1125, 5
        %v1128 = vsel %vm888, %v1123, %v1127
        %v1130 = vshrl.u32 %v868, 16
        %v1132 = vrot.slane %v1130, 4
        %v1133 = vshll.u32 %v868, 16
        %v1135 = vrot.slane %v1133, 5
        %v1136 = vor.u32 %v1132, %v1135
        %v1137 = vrot.slane %v1136, 4
        %v1139 = vshll.u32 %v869, 16
        %v1141 = vrot.slane %v1139, 5
        %v1142 = vsel %vm888, %v1137, %v1141
        %v1143 = vshrl.u32 %v869, 16
        %v1145 = vrot.slane %v1143, 4
        %v1146 = vor.u32 %v1145, %v1141
        %v1147 = vrot.slane %v1146, 4
        %v1149 = vshll.u32 %v870, 16
        %v1151 = vrot.slane %v1149, 5
        %v1152 = vsel %vm888, %v1147, %v1151
        %v1154 = vshrl.u32 %v871, 16
        %v1156 = vrot.slane %v1154, 4
        %v1157 = vshll.u32 %v871, 16
        %v1159 = vrot.slane %v1157, 5
        %v1160 = vor.u32 %v1156, %v1159
        %v1161 = vrot.slane %v1160, 4
        %v1163 = vshll.u32 %v872, 16
        %v1165 = vrot.slane %v1163, 5
        %v1166 = vsel %vm888, %v1161, %v1165
        %v1167 = vshrl.u32 %v872, 16
        %v1169 = vrot.slane %v1167, 4
        %v1170 = vor.u32 %v1169, %v1165
        %v1171 = vrot.slane %v1170, 4
        %v1173 = vshll.u32 %v873, 16
        %v1175 = vrot.slane %v1173, 5
        %v1176 = vsel %vm888, %v1171, %v1175
        %v1178 = vshrl.u32 %v874, 16
        %v1180 = vrot.slane %v1178, 4
        %v1181 = vshll.u32 %v874, 16
        %v1183 = vrot.slane %v1181, 5
        %v1184 = vor.u32 %v1180, %v1183
        %v1185 = vrot.slane %v1184, 4
        %v1187 = vshll.u32 %v875, 16
        %v1189 = vrot.slane %v1187, 5
        %v1190 = vsel %vm888, %v1185, %v1189
        %v1191 = vshrl.u32 %v875, 16
        %v1193 = vrot.slane %v1191, 4
        %v1194 = vor.u32 %v1193, %v1189
        %v1195 = vrot.slane %v1194, 4
        %v1197 = vshll.u32 %v876, 16
        %v1199 = vrot.slane %v1197, 5
        %v1200 = vsel %vm888, %v1195, %v1199
        %v1202 = vshrl.u32 %v877, 16
        %v1204 = vrot.slane %v1202, 4
        %v1205 = vshll.u32 %v877, 16
        %v1207 = vrot.slane %v1205, 5
        %v1208 = vor.u32 %v1204, %v1207
        %v1209 = vrot.slane %v1208, 4
        %v1211 = vshll.u32 %v878, 16
        %v1213 = vrot.slane %v1211, 5
        %v1214 = vsel %vm888, %v1209, %v1213
        %v1215 = vshrl.u32 %v878, 16
        %v1217 = vrot.slane %v1215, 4
        %v1218 = vor.u32 %v1217, %v1213
        %v1219 = vrot.slane %v1218, 4
        %v1221 = vshll.u32 %v879, 16
        %v1223 = vrot.slane %v1221, 5
        %v1224 = vsel %vm888, %v1219, %v1223
        %v1226 = vshrl.u32 %v880, 16
        %v1228 = vrot.slane %v1226, 4
        %v1229 = vshll.u32 %v880, 16
        %v1231 = vrot.slane %v1229, 5
        %v1232 = vor.u32 %v1228, %v1231
        %v1233 = vrot.slane %v1232, 4
        %v1235 = vshll.u32 %v881, 16
        %v1237 = vrot.slane %v1235, 5
        %v1238 = vsel %vm888, %v1233, %v1237
        %v1239 = vshrl.u32 %v881, 16
        %v1241 = vrot.slane %v1239, 4
        %v1242 = vor.u32 %v1241, %v1237
        %v1243 = vrot.slane %v1242, 4
        %v1245 = vshll.u32 %v882, 16
        %v1247 = vrot.slane %v1245, 5
        %v1248 = vsel %vm888, %v1243, %v1247
        %v1250 = vshrl.u32 %v883, 16
        %v1252 = vrot.slane %v1250, 4
        %v1253 = vshll.u32 %v883, 16
        %v1255 = vrot.slane %v1253, 5
        %v1256 = vor.u32 %v1252, %v1255
        %v1257 = vrot.slane %v1256, 4
        %v1259 = vshll.u32 %v884, 16
        %v1261 = vrot.slane %v1259, 5
        %v1262 = vsel %vm888, %v1257, %v1261
        %v1263 = vshrl.u32 %v884, 16
        %v1265 = vrot.slane %v1263, 4
        %v1266 = vor.u32 %v1265, %v1261
        %v1267 = vrot.slane %v1266, 4
        %v1269 = vshll.u32 %v885, 16
        %v1271 = vrot.slane %v1269, 5
        %v1272 = vsel %vm888, %v1267, %v1271
        %1273 = vrot.lane.b32.xlu0 %v902, 4
        %v1274 = vpop.permute.xlu0 %1273
        %1275 = vrot.lane.b32.xlu0 %v912, 4
        %v1276 = vpop.permute.xlu0 %1275
        %1277 = vrot.lane.b32.xlu0 %v926, 4
        %v1278 = vpop.permute.xlu0 %1277
        %1279 = vrot.lane.b32.xlu0 %v936, 4
        %v1280 = vpop.permute.xlu0 %1279
        %1281 = vrot.lane.b32.xlu0 %v950, 4
        %v1282 = vpop.permute.xlu0 %1281
        %1283 = vrot.lane.b32.xlu0 %v960, 4
        %v1284 = vpop.permute.xlu0 %1283
        %1285 = vrot.lane.b32.xlu0 %v974, 4
        %v1286 = vpop.permute.xlu0 %1285
        %1287 = vrot.lane.b32.xlu0 %v984, 4
        %v1288 = vpop.permute.xlu0 %1287
        %1289 = vrot.lane.b32.xlu0 %v998, 4
        %v1290 = vpop.permute.xlu0 %1289
        %1291 = vrot.lane.b32.xlu0 %v1008, 4
        %v1292 = vpop.permute.xlu0 %1291
        %1293 = vrot.lane.b32.xlu0 %v1022, 4
        %v1294 = vpop.permute.xlu0 %1293
        %1295 = vrot.lane.b32.xlu0 %v1032, 4
        %v1296 = vpop.permute.xlu0 %1295
        %1297 = vrot.lane.b32.xlu0 %v1046, 4
        %v1298 = vpop.permute.xlu0 %1297
        %1299 = vrot.lane.b32.xlu0 %v1056, 4
        %v1300 = vpop.permute.xlu0 %1299
        %1301 = vrot.lane.b32.xlu0 %v1070, 4
        %v1302 = vpop.permute.xlu0 %1301
        %1303 = vrot.lane.b32.xlu0 %v1080, 4
        %v1304 = vpop.permute.xlu0 %1303
        %1305 = vrot.lane.b32.xlu0 %v1094, 4
        %v1306 = vpop.permute.xlu0 %1305
        %1307 = vrot.lane.b32.xlu0 %v1104, 4
        %v1308 = vpop.permute.xlu0 %1307
        %1309 = vrot.lane.b32.xlu0 %v1118, 4
        %v1310 = vpop.permute.xlu0 %1309
        %1311 = vrot.lane.b32.xlu0 %v1128, 4
        %v1312 = vpop.permute.xlu0 %1311
        %1313 = vrot.lane.b32.xlu0 %v1142, 4
        %v1314 = vpop.permute.xlu0 %1313
        %1315 = vrot.lane.b32.xlu0 %v1152, 4
        %v1316 = vpop.permute.xlu0 %1315
        %1317 = vrot.lane.b32.xlu0 %v1166, 4
        %v1318 = vpop.permute.xlu0 %1317
        %1319 = vrot.lane.b32.xlu0 %v1176, 4
        %v1320 = vpop.permute.xlu0 %1319
        %1321 = vrot.lane.b32.xlu0 %v1190, 4
        %v1322 = vpop.permute.xlu0 %1321
        %1323 = vrot.lane.b32.xlu0 %v1200, 4
        %v1324 = vpop.permute.xlu0 %1323
        %1325 = vrot.lane.b32.xlu0 %v1214, 4
        %v1326 = vpop.permute.xlu0 %1325
        %1327 = vrot.lane.b32.xlu0 %v1224, 4
        %v1328 = vpop.permute.xlu0 %1327
        %1329 = vrot.lane.b32.xlu0 %v1238, 4
        %v1330 = vpop.permute.xlu0 %1329
        %1331 = vrot.lane.b32.xlu0 %v1248, 4
        %v1332 = vpop.permute.xlu0 %1331
        %1333 = vrot.lane.b32.xlu0 %v1262, 4
        %v1334 = vpop.permute.xlu0 %1333
        %1335 = vrot.lane.b32.xlu0 %v1272, 4
        %v1336 = vpop.permute.xlu0 %1335
        %vm1369 = vcmask 60448
        %1370 = vst.msk [vmem:[#allocation3] sm:$0xf] %vm1369, %v1274
        %1371 = vst.msk [vmem:[#allocation3 + $0x4] sm:$0xf] %vm1369, %v1276
        %1372 = vst.msk [vmem:[#allocation3 + $0x8] sm:$0xf] %vm1369, %v1278
        %1373 = vst.msk [vmem:[#allocation3 + $0xc] sm:$0xf] %vm1369, %v1280
        %1374 = vst.msk [vmem:[#allocation3 + $0x10] sm:$0xf] %vm1369, %v1282
        %1375 = vst.msk [vmem:[#allocation3 + $0x14] sm:$0xf] %vm1369, %v1284
        %1376 = vst.msk [vmem:[#allocation3 + $0x18] sm:$0xf] %vm1369, %v1286
        %1377 = vst.msk [vmem:[#allocation3 + $0x1c] sm:$0xf] %vm1369, %v1288
        %1378 = vst.msk [vmem:[#allocation3 + $0x20] sm:$0xf] %vm1369, %v1290
        %1379 = vst.msk [vmem:[#allocation3 + $0x24] sm:$0xf] %vm1369, %v1292
        %1380 = vst.msk [vmem:[#allocation3 + $0x28] sm:$0xf] %vm1369, %v1294
        %1381 = vst.msk [vmem:[#allocation3 + $0x2c] sm:$0xf] %vm1369, %v1296
        %1382 = vst.msk [vmem:[#allocation3 + $0x30] sm:$0xf] %vm1369, %v1298
        %1383 = vst.msk [vmem:[#allocation3 + $0x34] sm:$0xf] %vm1369, %v1300
        %1384 = vst.msk [vmem:[#allocation3 + $0x38] sm:$0xf] %vm1369, %v1302
        %1385 = vst.msk [vmem:[#allocation3 + $0x3c] sm:$0xf] %vm1369, %v1304
        %1386 = vst.msk [vmem:[#allocation3 + $0x40] sm:$0xf] %vm1369, %v1306
        %1387 = vst.msk [vmem:[#allocation3 + $0x44] sm:$0xf] %vm1369, %v1308
        %1388 = vst.msk [vmem:[#allocation3 + $0x48] sm:$0xf] %vm1369, %v1310
        %1389 = vst.msk [vmem:[#allocation3 + $0x4c] sm:$0xf] %vm1369, %v1312
        %1390 = vst.msk [vmem:[#allocation3 + $0x50] sm:$0xf] %vm1369, %v1314
        %1391 = vst.msk [vmem:[#allocation3 + $0x54] sm:$0xf] %vm1369, %v1316
        %1392 = vst.msk [vmem:[#allocation3 + $0x58] sm:$0xf] %vm1369, %v1318
        %1393 = vst.msk [vmem:[#allocation3 + $0x5c] sm:$0xf] %vm1369, %v1320
        %1394 = vst.msk [vmem:[#allocation3 + $0x60] sm:$0xf] %vm1369, %v1322
        %1395 = vst.msk [vmem:[#allocation3 + $0x64] sm:$0xf] %vm1369, %v1324
        %1396 = vst.msk [vmem:[#allocation3 + $0x68] sm:$0xf] %vm1369, %v1326
        %1397 = vst.msk [vmem:[#allocation3 + $0x6c] sm:$0xf] %vm1369, %v1328
        %1398 = vst.msk [vmem:[#allocation3 + $0x70] sm:$0xf] %vm1369, %v1330
        %1399 = vst.msk [vmem:[#allocation3 + $0x74] sm:$0xf] %vm1369, %v1332
        %1400 = vst.msk [vmem:[#allocation3 + $0x78] sm:$0xf] %vm1369, %v1334
        %1401 = vst.msk [vmem:[#allocation3 + $0x7c] sm:$0xf] %vm1369, %v1336
        %v1402 = vld [vmem:[#allocation2] sm:$0xe]
        %v1403 = vld [vmem:[#allocation2 + $0x4] sm:$0xf]
        %v1404 = vld [vmem:[#allocation2 + $0x8] sm:$0x1]
        %v1405 = vld [vmem:[#allocation2 + $0xc] sm:$0xe]
        %v1406 = vld [vmem:[#allocation2 + $0x10] sm:$0xf]
        %v1407 = vld [vmem:[#allocation2 + $0x14] sm:$0x1]
        %v1408 = vld [vmem:[#allocation2 + $0x18] sm:$0xe]
        %v1409 = vld [vmem:[#allocation2 + $0x1c] sm:$0xf]
        %v1410 = vld [vmem:[#allocation2 + $0x20] sm:$0x1]
        %v1411 = vld [vmem:[#allocation2 + $0x24] sm:$0xe]
        %v1412 = vld [vmem:[#allocation2 + $0x28] sm:$0xf]
        %v1413 = vld [vmem:[#allocation2 + $0x2c] sm:$0x1]
        %v1414 = vld [vmem:[#allocation2 + $0x30] sm:$0xe]
        %v1415 = vld [vmem:[#allocation2 + $0x34] sm:$0xf]
        %v1416 = vld [vmem:[#allocation2 + $0x38] sm:$0x1]
        %v1417 = vld [vmem:[#allocation2 + $0x3c] sm:$0xe]
        %v1418 = vld [vmem:[#allocation2 + $0x40] sm:$0xf]
        %v1419 = vld [vmem:[#allocation2 + $0x44] sm:$0x1]
        %v1420 = vld [vmem:[#allocation2 + $0x48] sm:$0xe]
        %v1421 = vld [vmem:[#allocation2 + $0x4c] sm:$0xf]
        %v1422 = vld [vmem:[#allocation2 + $0x50] sm:$0x1]
        %v1423 = vld [vmem:[#allocation2 + $0x54] sm:$0xe]
        %v1424 = vld [vmem:[#allocation2 + $0x58] sm:$0xf]
        %v1425 = vld [vmem:[#allocation2 + $0x5c] sm:$0x1]
        %v1426 = vld [vmem:[#allocation2 + $0x60] sm:$0xe]
        %v1427 = vld [vmem:[#allocation2 + $0x64] sm:$0xf]
        %v1428 = vld [vmem:[#allocation2 + $0x68] sm:$0x1]
        %v1429 = vld [vmem:[#allocation2 + $0x6c] sm:$0xe]
        %v1430 = vld [vmem:[#allocation2 + $0x70] sm:$0xf]
        %v1431 = vld [vmem:[#allocation2 + $0x74] sm:$0x1]
        %v1432 = vld [vmem:[#allocation2 + $0x78] sm:$0xe]
        %v1433 = vld [vmem:[#allocation2 + $0x7c] sm:$0xf]
        %v1434 = vld [vmem:[#allocation2 + $0x80] sm:$0x1]
        %v1435 = vld [vmem:[#allocation2 + $0x84] sm:$0xe]
        %v1436 = vld [vmem:[#allocation2 + $0x88] sm:$0xf]
        %v1437 = vld [vmem:[#allocation2 + $0x8c] sm:$0x1]
        %v1438 = vld [vmem:[#allocation2 + $0x90] sm:$0xe]
        %v1439 = vld [vmem:[#allocation2 + $0x94] sm:$0xf]
        %v1440 = vld [vmem:[#allocation2 + $0x98] sm:$0x1]
        %v1441 = vld [vmem:[#allocation2 + $0x9c] sm:$0xe]
        %v1442 = vld [vmem:[#allocation2 + $0xa0] sm:$0xf]
        %v1443 = vld [vmem:[#allocation2 + $0xa4] sm:$0x1]
        %v1444 = vld [vmem:[#allocation2 + $0xa8] sm:$0xe]
        %v1445 = vld [vmem:[#allocation2 + $0xac] sm:$0xf]
        %v1446 = vld [vmem:[#allocation2 + $0xb0] sm:$0x1]
        %v1447 = vld [vmem:[#allocation2 + $0xb4] sm:$0xe]
        %v1448 = vld [vmem:[#allocation2 + $0xb8] sm:$0xf]
        %v1449 = vld [vmem:[#allocation2 + $0xbc] sm:$0x1]
        %vm1498 = vcmask 1042432
        %vm1499 = vcmask 1046532
        %vm1500 = vmor %vm1498, %vm1499
        %v1501 = vrot.slane %v1402, 5
        %v1502 = vrot.slane %v1501, 4
        %v1503 = vrot.slane %v1403, 5
        %v1504 = vsel %vm1500, %v1502, %v1503
        %v1505 = vrot.slane %v1503, 4
        %v1506 = vrot.slane %v1404, 5
        %v1507 = vsel %vm1500, %v1505, %v1506
        %v1508 = vrot.slane %v1405, 5
        %v1509 = vrot.slane %v1508, 4
        %v1510 = vrot.slane %v1406, 5
        %v1511 = vsel %vm1500, %v1509, %v1510
        %v1512 = vrot.slane %v1510, 4
        %v1513 = vrot.slane %v1407, 5
        %v1514 = vsel %vm1500, %v1512, %v1513
        %v1515 = vrot.slane %v1408, 5
        %v1516 = vrot.slane %v1515, 4
        %v1517 = vrot.slane %v1409, 5
        %v1518 = vsel %vm1500, %v1516, %v1517
        %v1519 = vrot.slane %v1517, 4
        %v1520 = vrot.slane %v1410, 5
        %v1521 = vsel %vm1500, %v1519, %v1520
        %v1522 = vrot.slane %v1411, 5
        %v1523 = vrot.slane %v1522, 4
        %v1524 = vrot.slane %v1412, 5
        %v1525 = vsel %vm1500, %v1523, %v1524
        %v1526 = vrot.slane %v1524, 4
        %v1527 = vrot.slane %v1413, 5
        %v1528 = vsel %vm1500, %v1526, %v1527
        %v1529 = vrot.slane %v1414, 5
        %v1530 = vrot.slane %v1529, 4
        %v1531 = vrot.slane %v1415, 5
        %v1532 = vsel %vm1500, %v1530, %v1531
        %v1533 = vrot.slane %v1531, 4
        %v1534 = vrot.slane %v1416, 5
        %v1535 = vsel %vm1500, %v1533, %v1534
        %v1536 = vrot.slane %v1417, 5
        %v1537 = vrot.slane %v1536, 4
        %v1538 = vrot.slane %v1418, 5
        %v1539 = vsel %vm1500, %v1537, %v1538
        %v1540 = vrot.slane %v1538, 4
        %v1541 = vrot.slane %v1419, 5
        %v1542 = vsel %vm1500, %v1540, %v1541
        %v1543 = vrot.slane %v1420, 5
        %v1544 = vrot.slane %v1543, 4
        %v1545 = vrot.slane %v1421, 5
        %v1546 = vsel %vm1500, %v1544, %v1545
        %v1547 = vrot.slane %v1545, 4
        %v1548 = vrot.slane %v1422, 5
        %v1549 = vsel %vm1500, %v1547, %v1548
        %v1550 = vrot.slane %v1423, 5
        %v1551 = vrot.slane %v1550, 4
        %v1552 = vrot.slane %v1424, 5
        %v1553 = vsel %vm1500, %v1551, %v1552
        %v1554 = vrot.slane %v1552, 4
        %v1555 = vrot.slane %v1425, 5
        %v1556 = vsel %vm1500, %v1554, %v1555
        %v1557 = vrot.slane %v1426, 5
        %v1558 = vrot.slane %v1557, 4
        %v1559 = vrot.slane %v1427, 5
        %v1560 = vsel %vm1500, %v1558, %v1559
        %v1561 = vrot.slane %v1559, 4
        %v1562 = vrot.slane %v1428, 5
        %v1563 = vsel %vm1500, %v1561, %v1562
        %v1564 = vrot.slane %v1429, 5
        %v1565 = vrot.slane %v1564, 4
        %v1566 = vrot.slane %v1430, 5
        %v1567 = vsel %vm1500, %v1565, %v1566
        %v1568 = vrot.slane %v1566, 4
        %v1569 = vrot.slane %v1431, 5
        %v1570 = vsel %vm1500, %v1568, %v1569
        %v1571 = vrot.slane %v1432, 5
        %v1572 = vrot.slane %v1571, 4
        %v1573 = vrot.slane %v1433, 5
        %v1574 = vsel %vm1500, %v1572, %v1573
        %v1575 = vrot.slane %v1573, 4
        %v1576 = vrot.slane %v1434, 5
        %v1577 = vsel %vm1500, %v1575, %v1576
        %v1578 = vrot.slane %v1435, 5
        %v1579 = vrot.slane %v1578, 4
        %v1580 = vrot.slane %v1436, 5
        %v1581 = vsel %vm1500, %v1579, %v1580
        %v1582 = vrot.slane %v1580, 4
        %v1583 = vrot.slane %v1437, 5
        %v1584 = vsel %vm1500, %v1582, %v1583
        %v1585 = vrot.slane %v1438, 5
        %v1586 = vrot.slane %v1585, 4
        %v1587 = vrot.slane %v1439, 5
        %v1588 = vsel %vm1500, %v1586, %v1587
        %v1589 = vrot.slane %v1587, 4
        %v1590 = vrot.slane %v1440, 5
        %v1591 = vsel %vm1500, %v1589, %v1590
        %v1592 = vrot.slane %v1441, 5
        %v1593 = vrot.slane %v1592, 4
        %v1594 = vrot.slane %v1442, 5
        %v1595 = vsel %vm1500, %v1593, %v1594
        %v1596 = vrot.slane %v1594, 4
        %v1597 = vrot.slane %v1443, 5
        %v1598 = vsel %vm1500, %v1596, %v1597
        %v1599 = vrot.slane %v1444, 5
        %v1600 = vrot.slane %v1599, 4
        %v1601 = vrot.slane %v1445, 5
        %v1602 = vsel %vm1500, %v1600, %v1601
        %v1603 = vrot.slane %v1601, 4
        %v1604 = vrot.slane %v1446, 5
        %v1605 = vsel %vm1500, %v1603, %v1604
        %v1606 = vrot.slane %v1447, 5
        %v1607 = vrot.slane %v1606, 4
        %v1608 = vrot.slane %v1448, 5
        %v1609 = vsel %vm1500, %v1607, %v1608
        %v1610 = vrot.slane %v1608, 4
        %v1611 = vrot.slane %v1449, 5
        %v1612 = vsel %vm1500, %v1610, %v1611
        %1613 = vrot.lane.b32.xlu0 %v1504, 8
        %v1614 = vpop.permute.xlu0 %1613
        %1615 = vrot.lane.b32.xlu0 %v1507, 8
        %v1616 = vpop.permute.xlu0 %1615
        %1617 = vrot.lane.b32.xlu0 %v1511, 8
        %v1618 = vpop.permute.xlu0 %1617
        %1619 = vrot.lane.b32.xlu0 %v1514, 8
        %v1620 = vpop.permute.xlu0 %1619
        %1621 = vrot.lane.b32.xlu0 %v1518, 8
        %v1622 = vpop.permute.xlu0 %1621
        %1623 = vrot.lane.b32.xlu0 %v1521, 8
        %v1624 = vpop.permute.xlu0 %1623
        %1625 = vrot.lane.b32.xlu0 %v1525, 8
        %v1626 = vpop.permute.xlu0 %1625
        %1627 = vrot.lane.b32.xlu0 %v1528, 8
        %v1628 = vpop.permute.xlu0 %1627
        %1629 = vrot.lane.b32.xlu0 %v1532, 8
        %v1630 = vpop.permute.xlu0 %1629
        %1631 = vrot.lane.b32.xlu0 %v1535, 8
        %v1632 = vpop.permute.xlu0 %1631
        %1633 = vrot.lane.b32.xlu0 %v1539, 8
        %v1634 = vpop.permute.xlu0 %1633
        %1635 = vrot.lane.b32.xlu0 %v1542, 8
        %v1636 = vpop.permute.xlu0 %1635
        %1637 = vrot.lane.b32.xlu0 %v1546, 8
        %v1638 = vpop.permute.xlu0 %1637
        %1639 = vrot.lane.b32.xlu0 %v1549, 8
        %v1640 = vpop.permute.xlu0 %1639
        %1641 = vrot.lane.b32.xlu0 %v1553, 8
        %v1642 = vpop.permute.xlu0 %1641
        %1643 = vrot.lane.b32.xlu0 %v1556, 8
        %v1644 = vpop.permute.xlu0 %1643
        %1645 = vrot.lane.b32.xlu0 %v1560, 8
        %v1646 = vpop.permute.xlu0 %1645
        %1647 = vrot.lane.b32.xlu0 %v1563, 8
        %v1648 = vpop.permute.xlu0 %1647
        %1649 = vrot.lane.b32.xlu0 %v1567, 8
        %v1650 = vpop.permute.xlu0 %1649
        %1651 = vrot.lane.b32.xlu0 %v1570, 8
        %v1652 = vpop.permute.xlu0 %1651
        %1653 = vrot.lane.b32.xlu0 %v1574, 8
        %v1654 = vpop.permute.xlu0 %1653
        %1655 = vrot.lane.b32.xlu0 %v1577, 8
        %v1656 = vpop.permute.xlu0 %1655
        %1657 = vrot.lane.b32.xlu0 %v1581, 8
        %v1658 = vpop.permute.xlu0 %1657
        %1659 = vrot.lane.b32.xlu0 %v1584, 8
        %v1660 = vpop.permute.xlu0 %1659
        %1661 = vrot.lane.b32.xlu0 %v1588, 8
        %v1662 = vpop.permute.xlu0 %1661
        %1663 = vrot.lane.b32.xlu0 %v1591, 8
        %v1664 = vpop.permute.xlu0 %1663
        %1665 = vrot.lane.b32.xlu0 %v1595, 8
        %v1666 = vpop.permute.xlu0 %1665
        %1667 = vrot.lane.b32.xlu0 %v1598, 8
        %v1668 = vpop.permute.xlu0 %1667
        %1669 = vrot.lane.b32.xlu0 %v1602, 8
        %v1670 = vpop.permute.xlu0 %1669
        %1671 = vrot.lane.b32.xlu0 %v1605, 8
        %v1672 = vpop.permute.xlu0 %1671
        %1673 = vrot.lane.b32.xlu0 %v1609, 8
        %v1674 = vpop.permute.xlu0 %1673
        %1675 = vrot.lane.b32.xlu0 %v1612, 8
        %v1676 = vpop.permute.xlu0 %1675
        %vm1709 = vcmask 93248
        %1710 = vst.msk [vmem:[#allocation3] sm:$0xf] %vm1709, %v1614
        %1711 = vst.msk [vmem:[#allocation3 + $0x4] sm:$0xf] %vm1709, %v1616
        %1712 = vst.msk [vmem:[#allocation3 + $0x8] sm:$0xf] %vm1709, %v1618
        %1713 = vst.msk [vmem:[#allocation3 + $0xc] sm:$0xf] %vm1709, %v1620
        %1714 = vst.msk [vmem:[#allocation3 + $0x10] sm:$0xf] %vm1709, %v1622
        %1715 = vst.msk [vmem:[#allocation3 + $0x14] sm:$0xf] %vm1709, %v1624
        %1716 = vst.msk [vmem:[#allocation3 + $0x18] sm:$0xf] %vm1709, %v1626
        %1717 = vst.msk [vmem:[#allocation3 + $0x1c] sm:$0xf] %vm1709, %v1628
        %1718 = vst.msk [vmem:[#allocation3 + $0x20] sm:$0xf] %vm1709, %v1630
        %1719 = vst.msk [vmem:[#allocation3 + $0x24] sm:$0xf] %vm1709, %v1632
        %1720 = vst.msk [vmem:[#allocation3 + $0x28] sm:$0xf] %vm1709, %v1634
        %1721 = vst.msk [vmem:[#allocation3 + $0x2c] sm:$0xf] %vm1709, %v1636
        %1722 = vst.msk [vmem:[#allocation3 + $0x30] sm:$0xf] %vm1709, %v1638
        %1723 = vst.msk [vmem:[#allocation3 + $0x34] sm:$0xf] %vm1709, %v1640
        %1724 = vst.msk [vmem:[#allocation3 + $0x38] sm:$0xf] %vm1709, %v1642
        %1725 = vst.msk [vmem:[#allocation3 + $0x3c] sm:$0xf] %vm1709, %v1644
        %1726 = vst.msk [vmem:[#allocation3 + $0x40] sm:$0xf] %vm1709, %v1646
        %1727 = vst.msk [vmem:[#allocation3 + $0x44] sm:$0xf] %vm1709, %v1648
        %1728 = vst.msk [vmem:[#allocation3 + $0x48] sm:$0xf] %vm1709, %v1650
        %1729 = vst.msk [vmem:[#allocation3 + $0x4c] sm:$0xf] %vm1709, %v1652
        %1730 = vst.msk [vmem:[#allocation3 + $0x50] sm:$0xf] %vm1709, %v1654
        %1731 = vst.msk [vmem:[#allocation3 + $0x54] sm:$0xf] %vm1709, %v1656
        %1732 = vst.msk [vmem:[#allocation3 + $0x58] sm:$0xf] %vm1709, %v1658
        %1733 = vst.msk [vmem:[#allocation3 + $0x5c] sm:$0xf] %vm1709, %v1660
        %1734 = vst.msk [vmem:[#allocation3 + $0x60] sm:$0xf] %vm1709, %v1662
        %1735 = vst.msk [vmem:[#allocation3 + $0x64] sm:$0xf] %vm1709, %v1664
        %1736 = vst.msk [vmem:[#allocation3 + $0x68] sm:$0xf] %vm1709, %v1666
        %1737 = vst.msk [vmem:[#allocation3 + $0x6c] sm:$0xf] %vm1709, %v1668
        %1738 = vst.msk [vmem:[#allocation3 + $0x70] sm:$0xf] %vm1709, %v1670
        %1739 = vst.msk [vmem:[#allocation3 + $0x74] sm:$0xf] %vm1709, %v1672
        %1740 = vst.msk [vmem:[#allocation3 + $0x78] sm:$0xf] %vm1709, %v1674
        %1741 = vst.msk [vmem:[#allocation3 + $0x7c] sm:$0xf] %vm1709, %v1676
        %v1742 = vld [vmem:[%s659] sm:$0xf]
        %v1743 = vld [vmem:[%s659 + $0x4] sm:$0xf]
        %v1744 = vld [vmem:[%s659 + $0xc] sm:$0xf]
        %v1745 = vld [vmem:[%s659 + $0x10] sm:$0xf]
        %v1746 = vld [vmem:[%s659 + $0x18] sm:$0xf]
        %v1747 = vld [vmem:[%s659 + $0x1c] sm:$0xf]
        %v1748 = vld [vmem:[%s659 + $0x24] sm:$0xf]
        %v1749 = vld [vmem:[%s659 + $0x28] sm:$0xf]
        %v1750 = vld [vmem:[%s659 + $0x30] sm:$0xf]
        %v1751 = vld [vmem:[%s659 + $0x34] sm:$0xf]
        %v1752 = vld [vmem:[%s659 + $0x3c] sm:$0xf]
        %v1753 = vld [vmem:[%s659 + $0x40] sm:$0xf]
        %v1754 = vld [vmem:[%s659 + $0x48] sm:$0xf]
        %v1755 = vld [vmem:[%s659 + $0x4c] sm:$0xf]
        %v1756 = vld [vmem:[%s659 + $0x54] sm:$0xf]
        %v1757 = vld [vmem:[%s659 + $0x58] sm:$0xf]
        %v1758 = vld [vmem:[%s659 + $0x60] sm:$0xf]
        %v1759 = vld [vmem:[%s659 + $0x64] sm:$0xf]
        %v1760 = vld [vmem:[%s659 + $0x6c] sm:$0xf]
        %v1761 = vld [vmem:[%s659 + $0x70] sm:$0xf]
        %v1762 = vld [vmem:[%s659 + $0x78] sm:$0xf]
        %v1763 = vld [vmem:[%s659 + $0x7c] sm:$0xf]
        %v1764 = vld [vmem:[%s659 + $0x84] sm:$0xf]
        %v1765 = vld [vmem:[%s659 + $0x88] sm:$0xf]
        %v1766 = vld [vmem:[%s659 + $0x90] sm:$0xf]
        %v1767 = vld [vmem:[%s659 + $0x94] sm:$0xf]
        %v1768 = vld [vmem:[%s659 + $0x9c] sm:$0xf]
        %v1769 = vld [vmem:[%s659 + $0xa0] sm:$0xf]
        %v1770 = vld [vmem:[%s659 + $0xa8] sm:$0xf]
        %v1771 = vld [vmem:[%s659 + $0xac] sm:$0xf]
        %v1772 = vld [vmem:[%s659 + $0xb4] sm:$0xf]
        %v1773 = vld [vmem:[%s659 + $0xb8] sm:$0xf]
        %1806 = vrot.lane.b32.xlu0 %v1742, 12
        %v1807 = vpop.permute.xlu0 %1806
        %1808 = vrot.lane.b32.xlu0 %v1743, 12
        %v1809 = vpop.permute.xlu0 %1808
        %1810 = vrot.lane.b32.xlu0 %v1744, 12
        %v1811 = vpop.permute.xlu0 %1810
        %1812 = vrot.lane.b32.xlu0 %v1745, 12
        %v1813 = vpop.permute.xlu0 %1812
        %1814 = vrot.lane.b32.xlu0 %v1746, 12
        %v1815 = vpop.permute.xlu0 %1814
        %1816 = vrot.lane.b32.xlu0 %v1747, 12
        %v1817 = vpop.permute.xlu0 %1816
        %1818 = vrot.lane.b32.xlu0 %v1748, 12
        %v1819 = vpop.permute.xlu0 %1818
        %1820 = vrot.lane.b32.xlu0 %v1749, 12
        %v1821 = vpop.permute.xlu0 %1820
        %1822 = vrot.lane.b32.xlu0 %v1750, 12
        %v1823 = vpop.permute.xlu0 %1822
        %1824 = vrot.lane.b32.xlu0 %v1751, 12
        %v1825 = vpop.permute.xlu0 %1824
        %1826 = vrot.lane.b32.xlu0 %v1752, 12
        %v1827 = vpop.permute.xlu0 %1826
        %1828 = vrot.lane.b32.xlu0 %v1753, 12
        %v1829 = vpop.permute.xlu0 %1828
        %1830 = vrot.lane.b32.xlu0 %v1754, 12
        %v1831 = vpop.permute.xlu0 %1830
        %1832 = vrot.lane.b32.xlu0 %v1755, 12
        %v1833 = vpop.permute.xlu0 %1832
        %1834 = vrot.lane.b32.xlu0 %v1756, 12
        %v1835 = vpop.permute.xlu0 %1834
        %1836 = vrot.lane.b32.xlu0 %v1757, 12
        %v1837 = vpop.permute.xlu0 %1836
        %1838 = vrot.lane.b32.xlu0 %v1758, 12
        %v1839 = vpop.permute.xlu0 %1838
        %1840 = vrot.lane.b32.xlu0 %v1759, 12
        %v1841 = vpop.permute.xlu0 %1840
        %1842 = vrot.lane.b32.xlu0 %v1760, 12
        %v1843 = vpop.permute.xlu0 %1842
        %1844 = vrot.lane.b32.xlu0 %v1761, 12
        %v1845 = vpop.permute.xlu0 %1844
        %1846 = vrot.lane.b32.xlu0 %v1762, 12
        %v1847 = vpop.permute.xlu0 %1846
        %1848 = vrot.lane.b32.xlu0 %v1763, 12
        %v1849 = vpop.permute.xlu0 %1848
        %1850 = vrot.lane.b32.xlu0 %v1764, 12
        %v1851 = vpop.permute.xlu0 %1850
        %1852 = vrot.lane.b32.xlu0 %v1765, 12
        %v1853 = vpop.permute.xlu0 %1852
        %1854 = vrot.lane.b32.xlu0 %v1766, 12
        %v1855 = vpop.permute.xlu0 %1854
        %1856 = vrot.lane.b32.xlu0 %v1767, 12
        %v1857 = vpop.permute.xlu0 %1856
        %1858 = vrot.lane.b32.xlu0 %v1768, 12
        %v1859 = vpop.permute.xlu0 %1858
        %1860 = vrot.lane.b32.xlu0 %v1769, 12
        %v1861 = vpop.permute.xlu0 %1860
        %1862 = vrot.lane.b32.xlu0 %v1770, 12
        %v1863 = vpop.permute.xlu0 %1862
        %1864 = vrot.lane.b32.xlu0 %v1771, 12
        %v1865 = vpop.permute.xlu0 %1864
        %1866 = vrot.lane.b32.xlu0 %v1772, 12
        %v1867 = vpop.permute.xlu0 %1866
        %1868 = vrot.lane.b32.xlu0 %v1773, 12
        %v1869 = vpop.permute.xlu0 %1868
        %vm1902 = vcmask 126048
        %1903 = vst.msk [vmem:[#allocation3] sm:$0xf] %vm1902, %v1807
        %1904 = vst.msk [vmem:[#allocation3 + $0x4] sm:$0xf] %vm1902, %v1809
        %1905 = vst.msk [vmem:[#allocation3 + $0x8] sm:$0xf] %vm1902, %v1811
        %1906 = vst.msk [vmem:[#allocation3 + $0xc] sm:$0xf] %vm1902, %v1813
        %1907 = vst.msk [vmem:[#allocation3 + $0x10] sm:$0xf] %vm1902, %v1815
        %1908 = vst.msk [vmem:[#allocation3 + $0x14] sm:$0xf] %vm1902, %v1817
        %1909 = vst.msk [vmem:[#allocation3 + $0x18] sm:$0xf] %vm1902, %v1819
        %1910 = vst.msk [vmem:[#allocation3 + $0x1c] sm:$0xf] %vm1902, %v1821
        %1911 = vst.msk [vmem:[#allocation3 + $0x20] sm:$0xf] %vm1902, %v1823
        %1912 = vst.msk [vmem:[#allocation3 + $0x24] sm:$0xf] %vm1902, %v1825
        %1913 = vst.msk [vmem:[#allocation3 + $0x28] sm:$0xf] %vm1902, %v1827
        %1914 = vst.msk [vmem:[#allocation3 + $0x2c] sm:$0xf] %vm1902, %v1829
        %1915 = vst.msk [vmem:[#allocation3 + $0x30] sm:$0xf] %vm1902, %v1831
        %1916 = vst.msk [vmem:[#allocation3 + $0x34] sm:$0xf] %vm1902, %v1833
        %1917 = vst.msk [vmem:[#allocation3 + $0x38] sm:$0xf] %vm1902, %v1835
        %1918 = vst.msk [vmem:[#allocation3 + $0x3c] sm:$0xf] %vm1902, %v1837
        %1919 = vst.msk [vmem:[#allocation3 + $0x40] sm:$0xf] %vm1902, %v1839
        %1920 = vst.msk [vmem:[#allocation3 + $0x44] sm:$0xf] %vm1902, %v1841
        %1921 = vst.msk [vmem:[#allocation3 + $0x48] sm:$0xf] %vm1902, %v1843
        %1922 = vst.msk [vmem:[#allocation3 + $0x4c] sm:$0xf] %vm1902, %v1845
        %1923 = vst.msk [vmem:[#allocation3 + $0x50] sm:$0xf] %vm1902, %v1847
        %1924 = vst.msk [vmem:[#allocation3 + $0x54] sm:$0xf] %vm1902, %v1849
        %1925 = vst.msk [vmem:[#allocation3 + $0x58] sm:$0xf] %vm1902, %v1851
        %1926 = vst.msk [vmem:[#allocation3 + $0x5c] sm:$0xf] %vm1902, %v1853
        %1927 = vst.msk [vmem:[#allocation3 + $0x60] sm:$0xf] %vm1902, %v1855
        %1928 = vst.msk [vmem:[#allocation3 + $0x64] sm:$0xf] %vm1902, %v1857
        %1929 = vst.msk [vmem:[#allocation3 + $0x68] sm:$0xf] %vm1902, %v1859
        %1930 = vst.msk [vmem:[#allocation3 + $0x6c] sm:$0xf] %vm1902, %v1861
        %1931 = vst.msk [vmem:[#allocation3 + $0x70] sm:$0xf] %vm1902, %v1863
        %1932 = vst.msk [vmem:[#allocation3 + $0x74] sm:$0xf] %vm1902, %v1865
        %1933 = vst.msk [vmem:[#allocation3 + $0x78] sm:$0xf] %vm1902, %v1867
        %1934 = vst.msk [vmem:[#allocation3 + $0x7c] sm:$0xf] %vm1902, %v1869
        %v1935 = vld [vmem:[%s659] sm:$0xf]
        %v1936 = vld [vmem:[%s659 + $0x4] sm:$0xf]
        %v1937 = vld [vmem:[%s659 + $0x8] sm:$0x1]
        %v1938 = vld [vmem:[%s659 + $0xc] sm:$0xf]
        %v1939 = vld [vmem:[%s659 + $0x10] sm:$0xf]
        %v1940 = vld [vmem:[%s659 + $0x14] sm:$0x1]
        %v1941 = vld [vmem:[%s659 + $0x18] sm:$0xf]
        %v1942 = vld [vmem:[%s659 + $0x1c] sm:$0xf]
        %v1943 = vld [vmem:[%s659 + $0x20] sm:$0x1]
        %v1944 = vld [vmem:[%s659 + $0x24] sm:$0xf]
        %v1945 = vld [vmem:[%s659 + $0x28] sm:$0xf]
        %v1946 = vld [vmem:[%s659 + $0x2c] sm:$0x1]
        %v1947 = vld [vmem:[%s659 + $0x30] sm:$0xf]
        %v1948 = vld [vmem:[%s659 + $0x34] sm:$0xf]
        %v1949 = vld [vmem:[%s659 + $0x38] sm:$0x1]
        %v1950 = vld [vmem:[%s659 + $0x3c] sm:$0xf]
        %v1951 = vld [vmem:[%s659 + $0x40] sm:$0xf]
        %v1952 = vld [vmem:[%s659 + $0x44] sm:$0x1]
        %v1953 = vld [vmem:[%s659 + $0x48] sm:$0xf]
        %v1954 = vld [vmem:[%s659 + $0x4c] sm:$0xf]
        %v1955 = vld [vmem:[%s659 + $0x50] sm:$0x1]
        %v1956 = vld [vmem:[%s659 + $0x54] sm:$0xf]
        %v1957 = vld [vmem:[%s659 + $0x58] sm:$0xf]
        %v1958 = vld [vmem:[%s659 + $0x5c] sm:$0x1]
        %v1959 = vld [vmem:[%s659 + $0x60] sm:$0xf]
        %v1960 = vld [vmem:[%s659 + $0x64] sm:$0xf]
        %v1961 = vld [vmem:[%s659 + $0x68] sm:$0x1]
        %v1962 = vld [vmem:[%s659 + $0x6c] sm:$0xf]
        %v1963 = vld [vmem:[%s659 + $0x70] sm:$0xf]
        %v1964 = vld [vmem:[%s659 + $0x74] sm:$0x1]
        %v1965 = vld [vmem:[%s659 + $0x78] sm:$0xf]
        %v1966 = vld [vmem:[%s659 + $0x7c] sm:$0xf]
        %v1967 = vld [vmem:[%s659 + $0x80] sm:$0x1]
        %v1968 = vld [vmem:[%s659 + $0x84] sm:$0xf]
        %v1969 = vld [vmem:[%s659 + $0x88] sm:$0xf]
        %v1970 = vld [vmem:[%s659 + $0x8c] sm:$0x1]
        %v1971 = vld [vmem:[%s659 + $0x90] sm:$0xf]
        %v1972 = vld [vmem:[%s659 + $0x94] sm:$0xf]
        %v1973 = vld [vmem:[%s659 + $0x98] sm:$0x1]
        %v1974 = vld [vmem:[%s659 + $0x9c] sm:$0xf]
        %v1975 = vld [vmem:[%s659 + $0xa0] sm:$0xf]
        %v1976 = vld [vmem:[%s659 + $0xa4] sm:$0x1]
        %v1977 = vld [vmem:[%s659 + $0xa8] sm:$0xf]
        %v1978 = vld [vmem:[%s659 + $0xac] sm:$0xf]
        %v1979 = vld [vmem:[%s659 + $0xb0] sm:$0x1]
        %v1980 = vld [vmem:[%s659 + $0xb4] sm:$0xf]
        %v1981 = vld [vmem:[%s659 + $0xb8] sm:$0xf]
        %v1982 = vld [vmem:[%s659 + $0xbc] sm:$0x1]
        %v1984 = vshrl.u32 %v1935, 16
        %v1986 = vrot.slane %v1984, 4
        %v1987 = vshll.u32 %v1935, 16
        %v1989 = vrot.slane %v1987, 5
        %v1990 = vor.u32 %v1986, %v1989
        %v1991 = vrot.slane %v1990, 4
        %v1993 = vshll.u32 %v1936, 16
        %v1995 = vrot.slane %v1993, 5
        %v1996 = vsel %vm888, %v1991, %v1995
        %v1997 = vshrl.u32 %v1936, 16
        %v1999 = vrot.slane %v1997, 4
        %v2000 = vor.u32 %v1999, %v1995
        %v2001 = vrot.slane %v2000, 4
        %v2003 = vshll.u32 %v1937, 16
        %v2005 = vrot.slane %v2003, 5
        %v2006 = vsel %vm888, %v2001, %v2005
        %v2008 = vshrl.u32 %v1938, 16
        %v2010 = vrot.slane %v2008, 4
        %v2011 = vshll.u32 %v1938, 16
        %v2013 = vrot.slane %v2011, 5
        %v2014 = vor.u32 %v2010, %v2013
        %v2015 = vrot.slane %v2014, 4
        %v2017 = vshll.u32 %v1939, 16
        %v2019 = vrot.slane %v2017, 5
        %v2020 = vsel %vm888, %v2015, %v2019
        %v2021 = vshrl.u32 %v1939, 16
        %v2023 = vrot.slane %v2021, 4
        %v2024 = vor.u32 %v2023, %v2019
        %v2025 = vrot.slane %v2024, 4
        %v2027 = vshll.u32 %v1940, 16
        %v2029 = vrot.slane %v2027, 5
        %v2030 = vsel %vm888, %v2025, %v2029
        %v2032 = vshrl.u32 %v1941, 16
        %v2034 = vrot.slane %v2032, 4
        %v2035 = vshll.u32 %v1941, 16
        %v2037 = vrot.slane %v2035, 5
        %v2038 = vor.u32 %v2034, %v2037
        %v2039 = vrot.slane %v2038, 4
        %v2041 = vshll.u32 %v1942, 16
        %v2043 = vrot.slane %v2041, 5
        %v2044 = vsel %vm888, %v2039, %v2043
        %v2045 = vshrl.u32 %v1942, 16
        %v2047 = vrot.slane %v2045, 4
        %v2048 = vor.u32 %v2047, %v2043
        %v2049 = vrot.slane %v2048, 4
        %v2051 = vshll.u32 %v1943, 16
        %v2053 = vrot.slane %v2051, 5
        %v2054 = vsel %vm888, %v2049, %v2053
        %v2056 = vshrl.u32 %v1944, 16
        %v2058 = vrot.slane %v2056, 4
        %v2059 = vshll.u32 %v1944, 16
        %v2061 = vrot.slane %v2059, 5
        %v2062 = vor.u32 %v2058, %v2061
        %v2063 = vrot.slane %v2062, 4
        %v2065 = vshll.u32 %v1945, 16
        %v2067 = vrot.slane %v2065, 5
        %v2068 = vsel %vm888, %v2063, %v2067
        %v2069 = vshrl.u32 %v1945, 16
        %v2071 = vrot.slane %v2069, 4
        %v2072 = vor.u32 %v2071, %v2067
        %v2073 = vrot.slane %v2072, 4
        %v2075 = vshll.u32 %v1946, 16
        %v2077 = vrot.slane %v2075, 5
        %v2078 = vsel %vm888, %v2073, %v2077
        %v2080 = vshrl.u32 %v1947, 16
        %v2082 = vrot.slane %v2080, 4
        %v2083 = vshll.u32 %v1947, 16
        %v2085 = vrot.slane %v2083, 5
        %v2086 = vor.u32 %v2082, %v2085
        %v2087 = vrot.slane %v2086, 4
        %v2089 = vshll.u32 %v1948, 16
        %v2091 = vrot.slane %v2089, 5
        %v2092 = vsel %vm888, %v2087, %v2091
        %v2093 = vshrl.u32 %v1948, 16
        %v2095 = vrot.slane %v2093, 4
        %v2096 = vor.u32 %v2095, %v2091
        %v2097 = vrot.slane %v2096, 4
        %v2099 = vshll.u32 %v1949, 16
        %v2101 = vrot.slane %v2099, 5
        %v2102 = vsel %vm888, %v2097, %v2101
        %v2104 = vshrl.u32 %v1950, 16
        %v2106 = vrot.slane %v2104, 4
        %v2107 = vshll.u32 %v1950, 16
        %v2109 = vrot.slane %v2107, 5
        %v2110 = vor.u32 %v2106, %v2109
        %v2111 = vrot.slane %v2110, 4
        %v2113 = vshll.u32 %v1951, 16
        %v2115 = vrot.slane %v2113, 5
        %v2116 = vsel %vm888, %v2111, %v2115
        %v2117 = vshrl.u32 %v1951, 16
        %v2119 = vrot.slane %v2117, 4
        %v2120 = vor.u32 %v2119, %v2115
        %v2121 = vrot.slane %v2120, 4
        %v2123 = vshll.u32 %v1952, 16
        %v2125 = vrot.slane %v2123, 5
        %v2126 = vsel %vm888, %v2121, %v2125
        %v2128 = vshrl.u32 %v1953, 16
        %v2130 = vrot.slane %v2128, 4
        %v2131 = vshll.u32 %v1953, 16
        %v2133 = vrot.slane %v2131, 5
        %v2134 = vor.u32 %v2130, %v2133
        %v2135 = vrot.slane %v2134, 4
        %v2137 = vshll.u32 %v1954, 16
        %v2139 = vrot.slane %v2137, 5
        %v2140 = vsel %vm888, %v2135, %v2139
        %v2141 = vshrl.u32 %v1954, 16
        %v2143 = vrot.slane %v2141, 4
        %v2144 = vor.u32 %v2143, %v2139
        %v2145 = vrot.slane %v2144, 4
        %v2147 = vshll.u32 %v1955, 16
        %v2149 = vrot.slane %v2147, 5
        %v2150 = vsel %vm888, %v2145, %v2149
        %v2152 = vshrl.u32 %v1956, 16
        %v2154 = vrot.slane %v2152, 4
        %v2155 = vshll.u32 %v1956, 16
        %v2157 = vrot.slane %v2155, 5
        %v2158 = vor.u32 %v2154, %v2157
        %v2159 = vrot.slane %v2158, 4
        %v2161 = vshll.u32 %v1957, 16
        %v2163 = vrot.slane %v2161, 5
        %v2164 = vsel %vm888, %v2159, %v2163
        %v2165 = vshrl.u32 %v1957, 16
        %v2167 = vrot.slane %v2165, 4
        %v2168 = vor.u32 %v2167, %v2163
        %v2169 = vrot.slane %v2168, 4
        %v2171 = vshll.u32 %v1958, 16
        %v2173 = vrot.slane %v2171, 5
        %v2174 = vsel %vm888, %v2169, %v2173
        %v2176 = vshrl.u32 %v1959, 16
        %v2178 = vrot.slane %v2176, 4
        %v2179 = vshll.u32 %v1959, 16
        %v2181 = vrot.slane %v2179, 5
        %v2182 = vor.u32 %v2178, %v2181
        %v2183 = vrot.slane %v2182, 4
        %v2185 = vshll.u32 %v1960, 16
        %v2187 = vrot.slane %v2185, 5
        %v2188 = vsel %vm888, %v2183, %v2187
        %v2189 = vshrl.u32 %v1960, 16
        %v2191 = vrot.slane %v2189, 4
        %v2192 = vor.u32 %v2191, %v2187
        %v2193 = vrot.slane %v2192, 4
        %v2195 = vshll.u32 %v1961, 16
        %v2197 = vrot.slane %v2195, 5
        %v2198 = vsel %vm888, %v2193, %v2197
        %v2200 = vshrl.u32 %v1962, 16
        %v2202 = vrot.slane %v2200, 4
        %v2203 = vshll.u32 %v1962, 16
        %v2205 = vrot.slane %v2203, 5
        %v2206 = vor.u32 %v2202, %v2205
        %v2207 = vrot.slane %v2206, 4
        %v2209 = vshll.u32 %v1963, 16
        %v2211 = vrot.slane %v2209, 5
        %v2212 = vsel %vm888, %v2207, %v2211
        %v2213 = vshrl.u32 %v1963, 16
        %v2215 = vrot.slane %v2213, 4
        %v2216 = vor.u32 %v2215, %v2211
        %v2217 = vrot.slane %v2216, 4
        %v2219 = vshll.u32 %v1964, 16
        %v2221 = vrot.slane %v2219, 5
        %v2222 = vsel %vm888, %v2217, %v2221
        %v2224 = vshrl.u32 %v1965, 16
        %v2226 = vrot.slane %v2224, 4
        %v2227 = vshll.u32 %v1965, 16
        %v2229 = vrot.slane %v2227, 5
        %v2230 = vor.u32 %v2226, %v2229
        %v2231 = vrot.slane %v2230, 4
        %v2233 = vshll.u32 %v1966, 16
        %v2235 = vrot.slane %v2233, 5
        %v2236 = vsel %vm888, %v2231, %v2235
        %v2237 = vshrl.u32 %v1966, 16
        %v2239 = vrot.slane %v2237, 4
        %v2240 = vor.u32 %v2239, %v2235
        %v2241 = vrot.slane %v2240, 4
        %v2243 = vshll.u32 %v1967, 16
        %v2245 = vrot.slane %v2243, 5
        %v2246 = vsel %vm888, %v2241, %v2245
        %v2248 = vshrl.u32 %v1968, 16
        %v2250 = vrot.slane %v2248, 4
        %v2251 = vshll.u32 %v1968, 16
        %v2253 = vrot.slane %v2251, 5
        %v2254 = vor.u32 %v2250, %v2253
        %v2255 = vrot.slane %v2254, 4
        %v2257 = vshll.u32 %v1969, 16
        %v2259 = vrot.slane %v2257, 5
        %v2260 = vsel %vm888, %v2255, %v2259
        %v2261 = vshrl.u32 %v1969, 16
        %v2263 = vrot.slane %v2261, 4
        %v2264 = vor.u32 %v2263, %v2259
        %v2265 = vrot.slane %v2264, 4
        %v2267 = vshll.u32 %v1970, 16
        %v2269 = vrot.slane %v2267, 5
        %v2270 = vsel %vm888, %v2265, %v2269
        %v2272 = vshrl.u32 %v1971, 16
        %v2274 = vrot.slane %v2272, 4
        %v2275 = vshll.u32 %v1971, 16
        %v2277 = vrot.slane %v2275, 5
        %v2278 = vor.u32 %v2274, %v2277
        %v2279 = vrot.slane %v2278, 4
        %v2281 = vshll.u32 %v1972, 16
        %v2283 = vrot.slane %v2281, 5
        %v2284 = vsel %vm888, %v2279, %v2283
        %v2285 = vshrl.u32 %v1972, 16
        %v2287 = vrot.slane %v2285, 4
        %v2288 = vor.u32 %v2287, %v2283
        %v2289 = vrot.slane %v2288, 4
        %v2291 = vshll.u32 %v1973, 16
        %v2293 = vrot.slane %v2291, 5
        %v2294 = vsel %vm888, %v2289, %v2293
        %v2296 = vshrl.u32 %v1974, 16
        %v2298 = vrot.slane %v2296, 4
        %v2299 = vshll.u32 %v1974, 16
        %v2301 = vrot.slane %v2299, 5
        %v2302 = vor.u32 %v2298, %v2301
        %v2303 = vrot.slane %v2302, 4
        %v2305 = vshll.u32 %v1975, 16
        %v2307 = vrot.slane %v2305, 5
        %v2308 = vsel %vm888, %v2303, %v2307
        %v2309 = vshrl.u32 %v1975, 16
        %v2311 = vrot.slane %v2309, 4
        %v2312 = vor.u32 %v2311, %v2307
        %v2313 = vrot.slane %v2312, 4
        %v2315 = vshll.u32 %v1976, 16
        %v2317 = vrot.slane %v2315, 5
        %v2318 = vsel %vm888, %v2313, %v2317
        %v2320 = vshrl.u32 %v1977, 16
        %v2322 = vrot.slane %v2320, 4
        %v2323 = vshll.u32 %v1977, 16
        %v2325 = vrot.slane %v2323, 5
        %v2326 = vor.u32 %v2322, %v2325
        %v2327 = vrot.slane %v2326, 4
        %v2329 = vshll.u32 %v1978, 16
        %v2331 = vrot.slane %v2329, 5
        %v2332 = vsel %vm888, %v2327, %v2331
        %v2333 = vshrl.u32 %v1978, 16
        %v2335 = vrot.slane %v2333, 4
        %v2336 = vor.u32 %v2335, %v2331
        %v2337 = vrot.slane %v2336, 4
        %v2339 = vshll.u32 %v1979, 16
        %v2341 = vrot.slane %v2339, 5
        %v2342 = vsel %vm888, %v2337, %v2341
        %v2344 = vshrl.u32 %v1980, 16
        %v2346 = vrot.slane %v2344, 4
        %v2347 = vshll.u32 %v1980, 16
        %v2349 = vrot.slane %v2347, 5
        %v2350 = vor.u32 %v2346, %v2349
        %v2351 = vrot.slane %v2350, 4
        %v2353 = vshll.u32 %v1981, 16
        %v2355 = vrot.slane %v2353, 5
        %v2356 = vsel %vm888, %v2351, %v2355
        %v2357 = vshrl.u32 %v1981, 16
        %v2359 = vrot.slane %v2357, 4
        %v2360 = vor.u32 %v2359, %v2355
        %v2361 = vrot.slane %v2360, 4
        %v2363 = vshll.u32 %v1982, 16
        %v2365 = vrot.slane %v2363, 5
        %v2366 = vsel %vm888, %v2361, %v2365
        %2367 = vrot.lane.b32.xlu0 %v1996, 16
        %v2368 = vpop.permute.xlu0 %2367
        %2369 = vrot.lane.b32.xlu0 %v2006, 16
        %v2370 = vpop.permute.xlu0 %2369
        %2371 = vrot.lane.b32.xlu0 %v2020, 16
        %v2372 = vpop.permute.xlu0 %2371
        %2373 = vrot.lane.b32.xlu0 %v2030, 16
        %v2374 = vpop.permute.xlu0 %2373
        %2375 = vrot.lane.b32.xlu0 %v2044, 16
        %v2376 = vpop.permute.xlu0 %2375
        %2377 = vrot.lane.b32.xlu0 %v2054, 16
        %v2378 = vpop.permute.xlu0 %2377
        %2379 = vrot.lane.b32.xlu0 %v2068, 16
        %v2380 = vpop.permute.xlu0 %2379
        %2381 = vrot.lane.b32.xlu0 %v2078, 16
        %v2382 = vpop.permute.xlu0 %2381
        %2383 = vrot.lane.b32.xlu0 %v2092, 16
        %v2384 = vpop.permute.xlu0 %2383
        %2385 = vrot.lane.b32.xlu0 %v2102, 16
        %v2386 = vpop.permute.xlu0 %2385
        %2387 = vrot.lane.b32.xlu0 %v2116, 16
        %v2388 = vpop.permute.xlu0 %2387
        %2389 = vrot.lane.b32.xlu0 %v2126, 16
        %v2390 = vpop.permute.xlu0 %2389
        %2391 = vrot.lane.b32.xlu0 %v2140, 16
        %v2392 = vpop.permute.xlu0 %2391
        %2393 = vrot.lane.b32.xlu0 %v2150, 16
        %v2394 = vpop.permute.xlu0 %2393
        %2395 = vrot.lane.b32.xlu0 %v2164, 16
        %v2396 = vpop.permute.xlu0 %2395
        %2397 = vrot.lane.b32.xlu0 %v2174, 16
        %v2398 = vpop.permute.xlu0 %2397
        %2399 = vrot.lane.b32.xlu0 %v2188, 16
        %v2400 = vpop.permute.xlu0 %2399
        %2401 = vrot.lane.b32.xlu0 %v2198, 16
        %v2402 = vpop.permute.xlu0 %2401
        %2403 = vrot.lane.b32.xlu0 %v2212, 16
        %v2404 = vpop.permute.xlu0 %2403
        %2405 = vrot.lane.b32.xlu0 %v2222, 16
        %v2406 = vpop.permute.xlu0 %2405
        %2407 = vrot.lane.b32.xlu0 %v2236, 16
        %v2408 = vpop.permute.xlu0 %2407
        %2409 = vrot.lane.b32.xlu0 %v2246, 16
        %v2410 = vpop.permute.xlu0 %2409
        %2411 = vrot.lane.b32.xlu0 %v2260, 16
        %v2412 = vpop.permute.xlu0 %2411
        %2413 = vrot.lane.b32.xlu0 %v2270, 16
        %v2414 = vpop.permute.xlu0 %2413
        %2415 = vrot.lane.b32.xlu0 %v2284, 16
        %v2416 = vpop.permute.xlu0 %2415
        %2417 = vrot.lane.b32.xlu0 %v2294, 16
        %v2418 = vpop.permute.xlu0 %2417
        %2419 = vrot.lane.b32.xlu0 %v2308, 16
        %v2420 = vpop.permute.xlu0 %2419
        %2421 = vrot.lane.b32.xlu0 %v2318, 16
        %v2422 = vpop.permute.xlu0 %2421
        %2423 = vrot.lane.b32.xlu0 %v2332, 16
        %v2424 = vpop.permute.xlu0 %2423
        %2425 = vrot.lane.b32.xlu0 %v2342, 16
        %v2426 = vpop.permute.xlu0 %2425
        %2427 = vrot.lane.b32.xlu0 %v2356, 16
        %v2428 = vpop.permute.xlu0 %2427
        %2429 = vrot.lane.b32.xlu0 %v2366, 16
        %v2430 = vpop.permute.xlu0 %2429
        %vm2463 = vcmask 158848
        %2464 = vst.msk [vmem:[#allocation3] sm:$0xf] %vm2463, %v2368
        %2465 = vst.msk [vmem:[#allocation3 + $0x4] sm:$0xf] %vm2463, %v2370
        %2466 = vst.msk [vmem:[#allocation3 + $0x8] sm:$0xf] %vm2463, %v2372
        %2467 = vst.msk [vmem:[#allocation3 + $0xc] sm:$0xf] %vm2463, %v2374
        %2468 = vst.msk [vmem:[#allocation3 + $0x10] sm:$0xf] %vm2463, %v2376
        %2469 = vst.msk [vmem:[#allocation3 + $0x14] sm:$0xf] %vm2463, %v2378
        %2470 = vst.msk [vmem:[#allocation3 + $0x18] sm:$0xf] %vm2463, %v2380
        %2471 = vst.msk [vmem:[#allocation3 + $0x1c] sm:$0xf] %vm2463, %v2382
        %2472 = vst.msk [vmem:[#allocation3 + $0x20] sm:$0xf] %vm2463, %v2384
        %2473 = vst.msk [vmem:[#allocation3 + $0x24] sm:$0xf] %vm2463, %v2386
        %2474 = vst.msk [vmem:[#allocation3 + $0x28] sm:$0xf] %vm2463, %v2388
        %2475 = vst.msk [vmem:[#allocation3 + $0x2c] sm:$0xf] %vm2463, %v2390
        %2476 = vst.msk [vmem:[#allocation3 + $0x30] sm:$0xf] %vm2463, %v2392
        %2477 = vst.msk [vmem:[#allocation3 + $0x34] sm:$0xf] %vm2463, %v2394
        %2478 = vst.msk [vmem:[#allocation3 + $0x38] sm:$0xf] %vm2463, %v2396
        %2479 = vst.msk [vmem:[#allocation3 + $0x3c] sm:$0xf] %vm2463, %v2398
        %2480 = vst.msk [vmem:[#allocation3 + $0x40] sm:$0xf] %vm2463, %v2400
        %2481 = vst.msk [vmem:[#allocation3 + $0x44] sm:$0xf] %vm2463, %v2402
        %2482 = vst.msk [vmem:[#allocation3 + $0x48] sm:$0xf] %vm2463, %v2404
        %2483 = vst.msk [vmem:[#allocation3 + $0x4c] sm:$0xf] %vm2463, %v2406
        %2484 = vst.msk [vmem:[#allocation3 + $0x50] sm:$0xf] %vm2463, %v2408
        %2485 = vst.msk [vmem:[#allocation3 + $0x54] sm:$0xf] %vm2463, %v2410
        %2486 = vst.msk [vmem:[#allocation3 + $0x58] sm:$0xf] %vm2463, %v2412
        %2487 = vst.msk [vmem:[#allocation3 + $0x5c] sm:$0xf] %vm2463, %v2414
        %2488 = vst.msk [vmem:[#allocation3 + $0x60] sm:$0xf] %vm2463, %v2416
        %2489 = vst.msk [vmem:[#allocation3 + $0x64] sm:$0xf] %vm2463, %v2418
        %2490 = vst.msk [vmem:[#allocation3 + $0x68] sm:$0xf] %vm2463, %v2420
        %2491 = vst.msk [vmem:[#allocation3 + $0x6c] sm:$0xf] %vm2463, %v2422
        %2492 = vst.msk [vmem:[#allocation3 + $0x70] sm:$0xf] %vm2463, %v2424
        %2493 = vst.msk [vmem:[#allocation3 + $0x74] sm:$0xf] %vm2463, %v2426
        %2494 = vst.msk [vmem:[#allocation3 + $0x78] sm:$0xf] %vm2463, %v2428
        %2495 = vst.msk [vmem:[#allocation3 + $0x7c] sm:$0xf] %vm2463, %v2430
        %v2496 = vld [vmem:[%s659] sm:$0xe]
        %v2497 = vld [vmem:[%s659 + $0x4] sm:$0xf]
        %v2498 = vld [vmem:[%s659 + $0x8] sm:$0x1]
        %v2499 = vld [vmem:[%s659 + $0xc] sm:$0xe]
        %v2500 = vld [vmem:[%s659 + $0x10] sm:$0xf]
        %v2501 = vld [vmem:[%s659 + $0x14] sm:$0x1]
        %v2502 = vld [vmem:[%s659 + $0x18] sm:$0xe]
        %v2503 = vld [vmem:[%s659 + $0x1c] sm:$0xf]
        %v2504 = vld [vmem:[%s659 + $0x20] sm:$0x1]
        %v2505 = vld [vmem:[%s659 + $0x24] sm:$0xe]
        %v2506 = vld [vmem:[%s659 + $0x28] sm:$0xf]
        %v2507 = vld [vmem:[%s659 + $0x2c] sm:$0x1]
        %v2508 = vld [vmem:[%s659 + $0x30] sm:$0xe]
        %v2509 = vld [vmem:[%s659 + $0x34] sm:$0xf]
        %v2510 = vld [vmem:[%s659 + $0x38] sm:$0x1]
        %v2511 = vld [vmem:[%s659 + $0x3c] sm:$0xe]
        %v2512 = vld [vmem:[%s659 + $0x40] sm:$0xf]
        %v2513 = vld [vmem:[%s659 + $0x44] sm:$0x1]
        %v2514 = vld [vmem:[%s659 + $0x48] sm:$0xe]
        %v2515 = vld [vmem:[%s659 + $0x4c] sm:$0xf]
        %v2516 = vld [vmem:[%s659 + $0x50] sm:$0x1]
        %v2517 = vld [vmem:[%s659 + $0x54] sm:$0xe]
        %v2518 = vld [vmem:[%s659 + $0x58] sm:$0xf]
        %v2519 = vld [vmem:[%s659 + $0x5c] sm:$0x1]
        %v2520 = vld [vmem:[%s659 + $0x60] sm:$0xe]
        %v2521 = vld [vmem:[%s659 + $0x64] sm:$0xf]
        %v2522 = vld [vmem:[%s659 + $0x68] sm:$0x1]
        %v2523 = vld [vmem:[%s659 + $0x6c] sm:$0xe]
        %v2524 = vld [vmem:[%s659 + $0x70] sm:$0xf]
        %v2525 = vld [vmem:[%s659 + $0x74] sm:$0x1]
        %v2526 = vld [vmem:[%s659 + $0x78] sm:$0xe]
        %v2527 = vld [vmem:[%s659 + $0x7c] sm:$0xf]
        %v2528 = vld [vmem:[%s659 + $0x80] sm:$0x1]
        %v2529 = vld [vmem:[%s659 + $0x84] sm:$0xe]
        %v2530 = vld [vmem:[%s659 + $0x88] sm:$0xf]
        %v2531 = vld [vmem:[%s659 + $0x8c] sm:$0x1]
        %v2532 = vld [vmem:[%s659 + $0x90] sm:$0xe]
        %v2533 = vld [vmem:[%s659 + $0x94] sm:$0xf]
        %v2534 = vld [vmem:[%s659 + $0x98] sm:$0x1]
        %v2535 = vld [vmem:[%s659 + $0x9c] sm:$0xe]
        %v2536 = vld [vmem:[%s659 + $0xa0] sm:$0xf]
        %v2537 = vld [vmem:[%s659 + $0xa4] sm:$0x1]
        %v2538 = vld [vmem:[%s659 + $0xa8] sm:$0xe]
        %v2539 = vld [vmem:[%s659 + $0xac] sm:$0xf]
        %v2540 = vld [vmem:[%s659 + $0xb0] sm:$0x1]
        %v2541 = vld [vmem:[%s659 + $0xb4] sm:$0xe]
        %v2542 = vld [vmem:[%s659 + $0xb8] sm:$0xf]
        %v2543 = vld [vmem:[%s659 + $0xbc] sm:$0x1]
        %v2592 = vrot.slane %v2496, 5
        %v2593 = vrot.slane %v2592, 4
        %v2594 = vrot.slane %v2497, 5
        %v2595 = vsel %vm1500, %v2593, %v2594
        %v2596 = vrot.slane %v2594, 4
        %v2597 = vrot.slane %v2498, 5
        %v2598 = vsel %vm1500, %v2596, %v2597
        %v2599 = vrot.slane %v2499, 5
        %v2600 = vrot.slane %v2599, 4
        %v2601 = vrot.slane %v2500, 5
        %v2602 = vsel %vm1500, %v2600, %v2601
        %v2603 = vrot.slane %v2601, 4
        %v2604 = vrot.slane %v2501, 5
        %v2605 = vsel %vm1500, %v2603, %v2604
        %v2606 = vrot.slane %v2502, 5
        %v2607 = vrot.slane %v2606, 4
        %v2608 = vrot.slane %v2503, 5
        %v2609 = vsel %vm1500, %v2607, %v2608
        %v2610 = vrot.slane %v2608, 4
        %v2611 = vrot.slane %v2504, 5
        %v2612 = vsel %vm1500, %v2610, %v2611
        %v2613 = vrot.slane %v2505, 5
        %v2614 = vrot.slane %v2613, 4
        %v2615 = vrot.slane %v2506, 5
        %v2616 = vsel %vm1500, %v2614, %v2615
        %v2617 = vrot.slane %v2615, 4
        %v2618 = vrot.slane %v2507, 5
        %v2619 = vsel %vm1500, %v2617, %v2618
        %v2620 = vrot.slane %v2508, 5
        %v2621 = vrot.slane %v2620, 4
        %v2622 = vrot.slane %v2509, 5
        %v2623 = vsel %vm1500, %v2621, %v2622
        %v2624 = vrot.slane %v2622, 4
        %v2625 = vrot.slane %v2510, 5
        %v2626 = vsel %vm1500, %v2624, %v2625
        %v2627 = vrot.slane %v2511, 5
        %v2628 = vrot.slane %v2627, 4
        %v2629 = vrot.slane %v2512, 5
        %v2630 = vsel %vm1500, %v2628, %v2629
        %v2631 = vrot.slane %v2629, 4
        %v2632 = vrot.slane %v2513, 5
        %v2633 = vsel %vm1500, %v2631, %v2632
        %v2634 = vrot.slane %v2514, 5
        %v2635 = vrot.slane %v2634, 4
        %v2636 = vrot.slane %v2515, 5
        %v2637 = vsel %vm1500, %v2635, %v2636
        %v2638 = vrot.slane %v2636, 4
        %v2639 = vrot.slane %v2516, 5
        %v2640 = vsel %vm1500, %v2638, %v2639
        %v2641 = vrot.slane %v2517, 5
        %v2642 = vrot.slane %v2641, 4
        %v2643 = vrot.slane %v2518, 5
        %v2644 = vsel %vm1500, %v2642, %v2643
        %v2645 = vrot.slane %v2643, 4
        %v2646 = vrot.slane %v2519, 5
        %v2647 = vsel %vm1500, %v2645, %v2646
        %v2648 = vrot.slane %v2520, 5
        %v2649 = vrot.slane %v2648, 4
        %v2650 = vrot.slane %v2521, 5
        %v2651 = vsel %vm1500, %v2649, %v2650
        %v2652 = vrot.slane %v2650, 4
        %v2653 = vrot.slane %v2522, 5
        %v2654 = vsel %vm1500, %v2652, %v2653
        %v2655 = vrot.slane %v2523, 5
        %v2656 = vrot.slane %v2655, 4
        %v2657 = vrot.slane %v2524, 5
        %v2658 = vsel %vm1500, %v2656, %v2657
        %v2659 = vrot.slane %v2657, 4
        %v2660 = vrot.slane %v2525, 5
        %v2661 = vsel %vm1500, %v2659, %v2660
        %v2662 = vrot.slane %v2526, 5
        %v2663 = vrot.slane %v2662, 4
        %v2664 = vrot.slane %v2527, 5
        %v2665 = vsel %vm1500, %v2663, %v2664
        %v2666 = vrot.slane %v2664, 4
        %v2667 = vrot.slane %v2528, 5
        %v2668 = vsel %vm1500, %v2666, %v2667
        %v2669 = vrot.slane %v2529, 5
        %v2670 = vrot.slane %v2669, 4
        %v2671 = vrot.slane %v2530, 5
        %v2672 = vsel %vm1500, %v2670, %v2671
        %v2673 = vrot.slane %v2671, 4
        %v2674 = vrot.slane %v2531, 5
        %v2675 = vsel %vm1500, %v2673, %v2674
        %v2676 = vrot.slane %v2532, 5
        %v2677 = vrot.slane %v2676, 4
        %v2678 = vrot.slane %v2533, 5
        %v2679 = vsel %vm1500, %v2677, %v2678
        %v2680 = vrot.slane %v2678, 4
        %v2681 = vrot.slane %v2534, 5
        %v2682 = vsel %vm1500, %v2680, %v2681
        %v2683 = vrot.slane %v2535, 5
        %v2684 = vrot.slane %v2683, 4
        %v2685 = vrot.slane %v2536, 5
        %v2686 = vsel %vm1500, %v2684, %v2685
        %v2687 = vrot.slane %v2685, 4
        %v2688 = vrot.slane %v2537, 5
        %v2689 = vsel %vm1500, %v2687, %v2688
        %v2690 = vrot.slane %v2538, 5
        %v2691 = vrot.slane %v2690, 4
        %v2692 = vrot.slane %v2539, 5
        %v2693 = vsel %vm1500, %v2691, %v2692
        %v2694 = vrot.slane %v2692, 4
        %v2695 = vrot.slane %v2540, 5
        %v2696 = vsel %vm1500, %v2694, %v2695
        %v2697 = vrot.slane %v2541, 5
        %v2698 = vrot.slane %v2697, 4
        %v2699 = vrot.slane %v2542, 5
        %v2700 = vsel %vm1500, %v2698, %v2699
        %v2701 = vrot.slane %v2699, 4
        %v2702 = vrot.slane %v2543, 5
        %v2703 = vsel %vm1500, %v2701, %v2702
        %2704 = vrot.lane.b32.xlu0 %v2595, 20
        %v2705 = vpop.permute.xlu0 %2704
        %2706 = vrot.lane.b32.xlu0 %v2598, 20
        %v2707 = vpop.permute.xlu0 %2706
        %2708 = vrot.lane.b32.xlu0 %v2602, 20
        %v2709 = vpop.permute.xlu0 %2708
        %2710 = vrot.lane.b32.xlu0 %v2605, 20
        %v2711 = vpop.permute.xlu0 %2710
        %2712 = vrot.lane.b32.xlu0 %v2609, 20
        %v2713 = vpop.permute.xlu0 %2712
        %2714 = vrot.lane.b32.xlu0 %v2612, 20
        %v2715 = vpop.permute.xlu0 %2714
        %2716 = vrot.lane.b32.xlu0 %v2616, 20
        %v2717 = vpop.permute.xlu0 %2716
        %2718 = vrot.lane.b32.xlu0 %v2619, 20
        %v2719 = vpop.permute.xlu0 %2718
        %2720 = vrot.lane.b32.xlu0 %v2623, 20
        %v2721 = vpop.permute.xlu0 %2720
        %2722 = vrot.lane.b32.xlu0 %v2626, 20
        %v2723 = vpop.permute.xlu0 %2722
        %2724 = vrot.lane.b32.xlu0 %v2630, 20
        %v2725 = vpop.permute.xlu0 %2724
        %2726 = vrot.lane.b32.xlu0 %v2633, 20
        %v2727 = vpop.permute.xlu0 %2726
        %2728 = vrot.lane.b32.xlu0 %v2637, 20
        %v2729 = vpop.permute.xlu0 %2728
        %2730 = vrot.lane.b32.xlu0 %v2640, 20
        %v2731 = vpop.permute.xlu0 %2730
        %2732 = vrot.lane.b32.xlu0 %v2644, 20
        %v2733 = vpop.permute.xlu0 %2732
        %2734 = vrot.lane.b32.xlu0 %v2647, 20
        %v2735 = vpop.permute.xlu0 %2734
        %2736 = vrot.lane.b32.xlu0 %v2651, 20
        %v2737 = vpop.permute.xlu0 %2736
        %2738 = vrot.lane.b32.xlu0 %v2654, 20
        %v2739 = vpop.permute.xlu0 %2738
        %2740 = vrot.lane.b32.xlu0 %v2658, 20
        %v2741 = vpop.permute.xlu0 %2740
        %2742 = vrot.lane.b32.xlu0 %v2661, 20
        %v2743 = vpop.permute.xlu0 %2742
        %2744 = vrot.lane.b32.xlu0 %v2665, 20
        %v2745 = vpop.permute.xlu0 %2744
        %2746 = vrot.lane.b32.xlu0 %v2668, 20
        %v2747 = vpop.permute.xlu0 %2746
        %2748 = vrot.lane.b32.xlu0 %v2672, 20
        %v2749 = vpop.permute.xlu0 %2748
        %2750 = vrot.lane.b32.xlu0 %v2675, 20
        %v2751 = vpop.permute.xlu0 %2750
        %2752 = vrot.lane.b32.xlu0 %v2679, 20
        %v2753 = vpop.permute.xlu0 %2752
        %2754 = vrot.lane.b32.xlu0 %v2682, 20
        %v2755 = vpop.permute.xlu0 %2754
        %2756 = vrot.lane.b32.xlu0 %v2686, 20
        %v2757 = vpop.permute.xlu0 %2756
        %2758 = vrot.lane.b32.xlu0 %v2689, 20
        %v2759 = vpop.permute.xlu0 %2758
        %2760 = vrot.lane.b32.xlu0 %v2693, 20
        %v2761 = vpop.permute.xlu0 %2760
        %2762 = vrot.lane.b32.xlu0 %v2696, 20
        %v2763 = vpop.permute.xlu0 %2762
        %2764 = vrot.lane.b32.xlu0 %v2700, 20
        %v2765 = vpop.permute.xlu0 %2764
        %2766 = vrot.lane.b32.xlu0 %v2703, 20
        %v2767 = vpop.permute.xlu0 %2766
        %vm2800 = vcmask 191648
        %2801 = vst.msk [vmem:[#allocation3] sm:$0xf] %vm2800, %v2705
        %2802 = vst.msk [vmem:[#allocation3 + $0x4] sm:$0xf] %vm2800, %v2707
        %2803 = vst.msk [vmem:[#allocation3 + $0x8] sm:$0xf] %vm2800, %v2709
        %2804 = vst.msk [vmem:[#allocation3 + $0xc] sm:$0xf] %vm2800, %v2711
        %2805 = vst.msk [vmem:[#allocation3 + $0x10] sm:$0xf] %vm2800, %v2713
        %2806 = vst.msk [vmem:[#allocation3 + $0x14] sm:$0xf] %vm2800, %v2715
        %2807 = vst.msk [vmem:[#allocation3 + $0x18] sm:$0xf] %vm2800, %v2717
        %2808 = vst.msk [vmem:[#allocation3 + $0x1c] sm:$0xf] %vm2800, %v2719
        %2809 = vst.msk [vmem:[#allocation3 + $0x20] sm:$0xf] %vm2800, %v2721
        %2810 = vst.msk [vmem:[#allocation3 + $0x24] sm:$0xf] %vm2800, %v2723
        %2811 = vst.msk [vmem:[#allocation3 + $0x28] sm:$0xf] %vm2800, %v2725
        %2812 = vst.msk [vmem:[#allocation3 + $0x2c] sm:$0xf] %vm2800, %v2727
        %2813 = vst.msk [vmem:[#allocation3 + $0x30] sm:$0xf] %vm2800, %v2729
        %2814 = vst.msk [vmem:[#allocation3 + $0x34] sm:$0xf] %vm2800, %v2731
        %2815 = vst.msk [vmem:[#allocation3 + $0x38] sm:$0xf] %vm2800, %v2733
        %2816 = vst.msk [vmem:[#allocation3 + $0x3c] sm:$0xf] %vm2800, %v2735
        %2817 = vst.msk [vmem:[#allocation3 + $0x40] sm:$0xf] %vm2800, %v2737
        %2818 = vst.msk [vmem:[#allocation3 + $0x44] sm:$0xf] %vm2800, %v2739
        %2819 = vst.msk [vmem:[#allocation3 + $0x48] sm:$0xf] %vm2800, %v2741
        %2820 = vst.msk [vmem:[#allocation3 + $0x4c] sm:$0xf] %vm2800, %v2743
        %2821 = vst.msk [vmem:[#allocation3 + $0x50] sm:$0xf] %vm2800, %v2745
        %2822 = vst.msk [vmem:[#allocation3 + $0x54] sm:$0xf] %vm2800, %v2747
        %2823 = vst.msk [vmem:[#allocation3 + $0x58] sm:$0xf] %vm2800, %v2749
        %2824 = vst.msk [vmem:[#allocation3 + $0x5c] sm:$0xf] %vm2800, %v2751
        %2825 = vst.msk [vmem:[#allocation3 + $0x60] sm:$0xf] %vm2800, %v2753
        %2826 = vst.msk [vmem:[#allocation3 + $0x64] sm:$0xf] %vm2800, %v2755
        %2827 = vst.msk [vmem:[#allocation3 + $0x68] sm:$0xf] %vm2800, %v2757
        %2828 = vst.msk [vmem:[#allocation3 + $0x6c] sm:$0xf] %vm2800, %v2759
        %2829 = vst.msk [vmem:[#allocation3 + $0x70] sm:$0xf] %vm2800, %v2761
        %2830 = vst.msk [vmem:[#allocation3 + $0x74] sm:$0xf] %vm2800, %v2763
        %2831 = vst.msk [vmem:[#allocation3 + $0x78] sm:$0xf] %vm2800, %v2765
        %2832 = vst.msk [vmem:[#allocation3 + $0x7c] sm:$0xf] %vm2800, %v2767
        %s2833 = scalar_lea.vmem [#allocation2], 24
        %v2834 = vld [vmem:[%s2833] sm:$0xf]
        %v2835 = vld [vmem:[%s2833 + $0x4] sm:$0xf]
        %v2836 = vld [vmem:[%s2833 + $0xc] sm:$0xf]
        %v2837 = vld [vmem:[%s2833 + $0x10] sm:$0xf]
        %v2838 = vld [vmem:[%s2833 + $0x18] sm:$0xf]
        %v2839 = vld [vmem:[%s2833 + $0x1c] sm:$0xf]
        %v2840 = vld [vmem:[%s2833 + $0x24] sm:$0xf]
        %v2841 = vld [vmem:[%s2833 + $0x28] sm:$0xf]
        %v2842 = vld [vmem:[%s2833 + $0x30] sm:$0xf]
        %v2843 = vld [vmem:[%s2833 + $0x34] sm:$0xf]
        %v2844 = vld [vmem:[%s2833 + $0x3c] sm:$0xf]
        %v2845 = vld [vmem:[%s2833 + $0x40] sm:$0xf]
        %v2846 = vld [vmem:[%s2833 + $0x48] sm:$0xf]
        %v2847 = vld [vmem:[%s2833 + $0x4c] sm:$0xf]
        %v2848 = vld [vmem:[%s2833 + $0x54] sm:$0xf]
        %v2849 = vld [vmem:[%s2833 + $0x58] sm:$0xf]
        %v2850 = vld [vmem:[%s2833 + $0x60] sm:$0xf]
        %v2851 = vld [vmem:[%s2833 + $0x64] sm:$0xf]
        %v2852 = vld [vmem:[%s2833 + $0x6c] sm:$0xf]
        %v2853 = vld [vmem:[%s2833 + $0x70] sm:$0xf]
        %v2854 = vld [vmem:[%s2833 + $0x78] sm:$0xf]
        %v2855 = vld [vmem:[%s2833 + $0x7c] sm:$0xf]
        %v2856 = vld [vmem:[%s2833 + $0x84] sm:$0xf]
        %v2857 = vld [vmem:[%s2833 + $0x88] sm:$0xf]
        %v2858 = vld [vmem:[%s2833 + $0x90] sm:$0xf]
        %v2859 = vld [vmem:[%s2833 + $0x94] sm:$0xf]
        %v2860 = vld [vmem:[%s2833 + $0x9c] sm:$0xf]
        %v2861 = vld [vmem:[%s2833 + $0xa0] sm:$0xf]
        %v2862 = vld [vmem:[%s2833 + $0xa8] sm:$0xf]
        %v2863 = vld [vmem:[%s2833 + $0xac] sm:$0xf]
        %v2864 = vld [vmem:[%s2833 + $0xb4] sm:$0xf]
        %v2865 = vld [vmem:[%s2833 + $0xb8] sm:$0xf]
        %2898 = vrot.lane.b32.xlu0 %v2834, 24
        %v2899 = vpop.permute.xlu0 %2898
        %2900 = vrot.lane.b32.xlu0 %v2835, 24
        %v2901 = vpop.permute.xlu0 %2900
        %2902 = vrot.lane.b32.xlu0 %v2836, 24
        %v2903 = vpop.permute.xlu0 %2902
        %2904 = vrot.lane.b32.xlu0 %v2837, 24
        %v2905 = vpop.permute.xlu0 %2904
        %2906 = vrot.lane.b32.xlu0 %v2838, 24
        %v2907 = vpop.permute.xlu0 %2906
        %2908 = vrot.lane.b32.xlu0 %v2839, 24
        %v2909 = vpop.permute.xlu0 %2908
        %2910 = vrot.lane.b32.xlu0 %v2840, 24
        %v2911 = vpop.permute.xlu0 %2910
        %2912 = vrot.lane.b32.xlu0 %v2841, 24
        %v2913 = vpop.permute.xlu0 %2912
        %2914 = vrot.lane.b32.xlu0 %v2842, 24
        %v2915 = vpop.permute.xlu0 %2914
        %2916 = vrot.lane.b32.xlu0 %v2843, 24
        %v2917 = vpop.permute.xlu0 %2916
        %2918 = vrot.lane.b32.xlu0 %v2844, 24
        %v2919 = vpop.permute.xlu0 %2918
        %2920 = vrot.lane.b32.xlu0 %v2845, 24
        %v2921 = vpop.permute.xlu0 %2920
        %2922 = vrot.lane.b32.xlu0 %v2846, 24
        %v2923 = vpop.permute.xlu0 %2922
        %2924 = vrot.lane.b32.xlu0 %v2847, 24
        %v2925 = vpop.permute.xlu0 %2924
        %2926 = vrot.lane.b32.xlu0 %v2848, 24
        %v2927 = vpop.permute.xlu0 %2926
        %2928 = vrot.lane.b32.xlu0 %v2849, 24
        %v2929 = vpop.permute.xlu0 %2928
        %2930 = vrot.lane.b32.xlu0 %v2850, 24
        %v2931 = vpop.permute.xlu0 %2930
        %2932 = vrot.lane.b32.xlu0 %v2851, 24
        %v2933 = vpop.permute.xlu0 %2932
        %2934 = vrot.lane.b32.xlu0 %v2852, 24
        %v2935 = vpop.permute.xlu0 %2934
        %2936 = vrot.lane.b32.xlu0 %v2853, 24
        %v2937 = vpop.permute.xlu0 %2936
        %2938 = vrot.lane.b32.xlu0 %v2854, 24
        %v2939 = vpop.permute.xlu0 %2938
        %2940 = vrot.lane.b32.xlu0 %v2855, 24
        %v2941 = vpop.permute.xlu0 %2940
        %2942 = vrot.lane.b32.xlu0 %v2856, 24
        %v2943 = vpop.permute.xlu0 %2942
        %2944 = vrot.lane.b32.xlu0 %v2857, 24
        %v2945 = vpop.permute.xlu0 %2944
        %2946 = vrot.lane.b32.xlu0 %v2858, 24
        %v2947 = vpop.permute.xlu0 %2946
        %2948 = vrot.lane.b32.xlu0 %v2859, 24
        %v2949 = vpop.permute.xlu0 %2948
        %2950 = vrot.lane.b32.xlu0 %v2860, 24
        %v2951 = vpop.permute.xlu0 %2950
        %2952 = vrot.lane.b32.xlu0 %v2861, 24
        %v2953 = vpop.permute.xlu0 %2952
        %2954 = vrot.lane.b32.xlu0 %v2862, 24
        %v2955 = vpop.permute.xlu0 %2954
        %2956 = vrot.lane.b32.xlu0 %v2863, 24
        %v2957 = vpop.permute.xlu0 %2956
        %2958 = vrot.lane.b32.xlu0 %v2864, 24
        %v2959 = vpop.permute.xlu0 %2958
        %2960 = vrot.lane.b32.xlu0 %v2865, 24
        %v2961 = vpop.permute.xlu0 %2960
        %vm2994 = vcmask 224448
        %2995 = vst.msk [vmem:[#allocation3] sm:$0xf] %vm2994, %v2899
        %2996 = vst.msk [vmem:[#allocation3 + $0x4] sm:$0xf] %vm2994, %v2901
        %2997 = vst.msk [vmem:[#allocation3 + $0x8] sm:$0xf] %vm2994, %v2903
        %2998 = vst.msk [vmem:[#allocation3 + $0xc] sm:$0xf] %vm2994, %v2905
        %2999 = vst.msk [vmem:[#allocation3 + $0x10] sm:$0xf] %vm2994, %v2907
        %3000 = vst.msk [vmem:[#allocation3 + $0x14] sm:$0xf] %vm2994, %v2909
        %3001 = vst.msk [vmem:[#allocation3 + $0x18] sm:$0xf] %vm2994, %v2911
        %3002 = vst.msk [vmem:[#allocation3 + $0x1c] sm:$0xf] %vm2994, %v2913
        %3003 = vst.msk [vmem:[#allocation3 + $0x20] sm:$0xf] %vm2994, %v2915
        %3004 = vst.msk [vmem:[#allocation3 + $0x24] sm:$0xf] %vm2994, %v2917
        %3005 = vst.msk [vmem:[#allocation3 + $0x28] sm:$0xf] %vm2994, %v2919
        %3006 = vst.msk [vmem:[#allocation3 + $0x2c] sm:$0xf] %vm2994, %v2921
        %3007 = vst.msk [vmem:[#allocation3 + $0x30] sm:$0xf] %vm2994, %v2923
        %3008 = vst.msk [vmem:[#allocation3 + $0x34] sm:$0xf] %vm2994, %v2925
        %3009 = vst.msk [vmem:[#allocation3 + $0x38] sm:$0xf] %vm2994, %v2927
        %3010 = vst.msk [vmem:[#allocation3 + $0x3c] sm:$0xf] %vm2994, %v2929
        %3011 = vst.msk [vmem:[#allocation3 + $0x40] sm:$0xf] %vm2994, %v2931
        %3012 = vst.msk [vmem:[#allocation3 + $0x44] sm:$0xf] %vm2994, %v2933
        %3013 = vst.msk [vmem:[#allocation3 + $0x48] sm:$0xf] %vm2994, %v2935
        %3014 = vst.msk [vmem:[#allocation3 + $0x4c] sm:$0xf] %vm2994, %v2937
        %3015 = vst.msk [vmem:[#allocation3 + $0x50] sm:$0xf] %vm2994, %v2939
        %3016 = vst.msk [vmem:[#allocation3 + $0x54] sm:$0xf] %vm2994, %v2941
        %3017 = vst.msk [vmem:[#allocation3 + $0x58] sm:$0xf] %vm2994, %v2943
        %3018 = vst.msk [vmem:[#allocation3 + $0x5c] sm:$0xf] %vm2994, %v2945
        %3019 = vst.msk [vmem:[#allocation3 + $0x60] sm:$0xf] %vm2994, %v2947
        %3020 = vst.msk [vmem:[#allocation3 + $0x64] sm:$0xf] %vm2994, %v2949
        %3021 = vst.msk [vmem:[#allocation3 + $0x68] sm:$0xf] %vm2994, %v2951
        %3022 = vst.msk [vmem:[#allocation3 + $0x6c] sm:$0xf] %vm2994, %v2953
        %3023 = vst.msk [vmem:[#allocation3 + $0x70] sm:$0xf] %vm2994, %v2955
        %3024 = vst.msk [vmem:[#allocation3 + $0x74] sm:$0xf] %vm2994, %v2957
        %3025 = vst.msk [vmem:[#allocation3 + $0x78] sm:$0xf] %vm2994, %v2959
        %3026 = vst.msk [vmem:[#allocation3 + $0x7c] sm:$0xf] %vm2994, %v2961
        %v3027 = vld [vmem:[%s2833] sm:$0xf]
        %v3028 = vld [vmem:[%s2833 + $0x4] sm:$0xf]
        %v3029 = vld [vmem:[%s2833 + $0x8] sm:$0x1]
        %v3030 = vld [vmem:[%s2833 + $0xc] sm:$0xf]
        %v3031 = vld [vmem:[%s2833 + $0x10] sm:$0xf]
        %v3032 = vld [vmem:[%s2833 + $0x14] sm:$0x1]
        %v3033 = vld [vmem:[%s2833 + $0x18] sm:$0xf]
        %v3034 = vld [vmem:[%s2833 + $0x1c] sm:$0xf]
        %v3035 = vld [vmem:[%s2833 + $0x20] sm:$0x1]
        %v3036 = vld [vmem:[%s2833 + $0x24] sm:$0xf]
        %v3037 = vld [vmem:[%s2833 + $0x28] sm:$0xf]
        %v3038 = vld [vmem:[%s2833 + $0x2c] sm:$0x1]
        %v3039 = vld [vmem:[%s2833 + $0x30] sm:$0xf]
        %v3040 = vld [vmem:[%s2833 + $0x34] sm:$0xf]
        %v3041 = vld [vmem:[%s2833 + $0x38] sm:$0x1]
        %v3042 = vld [vmem:[%s2833 + $0x3c] sm:$0xf]
        %v3043 = vld [vmem:[%s2833 + $0x40] sm:$0xf]
        %v3044 = vld [vmem:[%s2833 + $0x44] sm:$0x1]
        %v3045 = vld [vmem:[%s2833 + $0x48] sm:$0xf]
        %v3046 = vld [vmem:[%s2833 + $0x4c] sm:$0xf]
        %v3047 = vld [vmem:[%s2833 + $0x50] sm:$0x1]
        %v3048 = vld [vmem:[%s2833 + $0x54] sm:$0xf]
        %v3049 = vld [vmem:[%s2833 + $0x58] sm:$0xf]
        %v3050 = vld [vmem:[%s2833 + $0x5c] sm:$0x1]
        %v3051 = vld [vmem:[%s2833 + $0x60] sm:$0xf]
        %v3052 = vld [vmem:[%s2833 + $0x64] sm:$0xf]
        %v3053 = vld [vmem:[%s2833 + $0x68] sm:$0x1]
        %v3054 = vld [vmem:[%s2833 + $0x6c] sm:$0xf]
        %v3055 = vld [vmem:[%s2833 + $0x70] sm:$0xf]
        %v3056 = vld [vmem:[%s2833 + $0x74] sm:$0x1]
        %v3057 = vld [vmem:[%s2833 + $0x78] sm:$0xf]
        %v3058 = vld [vmem:[%s2833 + $0x7c] sm:$0xf]
        %v3059 = vld [vmem:[%s2833 + $0x80] sm:$0x1]
        %v3060 = vld [vmem:[%s2833 + $0x84] sm:$0xf]
        %v3061 = vld [vmem:[%s2833 + $0x88] sm:$0xf]
        %v3062 = vld [vmem:[%s2833 + $0x8c] sm:$0x1]
        %v3063 = vld [vmem:[%s2833 + $0x90] sm:$0xf]
        %v3064 = vld [vmem:[%s2833 + $0x94] sm:$0xf]
        %v3065 = vld [vmem:[%s2833 + $0x98] sm:$0x1]
        %v3066 = vld [vmem:[%s2833 + $0x9c] sm:$0xf]
        %v3067 = vld [vmem:[%s2833 + $0xa0] sm:$0xf]
        %v3068 = vld [vmem:[%s2833 + $0xa4] sm:$0x1]
        %v3069 = vld [vmem:[%s2833 + $0xa8] sm:$0xf]
        %v3070 = vld [vmem:[%s2833 + $0xac] sm:$0xf]
        %v3071 = vld [vmem:[%s2833 + $0xb0] sm:$0x1]
        %v3072 = vld [vmem:[%s2833 + $0xb4] sm:$0xf]
        %v3073 = vld [vmem:[%s2833 + $0xb8] sm:$0xf]
        %v3074 = vld [vmem:[%s2833 + $0xbc] sm:$0x1]
        %v3076 = vshrl.u32 %v3027, 16
        %v3078 = vrot.slane %v3076, 4
        %v3079 = vshll.u32 %v3027, 16
        %v3081 = vrot.slane %v3079, 5
        %v3082 = vor.u32 %v3078, %v3081
        %v3083 = vrot.slane %v3082, 4
        %v3085 = vshll.u32 %v3028, 16
        %v3087 = vrot.slane %v3085, 5
        %v3088 = vsel %vm888, %v3083, %v3087
        %v3089 = vshrl.u32 %v3028, 16
        %v3091 = vrot.slane %v3089, 4
        %v3092 = vor.u32 %v3091, %v3087
        %v3093 = vrot.slane %v3092, 4
        %v3095 = vshll.u32 %v3029, 16
        %v3097 = vrot.slane %v3095, 5
        %v3098 = vsel %vm888, %v3093, %v3097
        %v3100 = vshrl.u32 %v3030, 16
        %v3102 = vrot.slane %v3100, 4
        %v3103 = vshll.u32 %v3030, 16
        %v3105 = vrot.slane %v3103, 5
        %v3106 = vor.u32 %v3102, %v3105
        %v3107 = vrot.slane %v3106, 4
        %v3109 = vshll.u32 %v3031, 16
        %v3111 = vrot.slane %v3109, 5
        %v3112 = vsel %vm888, %v3107, %v3111
        %v3113 = vshrl.u32 %v3031, 16
        %v3115 = vrot.slane %v3113, 4
        %v3116 = vor.u32 %v3115, %v3111
        %v3117 = vrot.slane %v3116, 4
        %v3119 = vshll.u32 %v3032, 16
        %v3121 = vrot.slane %v3119, 5
        %v3122 = vsel %vm888, %v3117, %v3121
        %v3124 = vshrl.u32 %v3033, 16
        %v3126 = vrot.slane %v3124, 4
        %v3127 = vshll.u32 %v3033, 16
        %v3129 = vrot.slane %v3127, 5
        %v3130 = vor.u32 %v3126, %v3129
        %v3131 = vrot.slane %v3130, 4
        %v3133 = vshll.u32 %v3034, 16
        %v3135 = vrot.slane %v3133, 5
        %v3136 = vsel %vm888, %v3131, %v3135
        %v3137 = vshrl.u32 %v3034, 16
        %v3139 = vrot.slane %v3137, 4
        %v3140 = vor.u32 %v3139, %v3135
        %v3141 = vrot.slane %v3140, 4
        %v3143 = vshll.u32 %v3035, 16
        %v3145 = vrot.slane %v3143, 5
        %v3146 = vsel %vm888, %v3141, %v3145
        %v3148 = vshrl.u32 %v3036, 16
        %v3150 = vrot.slane %v3148, 4
        %v3151 = vshll.u32 %v3036, 16
        %v3153 = vrot.slane %v3151, 5
        %v3154 = vor.u32 %v3150, %v3153
        %v3155 = vrot.slane %v3154, 4
        %v3157 = vshll.u32 %v3037, 16
        %v3159 = vrot.slane %v3157, 5
        %v3160 = vsel %vm888, %v3155, %v3159
        %v3161 = vshrl.u32 %v3037, 16
        %v3163 = vrot.slane %v3161, 4
        %v3164 = vor.u32 %v3163, %v3159
        %v3165 = vrot.slane %v3164, 4
        %v3167 = vshll.u32 %v3038, 16
        %v3169 = vrot.slane %v3167, 5
        %v3170 = vsel %vm888, %v3165, %v3169
        %v3172 = vshrl.u32 %v3039, 16
        %v3174 = vrot.slane %v3172, 4
        %v3175 = vshll.u32 %v3039, 16
        %v3177 = vrot.slane %v3175, 5
        %v3178 = vor.u32 %v3174, %v3177
        %v3179 = vrot.slane %v3178, 4
        %v3181 = vshll.u32 %v3040, 16
        %v3183 = vrot.slane %v3181, 5
        %v3184 = vsel %vm888, %v3179, %v3183
        %v3185 = vshrl.u32 %v3040, 16
        %v3187 = vrot.slane %v3185, 4
        %v3188 = vor.u32 %v3187, %v3183
        %v3189 = vrot.slane %v3188, 4
        %v3191 = vshll.u32 %v3041, 16
        %v3193 = vrot.slane %v3191, 5
        %v3194 = vsel %vm888, %v3189, %v3193
        %v3196 = vshrl.u32 %v3042, 16
        %v3198 = vrot.slane %v3196, 4
        %v3199 = vshll.u32 %v3042, 16
        %v3201 = vrot.slane %v3199, 5
        %v3202 = vor.u32 %v3198, %v3201
        %v3203 = vrot.slane %v3202, 4
        %v3205 = vshll.u32 %v3043, 16
        %v3207 = vrot.slane %v3205, 5
        %v3208 = vsel %vm888, %v3203, %v3207
        %v3209 = vshrl.u32 %v3043, 16
        %v3211 = vrot.slane %v3209, 4
        %v3212 = vor.u32 %v3211, %v3207
        %v3213 = vrot.slane %v3212, 4
        %v3215 = vshll.u32 %v3044, 16
        %v3217 = vrot.slane %v3215, 5
        %v3218 = vsel %vm888, %v3213, %v3217
        %v3220 = vshrl.u32 %v3045, 16
        %v3222 = vrot.slane %v3220, 4
        %v3223 = vshll.u32 %v3045, 16
        %v3225 = vrot.slane %v3223, 5
        %v3226 = vor.u32 %v3222, %v3225
        %v3227 = vrot.slane %v3226, 4
        %v3229 = vshll.u32 %v3046, 16
        %v3231 = vrot.slane %v3229, 5
        %v3232 = vsel %vm888, %v3227, %v3231
        %v3233 = vshrl.u32 %v3046, 16
        %v3235 = vrot.slane %v3233, 4
        %v3236 = vor.u32 %v3235, %v3231
        %v3237 = vrot.slane %v3236, 4
        %v3239 = vshll.u32 %v3047, 16
        %v3241 = vrot.slane %v3239, 5
        %v3242 = vsel %vm888, %v3237, %v3241
        %v3244 = vshrl.u32 %v3048, 16
        %v3246 = vrot.slane %v3244, 4
        %v3247 = vshll.u32 %v3048, 16
        %v3249 = vrot.slane %v3247, 5
        %v3250 = vor.u32 %v3246, %v3249
        %v3251 = vrot.slane %v3250, 4
        %v3253 = vshll.u32 %v3049, 16
        %v3255 = vrot.slane %v3253, 5
        %v3256 = vsel %vm888, %v3251, %v3255
        %v3257 = vshrl.u32 %v3049, 16
        %v3259 = vrot.slane %v3257, 4
        %v3260 = vor.u32 %v3259, %v3255
        %v3261 = vrot.slane %v3260, 4
        %v3263 = vshll.u32 %v3050, 16
        %v3265 = vrot.slane %v3263, 5
        %v3266 = vsel %vm888, %v3261, %v3265
        %v3268 = vshrl.u32 %v3051, 16
        %v3270 = vrot.slane %v3268, 4
        %v3271 = vshll.u32 %v3051, 16
        %v3273 = vrot.slane %v3271, 5
        %v3274 = vor.u32 %v3270, %v3273
        %v3275 = vrot.slane %v3274, 4
        %v3277 = vshll.u32 %v3052, 16
        %v3279 = vrot.slane %v3277, 5
        %v3280 = vsel %vm888, %v3275, %v3279
        %v3281 = vshrl.u32 %v3052, 16
        %v3283 = vrot.slane %v3281, 4
        %v3284 = vor.u32 %v3283, %v3279
        %v3285 = vrot.slane %v3284, 4
        %v3287 = vshll.u32 %v3053, 16
        %v3289 = vrot.slane %v3287, 5
        %v3290 = vsel %vm888, %v3285, %v3289
        %v3292 = vshrl.u32 %v3054, 16
        %v3294 = vrot.slane %v3292, 4
        %v3295 = vshll.u32 %v3054, 16
        %v3297 = vrot.slane %v3295, 5
        %v3298 = vor.u32 %v3294, %v3297
        %v3299 = vrot.slane %v3298, 4
        %v3301 = vshll.u32 %v3055, 16
        %v3303 = vrot.slane %v3301, 5
        %v3304 = vsel %vm888, %v3299, %v3303
        %v3305 = vshrl.u32 %v3055, 16
        %v3307 = vrot.slane %v3305, 4
        %v3308 = vor.u32 %v3307, %v3303
        %v3309 = vrot.slane %v3308, 4
        %v3311 = vshll.u32 %v3056, 16
        %v3313 = vrot.slane %v3311, 5
        %v3314 = vsel %vm888, %v3309, %v3313
        %v3316 = vshrl.u32 %v3057, 16
        %v3318 = vrot.slane %v3316, 4
        %v3319 = vshll.u32 %v3057, 16
        %v3321 = vrot.slane %v3319, 5
        %v3322 = vor.u32 %v3318, %v3321
        %v3323 = vrot.slane %v3322, 4
        %v3325 = vshll.u32 %v3058, 16
        %v3327 = vrot.slane %v3325, 5
        %v3328 = vsel %vm888, %v3323, %v3327
        %v3329 = vshrl.u32 %v3058, 16
        %v3331 = vrot.slane %v3329, 4
        %v3332 = vor.u32 %v3331, %v3327
        %v3333 = vrot.slane %v3332, 4
        %v3335 = vshll.u32 %v3059, 16
        %v3337 = vrot.slane %v3335, 5
        %v3338 = vsel %vm888, %v3333, %v3337
        %v3340 = vshrl.u32 %v3060, 16
        %v3342 = vrot.slane %v3340, 4
        %v3343 = vshll.u32 %v3060, 16
        %v3345 = vrot.slane %v3343, 5
        %v3346 = vor.u32 %v3342, %v3345
        %v3347 = vrot.slane %v3346, 4
        %v3349 = vshll.u32 %v3061, 16
        %v3351 = vrot.slane %v3349, 5
        %v3352 = vsel %vm888, %v3347, %v3351
        %v3353 = vshrl.u32 %v3061, 16
        %v3355 = vrot.slane %v3353, 4
        %v3356 = vor.u32 %v3355, %v3351
        %v3357 = vrot.slane %v3356, 4
        %v3359 = vshll.u32 %v3062, 16
        %v3361 = vrot.slane %v3359, 5
        %v3362 = vsel %vm888, %v3357, %v3361
        %v3364 = vshrl.u32 %v3063, 16
        %v3366 = vrot.slane %v3364, 4
        %v3367 = vshll.u32 %v3063, 16
        %v3369 = vrot.slane %v3367, 5
        %v3370 = vor.u32 %v3366, %v3369
        %v3371 = vrot.slane %v3370, 4
        %v3373 = vshll.u32 %v3064, 16
        %v3375 = vrot.slane %v3373, 5
        %v3376 = vsel %vm888, %v3371, %v3375
        %v3377 = vshrl.u32 %v3064, 16
        %v3379 = vrot.slane %v3377, 4
        %v3380 = vor.u32 %v3379, %v3375
        %v3381 = vrot.slane %v3380, 4
        %v3383 = vshll.u32 %v3065, 16
        %v3385 = vrot.slane %v3383, 5
        %v3386 = vsel %vm888, %v3381, %v3385
        %v3388 = vshrl.u32 %v3066, 16
        %v3390 = vrot.slane %v3388, 4
        %v3391 = vshll.u32 %v3066, 16
        %v3393 = vrot.slane %v3391, 5
        %v3394 = vor.u32 %v3390, %v3393
        %v3395 = vrot.slane %v3394, 4
        %v3397 = vshll.u32 %v3067, 16
        %v3399 = vrot.slane %v3397, 5
        %v3400 = vsel %vm888, %v3395, %v3399
        %v3401 = vshrl.u32 %v3067, 16
        %v3403 = vrot.slane %v3401, 4
        %v3404 = vor.u32 %v3403, %v3399
        %v3405 = vrot.slane %v3404, 4
        %v3407 = vshll.u32 %v3068, 16
        %v3409 = vrot.slane %v3407, 5
        %v3410 = vsel %vm888, %v3405, %v3409
        %v3412 = vshrl.u32 %v3069, 16
        %v3414 = vrot.slane %v3412, 4
        %v3415 = vshll.u32 %v3069, 16
        %v3417 = vrot.slane %v3415, 5
        %v3418 = vor.u32 %v3414, %v3417
        %v3419 = vrot.slane %v3418, 4
        %v3421 = vshll.u32 %v3070, 16
        %v3423 = vrot.slane %v3421, 5
        %v3424 = vsel %vm888, %v3419, %v3423
        %v3425 = vshrl.u32 %v3070, 16
        %v3427 = vrot.slane %v3425, 4
        %v3428 = vor.u32 %v3427, %v3423
        %v3429 = vrot.slane %v3428, 4
        %v3431 = vshll.u32 %v3071, 16
        %v3433 = vrot.slane %v3431, 5
        %v3434 = vsel %vm888, %v3429, %v3433
        %v3436 = vshrl.u32 %v3072, 16
        %v3438 = vrot.slane %v3436, 4
        %v3439 = vshll.u32 %v3072, 16
        %v3441 = vrot.slane %v3439, 5
        %v3442 = vor.u32 %v3438, %v3441
        %v3443 = vrot.slane %v3442, 4
        %v3445 = vshll.u32 %v3073, 16
        %v3447 = vrot.slane %v3445, 5
        %v3448 = vsel %vm888, %v3443, %v3447
        %v3449 = vshrl.u32 %v3073, 16
        %v3451 = vrot.slane %v3449, 4
        %v3452 = vor.u32 %v3451, %v3447
        %v3453 = vrot.slane %v3452, 4
        %v3455 = vshll.u32 %v3074, 16
        %v3457 = vrot.slane %v3455, 5
        %v3458 = vsel %vm888, %v3453, %v3457
        %3459 = vrot.lane.b32.xlu0 %v3088, 28
        %v3460 = vpop.permute.xlu0 %3459
        %3461 = vrot.lane.b32.xlu0 %v3098, 28
        %v3462 = vpop.permute.xlu0 %3461
        %3463 = vrot.lane.b32.xlu0 %v3112, 28
        %v3464 = vpop.permute.xlu0 %3463
        %3465 = vrot.lane.b32.xlu0 %v3122, 28
        %v3466 = vpop.permute.xlu0 %3465
        %3467 = vrot.lane.b32.xlu0 %v3136, 28
        %v3468 = vpop.permute.xlu0 %3467
        %3469 = vrot.lane.b32.xlu0 %v3146, 28
        %v3470 = vpop.permute.xlu0 %3469
        %3471 = vrot.lane.b32.xlu0 %v3160, 28
        %v3472 = vpop.permute.xlu0 %3471
        %3473 = vrot.lane.b32.xlu0 %v3170, 28
        %v3474 = vpop.permute.xlu0 %3473
        %3475 = vrot.lane.b32.xlu0 %v3184, 28
        %v3476 = vpop.permute.xlu0 %3475
        %3477 = vrot.lane.b32.xlu0 %v3194, 28
        %v3478 = vpop.permute.xlu0 %3477
        %3479 = vrot.lane.b32.xlu0 %v3208, 28
        %v3480 = vpop.permute.xlu0 %3479
        %3481 = vrot.lane.b32.xlu0 %v3218, 28
        %v3482 = vpop.permute.xlu0 %3481
        %3483 = vrot.lane.b32.xlu0 %v3232, 28
        %v3484 = vpop.permute.xlu0 %3483
        %3485 = vrot.lane.b32.xlu0 %v3242, 28
        %v3486 = vpop.permute.xlu0 %3485
        %3487 = vrot.lane.b32.xlu0 %v3256, 28
        %v3488 = vpop.permute.xlu0 %3487
        %3489 = vrot.lane.b32.xlu0 %v3266, 28
        %v3490 = vpop.permute.xlu0 %3489
        %3491 = vrot.lane.b32.xlu0 %v3280, 28
        %v3492 = vpop.permute.xlu0 %3491
        %3493 = vrot.lane.b32.xlu0 %v3290, 28
        %v3494 = vpop.permute.xlu0 %3493
        %3495 = vrot.lane.b32.xlu0 %v3304, 28
        %v3496 = vpop.permute.xlu0 %3495
        %3497 = vrot.lane.b32.xlu0 %v3314, 28
        %v3498 = vpop.permute.xlu0 %3497
        %3499 = vrot.lane.b32.xlu0 %v3328, 28
        %v3500 = vpop.permute.xlu0 %3499
        %3501 = vrot.lane.b32.xlu0 %v3338, 28
        %v3502 = vpop.permute.xlu0 %3501
        %3503 = vrot.lane.b32.xlu0 %v3352, 28
        %v3504 = vpop.permute.xlu0 %3503
        %3505 = vrot.lane.b32.xlu0 %v3362, 28
        %v3506 = vpop.permute.xlu0 %3505
        %3507 = vrot.lane.b32.xlu0 %v3376, 28
        %v3508 = vpop.permute.xlu0 %3507
        %3509 = vrot.lane.b32.xlu0 %v3386, 28
        %v3510 = vpop.permute.xlu0 %3509
        %3511 = vrot.lane.b32.xlu0 %v3400, 28
        %v3512 = vpop.permute.xlu0 %3511
        %3513 = vrot.lane.b32.xlu0 %v3410, 28
        %v3514 = vpop.permute.xlu0 %3513
        %3515 = vrot.lane.b32.xlu0 %v3424, 28
        %v3516 = vpop.permute.xlu0 %3515
        %3517 = vrot.lane.b32.xlu0 %v3434, 28
        %v3518 = vpop.permute.xlu0 %3517
        %3519 = vrot.lane.b32.xlu0 %v3448, 28
        %v3520 = vpop.permute.xlu0 %3519
        %3521 = vrot.lane.b32.xlu0 %v3458, 28
        %v3522 = vpop.permute.xlu0 %3521
        %vm3555 = vcmask 257248
        %3556 = vst.msk [vmem:[#allocation3] sm:$0xf] %vm3555, %v3460
        %3557 = vst.msk [vmem:[#allocation3 + $0x4] sm:$0xf] %vm3555, %v3462
        %3558 = vst.msk [vmem:[#allocation3 + $0x8] sm:$0xf] %vm3555, %v3464
        %3559 = vst.msk [vmem:[#allocation3 + $0xc] sm:$0xf] %vm3555, %v3466
        %3560 = vst.msk [vmem:[#allocation3 + $0x10] sm:$0xf] %vm3555, %v3468
        %3561 = vst.msk [vmem:[#allocation3 + $0x14] sm:$0xf] %vm3555, %v3470
        %3562 = vst.msk [vmem:[#allocation3 + $0x18] sm:$0xf] %vm3555, %v3472
        %3563 = vst.msk [vmem:[#allocation3 + $0x1c] sm:$0xf] %vm3555, %v3474
        %3564 = vst.msk [vmem:[#allocation3 + $0x20] sm:$0xf] %vm3555, %v3476
        %3565 = vst.msk [vmem:[#allocation3 + $0x24] sm:$0xf] %vm3555, %v3478
        %3566 = vst.msk [vmem:[#allocation3 + $0x28] sm:$0xf] %vm3555, %v3480
        %3567 = vst.msk [vmem:[#allocation3 + $0x2c] sm:$0xf] %vm3555, %v3482
        %3568 = vst.msk [vmem:[#allocation3 + $0x30] sm:$0xf] %vm3555, %v3484
        %3569 = vst.msk [vmem:[#allocation3 + $0x34] sm:$0xf] %vm3555, %v3486
        %3570 = vst.msk [vmem:[#allocation3 + $0x38] sm:$0xf] %vm3555, %v3488
        %3571 = vst.msk [vmem:[#allocation3 + $0x3c] sm:$0xf] %vm3555, %v3490
        %3572 = vst.msk [vmem:[#allocation3 + $0x40] sm:$0xf] %vm3555, %v3492
        %3573 = vst.msk [vmem:[#allocation3 + $0x44] sm:$0xf] %vm3555, %v3494
        %3574 = vst.msk [vmem:[#allocation3 + $0x48] sm:$0xf] %vm3555, %v3496
        %3575 = vst.msk [vmem:[#allocation3 + $0x4c] sm:$0xf] %vm3555, %v3498
        %3576 = vst.msk [vmem:[#allocation3 + $0x50] sm:$0xf] %vm3555, %v3500
        %3577 = vst.msk [vmem:[#allocation3 + $0x54] sm:$0xf] %vm3555, %v3502
        %3578 = vst.msk [vmem:[#allocation3 + $0x58] sm:$0xf] %vm3555, %v3504
        %3579 = vst.msk [vmem:[#allocation3 + $0x5c] sm:$0xf] %vm3555, %v3506
        %3580 = vst.msk [vmem:[#allocation3 + $0x60] sm:$0xf] %vm3555, %v3508
        %3581 = vst.msk [vmem:[#allocation3 + $0x64] sm:$0xf] %vm3555, %v3510
        %3582 = vst.msk [vmem:[#allocation3 + $0x68] sm:$0xf] %vm3555, %v3512
        %3583 = vst.msk [vmem:[#allocation3 + $0x6c] sm:$0xf] %vm3555, %v3514
        %3584 = vst.msk [vmem:[#allocation3 + $0x70] sm:$0xf] %vm3555, %v3516
        %3585 = vst.msk [vmem:[#allocation3 + $0x74] sm:$0xf] %vm3555, %v3518
        %3586 = vst.msk [vmem:[#allocation3 + $0x78] sm:$0xf] %vm3555, %v3520
        %3587 = vst.msk [vmem:[#allocation3 + $0x7c] sm:$0xf] %vm3555, %v3522
        %v3588 = vld [vmem:[%s2833] sm:$0xe]
        %v3589 = vld [vmem:[%s2833 + $0x4] sm:$0xf]
        %v3590 = vld [vmem:[%s2833 + $0x8] sm:$0x1]
        %v3591 = vld [vmem:[%s2833 + $0xc] sm:$0xe]
        %v3592 = vld [vmem:[%s2833 + $0x10] sm:$0xf]
        %v3593 = vld [vmem:[%s2833 + $0x14] sm:$0x1]
        %v3594 = vld [vmem:[%s2833 + $0x18] sm:$0xe]
        %v3595 = vld [vmem:[%s2833 + $0x1c] sm:$0xf]
        %v3596 = vld [vmem:[%s2833 + $0x20] sm:$0x1]
        %v3597 = vld [vmem:[%s2833 + $0x24] sm:$0xe]
        %v3598 = vld [vmem:[%s2833 + $0x28] sm:$0xf]
        %v3599 = vld [vmem:[%s2833 + $0x2c] sm:$0x1]
        %v3600 = vld [vmem:[%s2833 + $0x30] sm:$0xe]
        %v3601 = vld [vmem:[%s2833 + $0x34] sm:$0xf]
        %v3602 = vld [vmem:[%s2833 + $0x38] sm:$0x1]
        %v3603 = vld [vmem:[%s2833 + $0x3c] sm:$0xe]
        %v3604 = vld [vmem:[%s2833 + $0x40] sm:$0xf]
        %v3605 = vld [vmem:[%s2833 + $0x44] sm:$0x1]
        %v3606 = vld [vmem:[%s2833 + $0x48] sm:$0xe]
        %v3607 = vld [vmem:[%s2833 + $0x4c] sm:$0xf]
        %v3608 = vld [vmem:[%s2833 + $0x50] sm:$0x1]
        %v3609 = vld [vmem:[%s2833 + $0x54] sm:$0xe]
        %v3610 = vld [vmem:[%s2833 + $0x58] sm:$0xf]
        %v3611 = vld [vmem:[%s2833 + $0x5c] sm:$0x1]
        %v3612 = vld [vmem:[%s2833 + $0x60] sm:$0xe]
        %v3613 = vld [vmem:[%s2833 + $0x64] sm:$0xf]
        %v3614 = vld [vmem:[%s2833 + $0x68] sm:$0x1]
        %v3615 = vld [vmem:[%s2833 + $0x6c] sm:$0xe]
        %v3616 = vld [vmem:[%s2833 + $0x70] sm:$0xf]
        %v3617 = vld [vmem:[%s2833 + $0x74] sm:$0x1]
        %v3618 = vld [vmem:[%s2833 + $0x78] sm:$0xe]
        %v3619 = vld [vmem:[%s2833 + $0x7c] sm:$0xf]
        %v3620 = vld [vmem:[%s2833 + $0x80] sm:$0x1]
        %v3621 = vld [vmem:[%s2833 + $0x84] sm:$0xe]
        %v3622 = vld [vmem:[%s2833 + $0x88] sm:$0xf]
        %v3623 = vld [vmem:[%s2833 + $0x8c] sm:$0x1]
        %v3624 = vld [vmem:[%s2833 + $0x90] sm:$0xe]
        %v3625 = vld [vmem:[%s2833 + $0x94] sm:$0xf]
        %v3626 = vld [vmem:[%s2833 + $0x98] sm:$0x1]
        %v3627 = vld [vmem:[%s2833 + $0x9c] sm:$0xe]
        %v3628 = vld [vmem:[%s2833 + $0xa0] sm:$0xf]
        %v3629 = vld [vmem:[%s2833 + $0xa4] sm:$0x1]
        %v3630 = vld [vmem:[%s2833 + $0xa8] sm:$0xe]
        %v3631 = vld [vmem:[%s2833 + $0xac] sm:$0xf]
        %v3632 = vld [vmem:[%s2833 + $0xb0] sm:$0x1]
        %v3633 = vld [vmem:[%s2833 + $0xb4] sm:$0xe]
        %v3634 = vld [vmem:[%s2833 + $0xb8] sm:$0xf]
        %v3635 = vld [vmem:[%s2833 + $0xbc] sm:$0x1]
        %v3684 = vrot.slane %v3588, 5
        %v3685 = vrot.slane %v3684, 4
        %v3686 = vrot.slane %v3589, 5
        %v3687 = vsel %vm1500, %v3685, %v3686
        %v3688 = vrot.slane %v3686, 4
        %v3689 = vrot.slane %v3590, 5
        %v3690 = vsel %vm1500, %v3688, %v3689
        %v3691 = vrot.slane %v3591, 5
        %v3692 = vrot.slane %v3691, 4
        %v3693 = vrot.slane %v3592, 5
        %v3694 = vsel %vm1500, %v3692, %v3693
        %v3695 = vrot.slane %v3693, 4
        %v3696 = vrot.slane %v3593, 5
        %v3697 = vsel %vm1500, %v3695, %v3696
        %v3698 = vrot.slane %v3594, 5
        %v3699 = vrot.slane %v3698, 4
        %v3700 = vrot.slane %v3595, 5
        %v3701 = vsel %vm1500, %v3699, %v3700
        %v3702 = vrot.slane %v3700, 4
        %v3703 = vrot.slane %v3596, 5
        %v3704 = vsel %vm1500, %v3702, %v3703
        %v3705 = vrot.slane %v3597, 5
        %v3706 = vrot.slane %v3705, 4
        %v3707 = vrot.slane %v3598, 5
        %v3708 = vsel %vm1500, %v3706, %v3707
        %v3709 = vrot.slane %v3707, 4
        %v3710 = vrot.slane %v3599, 5
        %v3711 = vsel %vm1500, %v3709, %v3710
        %v3712 = vrot.slane %v3600, 5
        %v3713 = vrot.slane %v3712, 4
        %v3714 = vrot.slane %v3601, 5
        %v3715 = vsel %vm1500, %v3713, %v3714
        %v3716 = vrot.slane %v3714, 4
        %v3717 = vrot.slane %v3602, 5
        %v3718 = vsel %vm1500, %v3716, %v3717
        %v3719 = vrot.slane %v3603, 5
        %v3720 = vrot.slane %v3719, 4
        %v3721 = vrot.slane %v3604, 5
        %v3722 = vsel %vm1500, %v3720, %v3721
        %v3723 = vrot.slane %v3721, 4
        %v3724 = vrot.slane %v3605, 5
        %v3725 = vsel %vm1500, %v3723, %v3724
        %v3726 = vrot.slane %v3606, 5
        %v3727 = vrot.slane %v3726, 4
        %v3728 = vrot.slane %v3607, 5
        %v3729 = vsel %vm1500, %v3727, %v3728
        %v3730 = vrot.slane %v3728, 4
        %v3731 = vrot.slane %v3608, 5
        %v3732 = vsel %vm1500, %v3730, %v3731
        %v3733 = vrot.slane %v3609, 5
        %v3734 = vrot.slane %v3733, 4
        %v3735 = vrot.slane %v3610, 5
        %v3736 = vsel %vm1500, %v3734, %v3735
        %v3737 = vrot.slane %v3735, 4
        %v3738 = vrot.slane %v3611, 5
        %v3739 = vsel %vm1500, %v3737, %v3738
        %v3740 = vrot.slane %v3612, 5
        %v3741 = vrot.slane %v3740, 4
        %v3742 = vrot.slane %v3613, 5
        %v3743 = vsel %vm1500, %v3741, %v3742
        %v3744 = vrot.slane %v3742, 4
        %v3745 = vrot.slane %v3614, 5
        %v3746 = vsel %vm1500, %v3744, %v3745
        %v3747 = vrot.slane %v3615, 5
        %v3748 = vrot.slane %v3747, 4
        %v3749 = vrot.slane %v3616, 5
        %v3750 = vsel %vm1500, %v3748, %v3749
        %v3751 = vrot.slane %v3749, 4
        %v3752 = vrot.slane %v3617, 5
        %v3753 = vsel %vm1500, %v3751, %v3752
        %v3754 = vrot.slane %v3618, 5
        %v3755 = vrot.slane %v3754, 4
        %v3756 = vrot.slane %v3619, 5
        %v3757 = vsel %vm1500, %v3755, %v3756
        %v3758 = vrot.slane %v3756, 4
        %v3759 = vrot.slane %v3620, 5
        %v3760 = vsel %vm1500, %v3758, %v3759
        %v3761 = vrot.slane %v3621, 5
        %v3762 = vrot.slane %v3761, 4
        %v3763 = vrot.slane %v3622, 5
        %v3764 = vsel %vm1500, %v3762, %v3763
        %v3765 = vrot.slane %v3763, 4
        %v3766 = vrot.slane %v3623, 5
        %v3767 = vsel %vm1500, %v3765, %v3766
        %v3768 = vrot.slane %v3624, 5
        %v3769 = vrot.slane %v3768, 4
        %v3770 = vrot.slane %v3625, 5
        %v3771 = vsel %vm1500, %v3769, %v3770
        %v3772 = vrot.slane %v3770, 4
        %v3773 = vrot.slane %v3626, 5
        %v3774 = vsel %vm1500, %v3772, %v3773
        %v3775 = vrot.slane %v3627, 5
        %v3776 = vrot.slane %v3775, 4
        %v3777 = vrot.slane %v3628, 5
        %v3778 = vsel %vm1500, %v3776, %v3777
        %v3779 = vrot.slane %v3777, 4
        %v3780 = vrot.slane %v3629, 5
        %v3781 = vsel %vm1500, %v3779, %v3780
        %v3782 = vrot.slane %v3630, 5
        %v3783 = vrot.slane %v3782, 4
        %v3784 = vrot.slane %v3631, 5
        %v3785 = vsel %vm1500, %v3783, %v3784
        %v3786 = vrot.slane %v3784, 4
        %v3787 = vrot.slane %v3632, 5
        %v3788 = vsel %vm1500, %v3786, %v3787
        %v3789 = vrot.slane %v3633, 5
        %v3790 = vrot.slane %v3789, 4
        %v3791 = vrot.slane %v3634, 5
        %v3792 = vsel %vm1500, %v3790, %v3791
        %v3793 = vrot.slane %v3791, 4
        %v3794 = vrot.slane %v3635, 5
        %v3795 = vsel %vm1500, %v3793, %v3794
        %3796 = vrot.lane.b32.xlu0 %v3687, 32
        %v3797 = vpop.permute.xlu0 %3796
        %3798 = vrot.lane.b32.xlu0 %v3690, 32
        %v3799 = vpop.permute.xlu0 %3798
        %3800 = vrot.lane.b32.xlu0 %v3694, 32
        %v3801 = vpop.permute.xlu0 %3800
        %3802 = vrot.lane.b32.xlu0 %v3697, 32
        %v3803 = vpop.permute.xlu0 %3802
        %3804 = vrot.lane.b32.xlu0 %v3701, 32
        %v3805 = vpop.permute.xlu0 %3804
        %3806 = vrot.lane.b32.xlu0 %v3704, 32
        %v3807 = vpop.permute.xlu0 %3806
        %3808 = vrot.lane.b32.xlu0 %v3708, 32
        %v3809 = vpop.permute.xlu0 %3808
        %3810 = vrot.lane.b32.xlu0 %v3711, 32
        %v3811 = vpop.permute.xlu0 %3810
        %3812 = vrot.lane.b32.xlu0 %v3715, 32
        %v3813 = vpop.permute.xlu0 %3812
        %3814 = vrot.lane.b32.xlu0 %v3718, 32
        %v3815 = vpop.permute.xlu0 %3814
        %3816 = vrot.lane.b32.xlu0 %v3722, 32
        %v3817 = vpop.permute.xlu0 %3816
        %3818 = vrot.lane.b32.xlu0 %v3725, 32
        %v3819 = vpop.permute.xlu0 %3818
        %3820 = vrot.lane.b32.xlu0 %v3729, 32
        %v3821 = vpop.permute.xlu0 %3820
        %3822 = vrot.lane.b32.xlu0 %v3732, 32
        %v3823 = vpop.permute.xlu0 %3822
        %3824 = vrot.lane.b32.xlu0 %v3736, 32
        %v3825 = vpop.permute.xlu0 %3824
        %3826 = vrot.lane.b32.xlu0 %v3739, 32
        %v3827 = vpop.permute.xlu0 %3826
        %3828 = vrot.lane.b32.xlu0 %v3743, 32
        %v3829 = vpop.permute.xlu0 %3828
        %3830 = vrot.lane.b32.xlu0 %v3746, 32
        %v3831 = vpop.permute.xlu0 %3830
        %3832 = vrot.lane.b32.xlu0 %v3750, 32
        %v3833 = vpop.permute.xlu0 %3832
        %3834 = vrot.lane.b32.xlu0 %v3753, 32
        %v3835 = vpop.permute.xlu0 %3834
        %3836 = vrot.lane.b32.xlu0 %v3757, 32
        %v3837 = vpop.permute.xlu0 %3836
        %3838 = vrot.lane.b32.xlu0 %v3760, 32
        %v3839 = vpop.permute.xlu0 %3838
        %3840 = vrot.lane.b32.xlu0 %v3764, 32
        %v3841 = vpop.permute.xlu0 %3840
        %3842 = vrot.lane.b32.xlu0 %v3767, 32
        %v3843 = vpop.permute.xlu0 %3842
        %3844 = vrot.lane.b32.xlu0 %v3771, 32
        %v3845 = vpop.permute.xlu0 %3844
        %3846 = vrot.lane.b32.xlu0 %v3774, 32
        %v3847 = vpop.permute.xlu0 %3846
        %3848 = vrot.lane.b32.xlu0 %v3778, 32
        %v3849 = vpop.permute.xlu0 %3848
        %3850 = vrot.lane.b32.xlu0 %v3781, 32
        %v3851 = vpop.permute.xlu0 %3850
        %3852 = vrot.lane.b32.xlu0 %v3785, 32
        %v3853 = vpop.permute.xlu0 %3852
        %3854 = vrot.lane.b32.xlu0 %v3788, 32
        %v3855 = vpop.permute.xlu0 %3854
        %3856 = vrot.lane.b32.xlu0 %v3792, 32
        %v3857 = vpop.permute.xlu0 %3856
        %3858 = vrot.lane.b32.xlu0 %v3795, 32
        %v3859 = vpop.permute.xlu0 %3858
        %vm3892 = vcmask 290048
        %3893 = vst.msk [vmem:[#allocation3] sm:$0xf] %vm3892, %v3797
        %3894 = vst.msk [vmem:[#allocation3 + $0x4] sm:$0xf] %vm3892, %v3799
        %3895 = vst.msk [vmem:[#allocation3 + $0x8] sm:$0xf] %vm3892, %v3801
        %3896 = vst.msk [vmem:[#allocation3 + $0xc] sm:$0xf] %vm3892, %v3803
        %3897 = vst.msk [vmem:[#allocation3 + $0x10] sm:$0xf] %vm3892, %v3805
        %3898 = vst.msk [vmem:[#allocation3 + $0x14] sm:$0xf] %vm3892, %v3807
        %3899 = vst.msk [vmem:[#allocation3 + $0x18] sm:$0xf] %vm3892, %v3809
        %3900 = vst.msk [vmem:[#allocation3 + $0x1c] sm:$0xf] %vm3892, %v3811
        %3901 = vst.msk [vmem:[#allocation3 + $0x20] sm:$0xf] %vm3892, %v3813
        %3902 = vst.msk [vmem:[#allocation3 + $0x24] sm:$0xf] %vm3892, %v3815
        %3903 = vst.msk [vmem:[#allocation3 + $0x28] sm:$0xf] %vm3892, %v3817
        %3904 = vst.msk [vmem:[#allocation3 + $0x2c] sm:$0xf] %vm3892, %v3819
        %3905 = vst.msk [vmem:[#allocation3 + $0x30] sm:$0xf] %vm3892, %v3821
        %3906 = vst.msk [vmem:[#allocation3 + $0x34] sm:$0xf] %vm3892, %v3823
        %3907 = vst.msk [vmem:[#allocation3 + $0x38] sm:$0xf] %vm3892, %v3825
        %3908 = vst.msk [vmem:[#allocation3 + $0x3c] sm:$0xf] %vm3892, %v3827
        %3909 = vst.msk [vmem:[#allocation3 + $0x40] sm:$0xf] %vm3892, %v3829
        %3910 = vst.msk [vmem:[#allocation3 + $0x44] sm:$0xf] %vm3892, %v3831
        %3911 = vst.msk [vmem:[#allocation3 + $0x48] sm:$0xf] %vm3892, %v3833
        %3912 = vst.msk [vmem:[#allocation3 + $0x4c] sm:$0xf] %vm3892, %v3835
        %3913 = vst.msk [vmem:[#allocation3 + $0x50] sm:$0xf] %vm3892, %v3837
        %3914 = vst.msk [vmem:[#allocation3 + $0x54] sm:$0xf] %vm3892, %v3839
        %3915 = vst.msk [vmem:[#allocation3 + $0x58] sm:$0xf] %vm3892, %v3841
        %3916 = vst.msk [vmem:[#allocation3 + $0x5c] sm:$0xf] %vm3892, %v3843
        %3917 = vst.msk [vmem:[#allocation3 + $0x60] sm:$0xf] %vm3892, %v3845
        %3918 = vst.msk [vmem:[#allocation3 + $0x64] sm:$0xf] %vm3892, %v3847
        %3919 = vst.msk [vmem:[#allocation3 + $0x68] sm:$0xf] %vm3892, %v3849
        %3920 = vst.msk [vmem:[#allocation3 + $0x6c] sm:$0xf] %vm3892, %v3851
        %3921 = vst.msk [vmem:[#allocation3 + $0x70] sm:$0xf] %vm3892, %v3853
        %3922 = vst.msk [vmem:[#allocation3 + $0x74] sm:$0xf] %vm3892, %v3855
        %3923 = vst.msk [vmem:[#allocation3 + $0x78] sm:$0xf] %vm3892, %v3857
        %3924 = vst.msk [vmem:[#allocation3 + $0x7c] sm:$0xf] %vm3892, %v3859
        %v3925 = vld [vmem:[#allocation3] sm:$0xf]
        %v3926 = vld [vmem:[#allocation3 + $0x4] sm:$0xf]
        %v3927 = vld [vmem:[#allocation3 + $0x8] sm:$0xf]
        %v3928 = vld [vmem:[#allocation3 + $0xc] sm:$0xf]
        %v3929 = vld [vmem:[#allocation3 + $0x10] sm:$0xf]
        %v3930 = vld [vmem:[#allocation3 + $0x14] sm:$0xf]
        %v3931 = vld [vmem:[#allocation3 + $0x18] sm:$0xf]
        %v3932 = vld [vmem:[#allocation3 + $0x1c] sm:$0xf]
        %v3933 = vld [vmem:[#allocation3 + $0x20] sm:$0xf]
        %v3934 = vld [vmem:[#allocation3 + $0x24] sm:$0xf]
        %v3935 = vld [vmem:[#allocation3 + $0x28] sm:$0xf]
        %v3936 = vld [vmem:[#allocation3 + $0x2c] sm:$0xf]
        %v3937 = vld [vmem:[#allocation3 + $0x30] sm:$0xf]
        %v3938 = vld [vmem:[#allocation3 + $0x34] sm:$0xf]
        %v3939 = vld [vmem:[#allocation3 + $0x38] sm:$0xf]
        %v3940 = vld [vmem:[#allocation3 + $0x3c] sm:$0xf]
        %v3941 = vld [vmem:[#allocation3 + $0x40] sm:$0xf]
        %v3942 = vld [vmem:[#allocation3 + $0x44] sm:$0xf]
        %v3943 = vld [vmem:[#allocation3 + $0x48] sm:$0xf]
        %v3944 = vld [vmem:[#allocation3 + $0x4c] sm:$0xf]
        %v3945 = vld [vmem:[#allocation3 + $0x50] sm:$0xf]
        %v3946 = vld [vmem:[#allocation3 + $0x54] sm:$0xf]
        %v3947 = vld [vmem:[#allocation3 + $0x58] sm:$0xf]
        %v3948 = vld [vmem:[#allocation3 + $0x5c] sm:$0xf]
        %v3949 = vld [vmem:[#allocation3 + $0x60] sm:$0xf]
        %v3950 = vld [vmem:[#allocation3 + $0x64] sm:$0xf]
        %v3951 = vld [vmem:[#allocation3 + $0x68] sm:$0xf]
        %v3952 = vld [vmem:[#allocation3 + $0x6c] sm:$0xf]
        %v3953 = vld [vmem:[#allocation3 + $0x70] sm:$0xf]
        %v3954 = vld [vmem:[#allocation3 + $0x74] sm:$0xf]
        %v3955 = vld [vmem:[#allocation3 + $0x78] sm:$0xf]
        %v3956 = vld [vmem:[#allocation3 + $0x7c] sm:$0xf]
        %v3957 = vld [vmem:[%s1] sm:$0xf]
        %v3958 = vld [vmem:[%s1 + $0x4] sm:$0xf]
        %v3959 = vld [vmem:[%s1 + $0x8] sm:$0xf]
        %v3960 = vld [vmem:[%s1 + $0xc] sm:$0xf]
        %v3961 = vld [vmem:[%s1 + $0x10] sm:$0x3]
        %v3994 = vunpack.c.l.b16 %v3925
        %v3995 = vunpack.c.l.b16 %v3926
        %v3996 = vunpack.c.l.b16 %v3927
        %v3997 = vunpack.c.l.b16 %v3928
        %v3998 = vunpack.c.l.b16 %v3929
        %v3999 = vunpack.c.l.b16 %v3930
        %v4000 = vunpack.c.l.b16 %v3931
        %v4001 = vunpack.c.l.b16 %v3932
        %v4002 = vunpack.c.l.b16 %v3933
        %v4003 = vunpack.c.l.b16 %v3934
        %v4004 = vunpack.c.l.b16 %v3935
        %v4005 = vunpack.c.l.b16 %v3936
        %v4006 = vunpack.c.l.b16 %v3937
        %v4007 = vunpack.c.l.b16 %v3938
        %v4008 = vunpack.c.l.b16 %v3939
        %v4009 = vunpack.c.l.b16 %v3940
        %v4010 = vunpack.c.l.b16 %v3941
        %v4011 = vunpack.c.l.b16 %v3942
        %v4012 = vunpack.c.l.b16 %v3943
        %v4013 = vunpack.c.l.b16 %v3944
        %v4014 = vunpack.c.l.b16 %v3945
        %v4015 = vunpack.c.l.b16 %v3946
        %v4016 = vunpack.c.l.b16 %v3947
        %v4017 = vunpack.c.l.b16 %v3948
        %v4018 = vunpack.c.l.b16 %v3949
        %v4019 = vunpack.c.l.b16 %v3950
        %v4020 = vunpack.c.l.b16 %v3951
        %v4021 = vunpack.c.l.b16 %v3952
        %v4022 = vunpack.c.l.b16 %v3953
        %v4023 = vunpack.c.l.b16 %v3954
        %v4024 = vunpack.c.l.b16 %v3955
        %v4025 = vunpack.c.l.b16 %v3956
        %v4026 = vpack.c.b16 %v3995, %v3994
        %v4027 = vpack.c.b16 %v3997, %v3996
        %v4028 = vpack.c.b16 %v3999, %v3998
        %v4029 = vpack.c.b16 %v4001, %v4000
        %v4030 = vpack.c.b16 %v4003, %v4002
        %v4031 = vpack.c.b16 %v4005, %v4004
        %v4032 = vpack.c.b16 %v4007, %v4006
        %v4033 = vpack.c.b16 %v4009, %v4008
        %v4034 = vpack.c.b16 %v4011, %v4010
        %v4035 = vpack.c.b16 %v4013, %v4012
        %v4036 = vpack.c.b16 %v4015, %v4014
        %v4037 = vpack.c.b16 %v4017, %v4016
        %v4038 = vpack.c.b16 %v4019, %v4018
        %v4039 = vpack.c.b16 %v4021, %v4020
        %v4040 = vpack.c.b16 %v4023, %v4022
        %v4041 = vpack.c.b16 %v4025, %v4024
        %v4047 = vunpack.c.l.b16 %v3957
        %v4048 = vunpack.c.l.b16 %v3958
        %v4049 = vunpack.c.l.b16 %v3959
        %v4050 = vunpack.c.l.b16 %v3960
        %v4051 = vunpack.c.l.b16 %v3961
        %v4052 = vpack.c.b16 %v4048, %v4047
        %v4053 = vpack.c.b16 %v4050, %v4049
        %v4054 = vpack.c.b16 %v4051, %v4051
        %vm4057 = vcmask 293888
        %v4059 = vsel %vm4057, %v4026, 0
        %v4062 = vsel %vm4057, %v4027, 0
        %v4065 = vsel %vm4057, %v4028, 0
        %v4068 = vsel %vm4057, %v4029, 0
        %v4071 = vsel %vm4057, %v4030, 0
        %v4074 = vsel %vm4057, %v4031, 0
        %v4077 = vsel %vm4057, %v4032, 0
        %v4080 = vsel %vm4057, %v4033, 0
        %v4083 = vsel %vm4057, %v4034, 0
        %v4086 = vsel %vm4057, %v4035, 0
        %v4089 = vsel %vm4057, %v4036, 0
        %v4092 = vsel %vm4057, %v4037, 0
        %v4095 = vsel %vm4057, %v4038, 0
        %v4098 = vsel %vm4057, %v4039, 0
        %v4101 = vsel %vm4057, %v4040, 0
        %v4104 = vsel %vm4057, %v4041, 0
        %vm4106 = vcmask 1041408
        %v4108 = vsel %vm4106, %v4054, 0
        %4110 = vmatpush.bf16.msra.mxu0 0
        %4111 = vmatpush.bf16.msra.mxu0 0
        %4112 = vmatpush.bf16.msra.mxu0 0
        %4113 = vmatpush.bf16.msra.mxu0 0
        %4114 = vmatpush.bf16.msra.mxu0 0
        %4115 = vmatpush.bf16.msra.mxu0 %v4108
        %4116 = vmatpush.bf16.msra.mxu0 %v4053
        %4117 = vmatpush.bf16.msra.mxu0 %v4052
        %4118 = vmatmul.bf16.gmra.mxu0 %v4059
        %v4119 = vpop.f32.mrf.mxu0
        %v4120 = vadd.f32 0.0, %v4119
        %v4121 = vpop.f32.mrf.mxu0
        %v4122 = vadd.f32 0.0, %v4121
        %4123 = vmatmul.bf16.gmra.mxu0 %v4062
        %v4124 = vpop.f32.mrf.mxu0
        %v4125 = vadd.f32 0.0, %v4124
        %v4126 = vpop.f32.mrf.mxu0
        %v4127 = vadd.f32 0.0, %v4126
        %4128 = vmatmul.bf16.gmra.mxu0 %v4065
        %v4129 = vpop.f32.mrf.mxu0
        %v4130 = vadd.f32 0.0, %v4129
        %v4131 = vpop.f32.mrf.mxu0
        %v4132 = vadd.f32 0.0, %v4131
        %4133 = vmatmul.bf16.gmra.mxu0 %v4068
        %v4134 = vpop.f32.mrf.mxu0
        %v4135 = vadd.f32 0.0, %v4134
        %v4136 = vpop.f32.mrf.mxu0
        %v4137 = vadd.f32 0.0, %v4136
        %4138 = vmatmul.bf16.gmra.mxu0 %v4071
        %v4139 = vpop.f32.mrf.mxu0
        %v4140 = vadd.f32 0.0, %v4139
        %v4141 = vpop.f32.mrf.mxu0
        %v4142 = vadd.f32 0.0, %v4141
        %4143 = vmatmul.bf16.gmra.mxu0 %v4074
        %v4144 = vpop.f32.mrf.mxu0
        %v4145 = vadd.f32 0.0, %v4144
        %v4146 = vpop.f32.mrf.mxu0
        %v4147 = vadd.f32 0.0, %v4146
        %4148 = vmatmul.bf16.gmra.mxu0 %v4077
        %v4149 = vpop.f32.mrf.mxu0
        %v4150 = vadd.f32 0.0, %v4149
        %v4151 = vpop.f32.mrf.mxu0
        %v4152 = vadd.f32 0.0, %v4151
        %4153 = vmatmul.bf16.gmra.mxu0 %v4080
        %v4154 = vpop.f32.mrf.mxu0
        %v4155 = vadd.f32 0.0, %v4154
        %v4156 = vpop.f32.mrf.mxu0
        %v4157 = vadd.f32 0.0, %v4156
        %4158 = vmatmul.bf16.gmra.mxu0 %v4083
        %v4159 = vpop.f32.mrf.mxu0
        %v4160 = vadd.f32 0.0, %v4159
        %v4161 = vpop.f32.mrf.mxu0
        %v4162 = vadd.f32 0.0, %v4161
        %4163 = vmatmul.bf16.gmra.mxu0 %v4086
        %v4164 = vpop.f32.mrf.mxu0
        %v4165 = vadd.f32 0.0, %v4164
        %v4166 = vpop.f32.mrf.mxu0
        %v4167 = vadd.f32 0.0, %v4166
        %4168 = vmatmul.bf16.gmra.mxu0 %v4089
        %v4169 = vpop.f32.mrf.mxu0
        %v4170 = vadd.f32 0.0, %v4169
        %v4171 = vpop.f32.mrf.mxu0
        %v4172 = vadd.f32 0.0, %v4171
        %4173 = vmatmul.bf16.gmra.mxu0 %v4092
        %v4174 = vpop.f32.mrf.mxu0
        %v4175 = vadd.f32 0.0, %v4174
        %v4176 = vpop.f32.mrf.mxu0
        %v4177 = vadd.f32 0.0, %v4176
        %4178 = vmatmul.bf16.gmra.mxu0 %v4095
        %v4179 = vpop.f32.mrf.mxu0
        %v4180 = vadd.f32 0.0, %v4179
        %v4181 = vpop.f32.mrf.mxu0
        %v4182 = vadd.f32 0.0, %v4181
        %4183 = vmatmul.bf16.gmra.mxu0 %v4098
        %v4184 = vpop.f32.mrf.mxu0
        %v4185 = vadd.f32 0.0, %v4184
        %v4186 = vpop.f32.mrf.mxu0
        %v4187 = vadd.f32 0.0, %v4186
        %4188 = vmatmul.bf16.gmra.mxu0 %v4101
        %v4189 = vpop.f32.mrf.mxu0
        %v4190 = vadd.f32 0.0, %v4189
        %v4191 = vpop.f32.mrf.mxu0
        %v4192 = vadd.f32 0.0, %v4191
        %4193 = vmatmul.bf16.gmra.mxu0 %v4104
        %v4194 = vpop.f32.mrf.mxu0
        %v4195 = vadd.f32 0.0, %v4194
        %v4196 = vpop.f32.mrf.mxu0
        %v4197 = vadd.f32 0.0, %v4196
        %4198 = vdwg.mxu0
        %v4199 = vpack.c.bf16 %v4120, %v4120
        %v4200 = vpack.c.bf16 %v4122, %v4122
        %v4201 = vpack.c.bf16 %v4125, %v4125
        %v4202 = vpack.c.bf16 %v4127, %v4127
        %v4203 = vpack.c.bf16 %v4130, %v4130
        %v4204 = vpack.c.bf16 %v4132, %v4132
        %v4205 = vpack.c.bf16 %v4135, %v4135
        %v4206 = vpack.c.bf16 %v4137, %v4137
        %v4207 = vpack.c.bf16 %v4140, %v4140
        %v4208 = vpack.c.bf16 %v4142, %v4142
        %v4209 = vpack.c.bf16 %v4145, %v4145
        %v4210 = vpack.c.bf16 %v4147, %v4147
        %v4211 = vpack.c.bf16 %v4150, %v4150
        %v4212 = vpack.c.bf16 %v4152, %v4152
        %v4213 = vpack.c.bf16 %v4155, %v4155
        %v4214 = vpack.c.bf16 %v4157, %v4157
        %v4215 = vpack.c.bf16 %v4160, %v4160
        %v4216 = vpack.c.bf16 %v4162, %v4162
        %v4217 = vpack.c.bf16 %v4165, %v4165
        %v4218 = vpack.c.bf16 %v4167, %v4167
        %v4219 = vpack.c.bf16 %v4170, %v4170
        %v4220 = vpack.c.bf16 %v4172, %v4172
        %v4221 = vpack.c.bf16 %v4175, %v4175
        %v4222 = vpack.c.bf16 %v4177, %v4177
        %v4223 = vpack.c.bf16 %v4180, %v4180
        %v4224 = vpack.c.bf16 %v4182, %v4182
        %v4225 = vpack.c.bf16 %v4185, %v4185
        %v4226 = vpack.c.bf16 %v4187, %v4187
        %v4227 = vpack.c.bf16 %v4190, %v4190
        %v4228 = vpack.c.bf16 %v4192, %v4192
        %v4229 = vpack.c.bf16 %v4195, %v4195
        %v4230 = vpack.c.bf16 %v4197, %v4197
        %vm4231 = vcmask 60416
        %4232 = vst.msk [vmem:[%s181] sm:$0xf] %vm4231, %v4199
        %4233 = vst.msk [vmem:[%s181 + $0x4] sm:$0xf] %vm4231, %v4200
        %4234 = vst.msk [vmem:[%s181 + $0x8] sm:$0xf] %vm4231, %v4201
        %4235 = vst.msk [vmem:[%s181 + $0xc] sm:$0xf] %vm4231, %v4202
        %4236 = vst.msk [vmem:[%s181 + $0x10] sm:$0xf] %vm4231, %v4203
        %4237 = vst.msk [vmem:[%s181 + $0x14] sm:$0xf] %vm4231, %v4204
        %4238 = vst.msk [vmem:[%s181 + $0x18] sm:$0xf] %vm4231, %v4205
        %4239 = vst.msk [vmem:[%s181 + $0x1c] sm:$0xf] %vm4231, %v4206
        %4240 = vst.msk [vmem:[%s181 + $0x20] sm:$0xf] %vm4231, %v4207
        %4241 = vst.msk [vmem:[%s181 + $0x24] sm:$0xf] %vm4231, %v4208
        %4242 = vst.msk [vmem:[%s181 + $0x28] sm:$0xf] %vm4231, %v4209
        %4243 = vst.msk [vmem:[%s181 + $0x2c] sm:$0xf] %vm4231, %v4210
        %4244 = vst.msk [vmem:[%s181 + $0x30] sm:$0xf] %vm4231, %v4211
        %4245 = vst.msk [vmem:[%s181 + $0x34] sm:$0xf] %vm4231, %v4212
        %4246 = vst.msk [vmem:[%s181 + $0x38] sm:$0xf] %vm4231, %v4213
        %4247 = vst.msk [vmem:[%s181 + $0x3c] sm:$0xf] %vm4231, %v4214
        %4248 = vst.msk [vmem:[%s181 + $0x40] sm:$0xf] %vm4231, %v4215
        %4249 = vst.msk [vmem:[%s181 + $0x44] sm:$0xf] %vm4231, %v4216
        %4250 = vst.msk [vmem:[%s181 + $0x48] sm:$0xf] %vm4231, %v4217
        %4251 = vst.msk [vmem:[%s181 + $0x4c] sm:$0xf] %vm4231, %v4218
        %4252 = vst.msk [vmem:[%s181 + $0x50] sm:$0xf] %vm4231, %v4219
        %4253 = vst.msk [vmem:[%s181 + $0x54] sm:$0xf] %vm4231, %v4220
        %4254 = vst.msk [vmem:[%s181 + $0x58] sm:$0xf] %vm4231, %v4221
        %4255 = vst.msk [vmem:[%s181 + $0x5c] sm:$0xf] %vm4231, %v4222
        %4256 = vst.msk [vmem:[%s181 + $0x60] sm:$0xf] %vm4231, %v4223
        %4257 = vst.msk [vmem:[%s181 + $0x64] sm:$0xf] %vm4231, %v4224
        %4258 = vst.msk [vmem:[%s181 + $0x68] sm:$0xf] %vm4231, %v4225
        %4259 = vst.msk [vmem:[%s181 + $0x6c] sm:$0xf] %vm4231, %v4226
        %4260 = vst.msk [vmem:[%s181 + $0x70] sm:$0xf] %vm4231, %v4227
        %4261 = vst.msk [vmem:[%s181 + $0x74] sm:$0xf] %vm4231, %v4228
        %4262 = vst.msk [vmem:[%s181 + $0x78] sm:$0xf] %vm4231, %v4229
        %4263 = vst.msk [vmem:[%s181 + $0x7c] sm:$0xf] %vm4231, %v4230
        %vm4264 = vcmask 64512
        %v4265 = vsel %vm4264, %v4120, 0.0
        %v4266 = vsel %vm4264, %v4122, 0.0
        %v4267 = vadd.f32 %v4265, %v4266
        %v4268 = vsel %vm4264, %v4125, 0.0
        %v4269 = vadd.f32 %v4267, %v4268
        %v4270 = vsel %vm4264, %v4127, 0.0
        %v4271 = vadd.f32 %v4269, %v4270
        %v4272 = vsel %vm4264, %v4130, 0.0
        %v4273 = vadd.f32 %v4271, %v4272
        %v4274 = vsel %vm4264, %v4132, 0.0
        %v4275 = vadd.f32 %v4273, %v4274
        %v4276 = vsel %vm4264, %v4135, 0.0
        %v4277 = vadd.f32 %v4275, %v4276
        %v4278 = vsel %vm4264, %v4137, 0.0
        %v4279 = vadd.f32 %v4277, %v4278
        %v4280 = vsel %vm4264, %v4140, 0.0
        %v4281 = vadd.f32 %v4279, %v4280
        %v4282 = vsel %vm4264, %v4142, 0.0
        %v4283 = vadd.f32 %v4281, %v4282
        %v4284 = vsel %vm4264, %v4145, 0.0
        %v4285 = vadd.f32 %v4283, %v4284
        %v4286 = vsel %vm4264, %v4147, 0.0
        %v4287 = vadd.f32 %v4285, %v4286
        %v4288 = vsel %vm4264, %v4150, 0.0
        %v4289 = vadd.f32 %v4287, %v4288
        %v4290 = vsel %vm4264, %v4152, 0.0
        %v4291 = vadd.f32 %v4289, %v4290
        %v4292 = vsel %vm4264, %v4155, 0.0
        %v4293 = vadd.f32 %v4291, %v4292
        %v4294 = vsel %vm4264, %v4157, 0.0
        %v4295 = vadd.f32 %v4293, %v4294
        %v4296 = vsel %vm4264, %v4160, 0.0
        %v4297 = vadd.f32 %v4295, %v4296
        %v4298 = vsel %vm4264, %v4162, 0.0
        %v4299 = vadd.f32 %v4297, %v4298
        %v4300 = vsel %vm4264, %v4165, 0.0
        %v4301 = vadd.f32 %v4299, %v4300
        %v4302 = vsel %vm4264, %v4167, 0.0
        %v4303 = vadd.f32 %v4301, %v4302
        %v4304 = vsel %vm4264, %v4170, 0.0
        %v4305 = vadd.f32 %v4303, %v4304
        %v4306 = vsel %vm4264, %v4172, 0.0
        %v4307 = vadd.f32 %v4305, %v4306
        %v4308 = vsel %vm4264, %v4175, 0.0
        %v4309 = vadd.f32 %v4307, %v4308
        %v4310 = vsel %vm4264, %v4177, 0.0
        %v4311 = vadd.f32 %v4309, %v4310
        %v4312 = vsel %vm4264, %v4180, 0.0
        %v4313 = vadd.f32 %v4311, %v4312
        %v4314 = vsel %vm4264, %v4182, 0.0
        %v4315 = vadd.f32 %v4313, %v4314
        %v4316 = vsel %vm4264, %v4185, 0.0
        %v4317 = vadd.f32 %v4315, %v4316
        %v4318 = vsel %vm4264, %v4187, 0.0
        %v4319 = vadd.f32 %v4317, %v4318
        %v4320 = vsel %vm4264, %v4190, 0.0
        %v4321 = vadd.f32 %v4319, %v4320
        %v4322 = vsel %vm4264, %v4192, 0.0
        %v4323 = vadd.f32 %v4321, %v4322
        %v4324 = vsel %vm4264, %v4195, 0.0
        %v4325 = vadd.f32 %v4323, %v4324
        %v4326 = vsel %vm4264, %v4197, 0.0
        %v4327 = vadd.f32 %v4325, %v4326
        %v4328 = vrot.slane %v4327, 4
        %v4329 = vadd.f32 %v4327, %v4328
        %v4330 = vrot.slane %v4329, 2
        %v4331 = vadd.f32 %v4329, %v4330
        %v4332 = vrot.slane %v4331, 1
        %v4333 = vadd.f32 %v4331, %v4332
        %vm4334 = vcmask 57344
        %4335 = vst.msk [vmem:[%s171] sm:$0x1] %vm4334, %v4333
        %v4336 = vmul.f32 %v4120, %v4120
        %v4337 = vmul.f32 %v4122, %v4122
        %v4338 = vmul.f32 %v4125, %v4125
        %v4339 = vmul.f32 %v4127, %v4127
        %v4340 = vmul.f32 %v4130, %v4130
        %v4341 = vmul.f32 %v4132, %v4132
        %v4342 = vmul.f32 %v4135, %v4135
        %v4343 = vmul.f32 %v4137, %v4137
        %v4344 = vmul.f32 %v4140, %v4140
        %v4345 = vmul.f32 %v4142, %v4142
        %v4346 = vmul.f32 %v4145, %v4145
        %v4347 = vmul.f32 %v4147, %v4147
        %v4348 = vmul.f32 %v4150, %v4150
        %v4349 = vmul.f32 %v4152, %v4152
        %v4350 = vmul.f32 %v4155, %v4155
        %v4351 = vmul.f32 %v4157, %v4157
        %v4352 = vmul.f32 %v4160, %v4160
        %v4353 = vmul.f32 %v4162, %v4162
        %v4354 = vmul.f32 %v4165, %v4165
        %v4355 = vmul.f32 %v4167, %v4167
        %v4356 = vmul.f32 %v4170, %v4170
        %v4357 = vmul.f32 %v4172, %v4172
        %v4358 = vmul.f32 %v4175, %v4175
        %v4359 = vmul.f32 %v4177, %v4177
        %v4360 = vmul.f32 %v4180, %v4180
        %v4361 = vmul.f32 %v4182, %v4182
        %v4362 = vmul.f32 %v4185, %v4185
        %v4363 = vmul.f32 %v4187, %v4187
        %v4364 = vmul.f32 %v4190, %v4190
        %v4365 = vmul.f32 %v4192, %v4192
        %v4366 = vmul.f32 %v4195, %v4195
        %v4367 = vmul.f32 %v4197, %v4197
        %v4368 = vsel %vm4264, %v4336, 0.0
        %v4369 = vsel %vm4264, %v4337, 0.0
        %v4370 = vadd.f32 %v4368, %v4369
        %v4371 = vsel %vm4264, %v4338, 0.0
        %v4372 = vadd.f32 %v4370, %v4371
        %v4373 = vsel %vm4264, %v4339, 0.0
        %v4374 = vadd.f32 %v4372, %v4373
        %v4375 = vsel %vm4264, %v4340, 0.0
        %v4376 = vadd.f32 %v4374, %v4375
        %v4377 = vsel %vm4264, %v4341, 0.0
        %v4378 = vadd.f32 %v4376, %v4377
        %v4379 = vsel %vm4264, %v4342, 0.0
        %v4380 = vadd.f32 %v4378, %v4379
        %v4381 = vsel %vm4264, %v4343, 0.0
        %v4382 = vadd.f32 %v4380, %v4381
        %v4383 = vsel %vm4264, %v4344, 0.0
        %v4384 = vadd.f32 %v4382, %v4383
        %v4385 = vsel %vm4264, %v4345, 0.0
        %v4386 = vadd.f32 %v4384, %v4385
        %v4387 = vsel %vm4264, %v4346, 0.0
        %v4388 = vadd.f32 %v4386, %v4387
        %v4389 = vsel %vm4264, %v4347, 0.0
        %v4390 = vadd.f32 %v4388, %v4389
        %v4391 = vsel %vm4264, %v4348, 0.0
        %v4392 = vadd.f32 %v4390, %v4391
        %v4393 = vsel %vm4264, %v4349, 0.0
        %v4394 = vadd.f32 %v4392, %v4393
        %v4395 = vsel %vm4264, %v4350, 0.0
        %v4396 = vadd.f32 %v4394, %v4395
        %v4397 = vsel %vm4264, %v4351, 0.0
        %v4398 = vadd.f32 %v4396, %v4397
        %v4399 = vsel %vm4264, %v4352, 0.0
        %v4400 = vadd.f32 %v4398, %v4399
        %v4401 = vsel %vm4264, %v4353, 0.0
        %v4402 = vadd.f32 %v4400, %v4401
        %v4403 = vsel %vm4264, %v4354, 0.0
        %v4404 = vadd.f32 %v4402, %v4403
        %v4405 = vsel %vm4264, %v4355, 0.0
        %v4406 = vadd.f32 %v4404, %v4405
        %v4407 = vsel %vm4264, %v4356, 0.0
        %v4408 = vadd.f32 %v4406, %v4407
        %v4409 = vsel %vm4264, %v4357, 0.0
        %v4410 = vadd.f32 %v4408, %v4409
        %v4411 = vsel %vm4264, %v4358, 0.0
        %v4412 = vadd.f32 %v4410, %v4411
        %v4413 = vsel %vm4264, %v4359, 0.0
        %v4414 = vadd.f32 %v4412, %v4413
        %v4415 = vsel %vm4264, %v4360, 0.0
        %v4416 = vadd.f32 %v4414, %v4415
        %v4417 = vsel %vm4264, %v4361, 0.0
        %v4418 = vadd.f32 %v4416, %v4417
        %v4419 = vsel %vm4264, %v4362, 0.0
        %v4420 = vadd.f32 %v4418, %v4419
        %v4421 = vsel %vm4264, %v4363, 0.0
        %v4422 = vadd.f32 %v4420, %v4421
        %v4423 = vsel %vm4264, %v4364, 0.0
        %v4424 = vadd.f32 %v4422, %v4423
        %v4425 = vsel %vm4264, %v4365, 0.0
        %v4426 = vadd.f32 %v4424, %v4425
        %v4427 = vsel %vm4264, %v4366, 0.0
        %v4428 = vadd.f32 %v4426, %v4427
        %v4429 = vsel %vm4264, %v4367, 0.0
        %v4430 = vadd.f32 %v4428, %v4429
        %v4431 = vrot.slane %v4430, 4
        %v4432 = vadd.f32 %v4430, %v4431
        %v4433 = vrot.slane %v4432, 2
        %v4434 = vadd.f32 %v4432, %v4433
        %v4435 = vrot.slane %v4434, 1
        %v4436 = vadd.f32 %v4434, %v4435
        %4437 = vst.msk [vmem:[%s171 + $0x1] sm:$0x1] %vm4334, %v4436
        %p4438 = scmp.lt.s32.totalorder %s18, 1
        %s4439 = scalar_select %p4438, %s18, 1
        %s4440 = smul.addr %s4439, 32
        %s4441 = smul.addr %s4440, 4
        %s4442 = scalar_lea.vmem %s2, %s4441
        %s4443 = sand.u32 %s99, 1
        %s4444 = scalar_lea.sflag [#allocation5], %s4443
        %s4445 = sand.u32 %s99, 1
        %s4446 = smul.addr %s4445, 2
        %s4447 = scalar_lea.vmem [#allocation4], %s4446
        // Predicated region
        $region29: #{tpu_custom_call.1} parent=27 // pred_check
          %p4448 = pneg %p83
        $region30: #{tpu_custom_call.1} parent=27 // pred_check_branch
          %4450 = sbr.rel (%p4448) target = $region32
        $region31: #{tpu_custom_call.1} parent=27 // pred_region
          _
        $region32: #{tpu_custom_call.1} parent=27 // pred_fallthru
          _
        // Predicated region
        $region33: #{tpu_custom_call.1} parent=27 // pred_check
          %p4451 = pneg %p109
        $region34: #{tpu_custom_call.1} parent=27 // pred_check_branch
          %4453 = sbr.rel (%p4451) target = $region36
        $region35: #{tpu_custom_call.1} parent=27 // pred_region
          %4455 = vsyncadd %s4444, 0
          %s4456 = smul.addr %s18, 2
          %s4457 = scalar_lea.hbm %s3, %s4456
          %s4459 = sshll.u32 %s4447, 4
          %s4460 = int_to_ptr.vmem [resolvable:$true] %s4459
          %s4461 = sshll.u32 %s4457, 4
          %s4462 = int_to_ptr.hbm [resolvable:$true] %s4461
          %4464 = dma.vmem_to_hbm [thread:$0]  %s4460, 32, %s4462, %s4444
        $region36: #{tpu_custom_call.1} parent=27 // pred_fallthru
          _
      $region28: #{tpu_custom_call.1} parent=5 // pred_fallthru
        _
      %p4465 = scmp.le.s32.totalorder 2, %s13
      // Predicated region
      $region37: #{tpu_custom_call.1} parent=5 // pred_check
        %p4466 = pneg %p4465
      $region38: #{tpu_custom_call.1} parent=5 // pred_check_branch
        %4468 = sbr.rel (%p4466) target = $region40
      $region39: #{tpu_custom_call.1} parent=5 // pred_region
        %s4469 = ssub.s32 %s13, 2
        // Predicated region
        $region41: #{tpu_custom_call.1} parent=39 // pred_check
          %p4470 = pneg %p89
        $region42: #{tpu_custom_call.1} parent=39 // pred_check_branch
          %4472 = sbr.rel (%p4470) target = $region44
        $region43: #{tpu_custom_call.1} parent=39 // pred_region
          %p4473 = scmp.lt.s32.totalorder %s19, 1
          %s4474 = scalar_select %p4473, %s19, 1
          %s4475 = smul.addr %s4474, 32
          %s4476 = smul.addr %s4475, 4
          %s4477 = scalar_lea.vmem %s2, %s4476
        $region44: #{tpu_custom_call.1} parent=39 // pred_fallthru
          _
        // Predicated region
        $region45: #{tpu_custom_call.1} parent=39 // pred_check
          %p4478 = pneg %p115
        $region46: #{tpu_custom_call.1} parent=39 // pred_check_branch
          %4480 = sbr.rel (%p4478) target = $region48
        $region47: #{tpu_custom_call.1} parent=39 // pred_region
          %s4481 = sand.u32 %s100, 1
          %s4482 = scalar_lea.sflag [#allocation5], %s4481
          %s4483 = sand.u32 %s100, 1
          %s4484 = smul.addr %s4483, 2
          %s4485 = scalar_lea.vmem [#allocation4], %s4484
          %4487 = dma.done %s4482, 32
        $region48: #{tpu_custom_call.1} parent=39 // pred_fallthru
          _
      $region40: #{tpu_custom_call.1} parent=5 // pred_fallthru
        _
    $region6: #{tpu_custom_call.1} parent=1 // loop_footer
      %s17 = sadd.s32 1, %s13
    $region7: #{tpu_custom_call.1} parent=1 // loop_footer_branch
      %12 = sbr.rel target = $region3
    $region8: #{tpu_custom_call.1} parent=1 // loop_exit
      _
    %4488 = vsyncpa [#allocation5], 1
    %s4489 = scalar_lea.sflag [#allocation5], 1
    %4490 = vsyncpa %s4489, 1

</llo_original>
